<compile_context>
chip_gen: v7x
topology: tpu7x:2x2x1
jax: 0.10.0
libtpu: 0.0.40
codegen_flags: <defaults>
</compile_context>

<pallas_src>
import functools

import jax
import jax.numpy as jnp
from jax.experimental import pallas as pl
from jax.experimental.pallas import tpu as pltpu

LANES = 128
SUBLANES = 8
SLAB = SUBLANES * LANES  # 1024


def _mse_partial_kernel(x_ref, y_ref, o_ref, *, tile_rows):
    # Cast on the VPU; inputs stay in native dtype in HBM so sub-32-bit inputs
    # DMA half the bytes.
    diff = x_ref[...].astype(jnp.float32) - y_ref[...].astype(jnp.float32)
    sq = diff * diff
    # Partial reduction that stays on the VPU: collapse groups of 8 sublane
    # rows onto a single (8, 128) vreg-shaped output block (no cross-lane XLU
    # work, no serialized scalar accumulator).
    o_ref[0] = jnp.sum(sq.reshape(tile_rows // SUBLANES, SUBLANES, LANES), axis=0)


def _sq_diff_sum(x, y):
    d = x.astype(jnp.float32) - y.astype(jnp.float32)
    return jnp.sum(d * d)


def mse_loss(inputs, targets, coef=1.0, tile_rows=8192):
    """coef * mean((inputs - targets) ** 2), matching torch.nn.MSELoss('mean')."""
    assert inputs.shape == targets.shape, "MSELoss requires matching shapes"
    n = inputs.size
    x = jnp.ravel(inputs)
    y = jnp.ravel(targets)

    block_elems = tile_rows * LANES  # elements consumed per grid step

    if n < block_elems:
        # Small-input fast path: pallas launch/step overhead dominates below
        # one tile; a fused XLA reduction is already at the HBM roofline here.
        total = _sq_diff_sum(x, y)
    else:
        if n % SLAB == 0:
            # Free reshape: no copies, no padding.
            rows = n // LANES
            x2 = x.reshape(rows, LANES)
            y2 = y.reshape(rows, LANES)
            tail_total = jnp.float32(0.0)
        else:
            # Ragged size: kernel consumes the 1024-aligned prefix; the
            # (<1024-element) tail is reduced with plain JAX instead of
            # padding full copies of both arrays.
            n_main = (n // SLAB) * SLAB
            rows = n_main // LANES
            x2 = x[:n_main].reshape(rows, LANES)
            y2 = y[:n_main].reshape(rows, LANES)
            tail_total = _sq_diff_sum(x[n_main:], y[n_main:])

        grid = rows // tile_rows          # >= 1 because n >= block_elems
        rows_main = grid * tile_rows      # rows covered by full tiles

        kernel = functools.partial(_mse_partial_kernel, tile_rows=tile_rows)
        itemsize = jnp.dtype(inputs.dtype).itemsize
        cost = pl.CostEstimate(
            flops=3 * rows_main * LANES,
            transcendentals=0,
            bytes_accessed=2 * rows_main * LANES * itemsize + grid * SLAB * 4,
        )

        partials = pl.pallas_call(
            kernel,
            out_shape=jax.ShapeDtypeStruct((grid, SUBLANES, LANES), jnp.float32),
            grid_spec=pltpu.PrefetchScalarGridSpec(
                num_scalar_prefetch=0,
                grid=(grid,),
                in_specs=[
                    pl.BlockSpec((tile_rows, LANES), lambda i: (i, 0)),
                    pl.BlockSpec((tile_rows, LANES), lambda i: (i, 0)),
                ],
                out_specs=pl.BlockSpec((1, SUBLANES, LANES), lambda i: (i, 0, 0)),
            ),
            compiler_params=pltpu.CompilerParams(
                # TODO(synk): on v7x, evaluate pltpu.CORE_PARALLEL here to
                # shard this 1-D streaming grid across both TensorCores.
                dimension_semantics=("parallel",),
                vmem_limit_bytes=48 << 20,
            ),
            cost_estimate=cost,
        )(x2, y2)

        total = jnp.sum(partials) + tail_total
        if rows_main < rows:
            # Row remainder (< one tile): small slice, reduced in plain JAX so
            # the kernel never needs a mask.
            total = total + _sq_diff_sum(x2[rows_main:], y2[rows_main:])

    loss = total * jnp.float32(float(coef) / float(n))
    # Match torch's output dtype (downcasts the f32 accumulation for
    # low-precision inputs, same as torch.nn.MSELoss).
    return loss.astype(inputs.dtype)


if __name__ == "__main__":
    key = jax.random.PRNGKey(0)

    def run_case(idx, shape, coef):
        k1, k2 = jax.random.split(jax.random.fold_in(key, idx))
        a = jax.random.normal(k1, shape, dtype=jnp.float32)
        b = jax.random.normal(k2, shape, dtype=jnp.float32)
        out = jax.block_until_ready(mse_loss(a, b, coef=coef))
        ref = coef * jnp.mean((a - b) ** 2)
        assert jnp.allclose(out, ref, rtol=1e-5, atol=1e-6), (shape, out, ref)
        return out

    # Small NCHW-like shape consistent with a typical MSELoss use (fast path).
    run_case(0, (2, 4, 16, 16), coef=1.0)
    # Large enough to exercise the Pallas kernel: 2 full tiles + a row tail.
    run_case(1, (3, 709, 1024), coef=0.5)
    # Ragged element count: 1024-unaligned tail peeled outside the kernel.
    run_case(2, (8192 * 128 + 700,), coef=2.0)

    print("KERNEL_OK")
</pallas_src>

<mosaic_0001>
module attributes {stable_mosaic.version = 11 : i64} {
  func.func @_mse_partial_kernel(%arg0: i32, %arg1: memref<8192x128xf32, #tpu.memory_space<vmem>>, %arg2: memref<8192x128xf32, #tpu.memory_space<vmem>>, %arg3: memref<1x8x128xf32, #tpu.memory_space<vmem>>) attributes {dimension_semantics = [#tpu.dimension_semantics<parallel>], iteration_bounds = array<i64: 2>, scalar_prefetch = 0 : i64, scratch_operands = 0 : i64, tpu.core_type = #tpu.core_type<tc>, window_params = [{transform_indices = @transform_0, window_bounds = array<i64: 8192, 128>}, {transform_indices = @transform_1, window_bounds = array<i64: 8192, 128>}, {transform_indices = @transform_2, window_bounds = array<i64: 1, 8, 128>}]} {
    %c0 = arith.constant 0 : index
    %c0_0 = arith.constant 0 : index
    %0 = vector.load %arg1[%c0, %c0_0] : memref<8192x128xf32, #tpu.memory_space<vmem>>, vector<8192x128xf32>
    %c0_1 = arith.constant 0 : index
    %c0_2 = arith.constant 0 : index
    %1 = vector.load %arg2[%c0_1, %c0_2] : memref<8192x128xf32, #tpu.memory_space<vmem>>, vector<8192x128xf32>
    %2 = arith.subf %0, %1 : vector<8192x128xf32>
    %3 = arith.mulf %2, %2 : vector<8192x128xf32>
    %4 = vector.shape_cast %3 : vector<8192x128xf32> to vector<1024x8x128xf32>
    %cst = arith.constant dense<0.000000e+00> : vector<8x128xf32>
    %5 = vector.multi_reduction <add>, %4, %cst [0] : vector<1024x8x128xf32> to vector<8x128xf32>
    %c0_3 = arith.constant 0 : index
    %c0_4 = arith.constant 0 : index
    %c0_5 = arith.constant 0 : index
    %6 = vector.load %arg3[%c0_3, %c0_4, %c0_5] : memref<1x8x128xf32, #tpu.memory_space<vmem>>, vector<1x8x128xf32>
    %7 = vector.shape_cast %6 : vector<1x8x128xf32> to vector<8x128xf32>
    %8 = vector.shape_cast %5 : vector<8x128xf32> to vector<1x8x128xf32>
    tpu.vector_store %arg3[%c0_3, %c0_4, %c0_5], %8 {strides = array<i32>} : memref<1x8x128xf32, #tpu.memory_space<vmem>>, vector<1x8x128xf32>,
    return
  }
  func.func @transform_0(%arg0: i32) -> (i32, i32) {
    %c0_i32 = arith.constant 0 : i32
    %c0_i32_0 = arith.constant 0 : i32
    return %arg0, %c0_i32 : i32, i32
  }
  func.func @transform_1(%arg0: i32) -> (i32, i32) {
    %c0_i32 = arith.constant 0 : i32
    %c0_i32_0 = arith.constant 0 : i32
    return %arg0, %c0_i32 : i32, i32
  }
  func.func @transform_2(%arg0: i32) -> (i32, i32, i32) {
    %c0_i32 = arith.constant 0 : i32
    %c0_i32_0 = arith.constant 0 : i32
    %c0_i32_1 = arith.constant 0 : i32
    return %arg0, %c0_i32, %c0_i32_0 : i32, i32, i32
  }
}

</mosaic_0001>

<llo_original>
// kernel: tpu_custom_call.1
$region0: #{tpu_custom_call.1}
  #allocation0 [shape = 'u32[]', space=smem, size = 0x4, offset = 0x4, fixed_abs, tag = 'smem constant byte address 0x4 - core index']
  #allocation1 [shape = 'u32[144,128]{1,0:T(1,128)}', space=vmem, size = 0x12000, scoped, tag = 'internal scratch']
  %s0 = inlined_call_operand.hbm [shape: f32[17016,128], index: 0, kind: input, shape index: {}]
  %s1 = inlined_call_operand.hbm [shape: f32[17016,128], index: 1, kind: input, shape index: {}]
  %s2 = inlined_call_operand.hbm [shape: f32[2,8,128], index: 2, kind: output, shape index: {}]
  %s3 = sld [smem:[#allocation0]]
  $region49: #{tpu_custom_call.1} parent=0
    _
  %s5 = ssub.s32 1, %s3
  %s6 = scalar_select 0, %s5, %s3
  $region1: #{tpu_custom_call.1} parent=0
    #allocation2 [shape = 'u8[8388608]{0}', space=vmem, size = 0x800000, scoped, tag = 'input window, operand 0']
    #allocation3 [shape = 's32[2]{0}', space=sflag, size = 0x8, scoped, tag = 'scoped memory for tpu_custom_call.1']
    #allocation4 [shape = 's32[2]{0}', space=sflag, size = 0x8, scoped, tag = 'scoped memory for tpu_custom_call.1']
    #allocation5 [shape = 'u8[8388608]{0}', space=vmem, size = 0x800000, scoped, tag = 'input window, operand 1']
    #allocation6 [shape = 's32[2]{0}', space=sflag, size = 0x8, scoped, tag = 'scoped memory for tpu_custom_call.1']
    #allocation7 [shape = 'u8[8192]{0}', space=vmem, size = 0x2000, scoped, tag = 'output window, operand 0']
    %7 = vsyncpa [#allocation3], 0
    %s8 = scalar_lea.sflag [#allocation3], 1
    %9 = vsyncpa %s8, 0
    %10 = vsyncpa [#allocation6], 0
    %s11 = scalar_lea.sflag [#allocation6], 1
    %12 = vsyncpa %s11, 0
    %13 = vsyncpa [#allocation4], 0
    %s14 = scalar_lea.sflag [#allocation4], 1
    %15 = vsyncpa %s14, 0
    loop: start=0, step=1, limit=4
    $region2: #{tpu_custom_call.1} parent=1 // loop_pre_header
      _
    $region3: #{tpu_custom_call.1} parent=1 // loop_header
      %s17 = sphi 0, %s21
      %p18 = scmp.ge.s32.totalorder %s17, 4
      %s27 = sphi 0, %s29
      %s30 = sphi 0, %s27
      %s31 = sphi 0, %s30
      %s47 = sphi 0, %s31
      %s53 = sphi 0, %s55
      %s56 = sphi 0, %s53
      %s57 = sphi 0, %s56
      %s73 = sphi 0, %s57
      %s79 = sphi 0, %s81
      %s82 = sphi 0, %s79
      %s83 = sphi 0, %s82
      %s99 = sphi 0, %s83
    $region4: #{tpu_custom_call.1} parent=1 // loop_header_branch
      %20 = sbr.rel (%p18) target = $region8
    $region5: #{tpu_custom_call.1} parent=1 // loop_body
      %s22 = ssub.s32 %s17, 1
      %s23 = ssub.s32 %s17, 2
      %s24 = sadd.s32 %s17, 1
      %s25 = ssub.s32 %s17, %s24
      %p26 = scmp.eq.s32.totalorder %s25, 0
      %s28 = sadd.s32 %s27, 1
      %s29 = scalar_select %p26, %s27, %s28
      %p32 = pneg %p26
      %p33 = scmp.eq.s32.totalorder %s17, 1
      %p34 = por %p32, %p33
      %p35 = scmp.ne.s32.totalorder %s27, %s30
      %p36 = scmp.eq.s32.totalorder %s17, 0
      %p37 = por %p35, %p36
      %p38 = scmp.ne.s32.totalorder %s27, %s30
      %p39 = scmp.eq.s32.totalorder %s22, 1
      %p40 = por %p38, %p39
      %p41 = scmp.ne.s32.totalorder %s30, %s31
      %p42 = scmp.eq.s32.totalorder %s22, 0
      %p43 = por %p41, %p42
      %p44 = scmp.ne.s32.totalorder %s30, %s31
      %p45 = scmp.eq.s32.totalorder %s23, 1
      %p46 = por %p44, %p45
      %p48 = scmp.ne.s32.totalorder %s31, %s47
      %p49 = scmp.eq.s32.totalorder %s23, 0
      %p50 = por %p48, %p49
      %s51 = ssub.s32 %s17, %s24
      %p52 = scmp.eq.s32.totalorder %s51, 0
      %s54 = sadd.s32 %s53, 1
      %s55 = scalar_select %p52, %s53, %s54
      %p58 = pneg %p52
      %p59 = scmp.eq.s32.totalorder %s17, 1
      %p60 = por %p58, %p59
      %p61 = scmp.ne.s32.totalorder %s53, %s56
      %p62 = scmp.eq.s32.totalorder %s17, 0
      %p63 = por %p61, %p62
      %p64 = scmp.ne.s32.totalorder %s53, %s56
      %p65 = scmp.eq.s32.totalorder %s22, 1
      %p66 = por %p64, %p65
      %p67 = scmp.ne.s32.totalorder %s56, %s57
      %p68 = scmp.eq.s32.totalorder %s22, 0
      %p69 = por %p67, %p68
      %p70 = scmp.ne.s32.totalorder %s56, %s57
      %p71 = scmp.eq.s32.totalorder %s23, 1
      %p72 = por %p70, %p71
      %p74 = scmp.ne.s32.totalorder %s57, %s73
      %p75 = scmp.eq.s32.totalorder %s23, 0
      %p76 = por %p74, %p75
      %s77 = ssub.s32 %s17, %s24
      %p78 = scmp.eq.s32.totalorder %s77, 0
      %s80 = sadd.s32 %s79, 1
      %s81 = scalar_select %p78, %s79, %s80
      %p84 = pneg %p78
      %p85 = scmp.eq.s32.totalorder %s17, 1
      %p86 = por %p84, %p85
      %p87 = scmp.ne.s32.totalorder %s79, %s82
      %p88 = scmp.eq.s32.totalorder %s17, 0
      %p89 = por %p87, %p88
      %p90 = scmp.ne.s32.totalorder %s79, %s82
      %p91 = scmp.eq.s32.totalorder %s22, 1
      %p92 = por %p90, %p91
      %p93 = scmp.ne.s32.totalorder %s82, %s83
      %p94 = scmp.eq.s32.totalorder %s22, 0
      %p95 = por %p93, %p94
      %p96 = scmp.ne.s32.totalorder %s82, %s83
      %p97 = scmp.eq.s32.totalorder %s23, 1
      %p98 = por %p96, %p97
      %p100 = scmp.ne.s32.totalorder %s83, %s99
      %p101 = scmp.eq.s32.totalorder %s23, 0
      %p102 = por %p100, %p101
      %p103 = scmp.le.s32.totalorder 1, %s17
      %p104 = scmp.lt.s32.totalorder %s17, 3
      %p105 = pnand %p103, %p104
      %p106 = pneg %p105
      // Predicated region
      $region9: #{tpu_custom_call.1} parent=5 // pred_check
        _
      $region10: #{tpu_custom_call.1} parent=5 // pred_check_branch
        %108 = sbr.rel (%p105) target = $region12
      $region11: #{tpu_custom_call.1} parent=5 // pred_region
        %s109 = ssub.s32 %s17, 1
      $region12: #{tpu_custom_call.1} parent=5 // pred_fallthru
        _
      %p110 = scmp.lt.s32.totalorder %s17, 2
      // Predicated region
      $region13: #{tpu_custom_call.1} parent=5 // pred_check
        %p111 = pneg %p110
      $region14: #{tpu_custom_call.1} parent=5 // pred_check_branch
        %113 = sbr.rel (%p111) target = $region16
      $region15: #{tpu_custom_call.1} parent=5 // pred_region
        // Predicated region
        $region17: #{tpu_custom_call.1} parent=15 // pred_check
          %p114 = pneg %p37
        $region18: #{tpu_custom_call.1} parent=15 // pred_check_branch
          %116 = sbr.rel (%p114) target = $region20
        $region19: #{tpu_custom_call.1} parent=15 // pred_region
          %s117 = sand.u32 %s27, 1
          %s118 = scalar_lea.sflag [#allocation3], %s117
          %s119 = sand.u32 %s27, 1
          %s120 = smul.addr %s119, 8192
          %s121 = scalar_lea.vmem [#allocation2], %s120
          %s122 = smul.u32 1024, %s17
          %s123 = ssub.s32 2127, %s122
          %p124 = scmp.lt.s32.totalorder %s123, 1024
          %s125 = scalar_select %p124, %s123, 1024
          %s126 = smul.u32 128, %s125
          %s128 = ssub.s32 131072, %s126
          %129 = vsyncadd %s118, %s128
          %p130 = scmp.ne.s32.totalorder 0, %s126
          %s131 = smul.addr %s122, 128
          %s132 = scalar_lea.hbm %s0, %s131
          %s133 = smul.u32 8, %s125
          %s134 = sshll.u32 %s121, 4
          %s135 = int_to_ptr.vmem [resolvable:$true] %s134
          %s136 = sshll.u32 %s133, 4
          %140 = dma.hbm_to_vmem [thread:$0]  (%p130), %s132, %s136, %s135, %s118, 128, 128, 8
        $region20: #{tpu_custom_call.1} parent=15 // pred_fallthru
          _
        // Predicated region
        $region21: #{tpu_custom_call.1} parent=15 // pred_check
          %p141 = pneg %p63
        $region22: #{tpu_custom_call.1} parent=15 // pred_check_branch
          %143 = sbr.rel (%p141) target = $region24
        $region23: #{tpu_custom_call.1} parent=15 // pred_region
          %s144 = sand.u32 %s53, 1
          %s145 = scalar_lea.sflag [#allocation6], %s144
          %s146 = sand.u32 %s53, 1
          %s147 = smul.addr %s146, 8192
          %s148 = scalar_lea.vmem [#allocation5], %s147
          %s149 = smul.u32 1024, %s17
          %s150 = ssub.s32 2127, %s149
          %p151 = scmp.lt.s32.totalorder %s150, 1024
          %s152 = scalar_select %p151, %s150, 1024
          %s153 = smul.u32 128, %s152
          %s155 = ssub.s32 131072, %s153
          %156 = vsyncadd %s145, %s155
          %p157 = scmp.ne.s32.totalorder 0, %s153
          %s158 = smul.addr %s149, 128
          %s159 = scalar_lea.hbm %s1, %s158
          %s160 = smul.u32 8, %s152
          %s161 = sshll.u32 %s148, 4
          %s162 = int_to_ptr.vmem [resolvable:$true] %s161
          %s163 = sshll.u32 %s160, 4
          %167 = dma.hbm_to_vmem [thread:$0]  (%p157), %s159, %s163, %s162, %s145, 128, 128, 8
        $region24: #{tpu_custom_call.1} parent=15 // pred_fallthru
          _
      $region16: #{tpu_custom_call.1} parent=5 // pred_fallthru
        _
      %p168 = scmp.le.s32.totalorder 1, %s17
      %p169 = scmp.lt.s32.totalorder %s17, 3
      %p170 = pnand %p168, %p169
      %p171 = pneg %p170
      // Predicated region
      $region25: #{tpu_custom_call.1} parent=5 // pred_check
        _
      $region26: #{tpu_custom_call.1} parent=5 // pred_check_branch
        %173 = sbr.rel (%p170) target = $region28
      $region27: #{tpu_custom_call.1} parent=5 // pred_region
        %s174 = ssub.s32 %s17, 1
        %s175 = sand.u32 %s30, 1
        %s176 = scalar_lea.sflag [#allocation3], %s175
        %s177 = sand.u32 %s30, 1
        %s178 = smul.addr %s177, 8192
        %s179 = scalar_lea.vmem [#allocation2], %s178
        // Predicated region
        $region29: #{tpu_custom_call.1} parent=27 // pred_check
          %p180 = pneg %p43
        $region30: #{tpu_custom_call.1} parent=27 // pred_check_branch
          %182 = sbr.rel (%p180) target = $region32
        $region31: #{tpu_custom_call.1} parent=27 // pred_region
          %183 = dma.done %s176, 131072
        $region32: #{tpu_custom_call.1} parent=27 // pred_fallthru
          _
        %s184 = sand.u32 %s56, 1
        %s185 = scalar_lea.sflag [#allocation6], %s184
        %s186 = sand.u32 %s56, 1
        %s187 = smul.addr %s186, 8192
        %s188 = scalar_lea.vmem [#allocation5], %s187
        // Predicated region
        $region33: #{tpu_custom_call.1} parent=27 // pred_check
          %p189 = pneg %p69
        $region34: #{tpu_custom_call.1} parent=27 // pred_check_branch
          %191 = sbr.rel (%p189) target = $region36
        $region35: #{tpu_custom_call.1} parent=27 // pred_region
          %192 = dma.done %s185, 131072
        $region36: #{tpu_custom_call.1} parent=27 // pred_fallthru
          _
        %s193 = sand.u32 %s30, 1
        %s194 = scalar_lea.sflag [#allocation3], %s193
        %s195 = sand.u32 %s30, 1
        %s196 = smul.addr %s195, 8192
        %s197 = scalar_lea.vmem [#allocation2], %s196
        %p198 = pneg %p43
        %p199 = pneg %p40
        %s200 = sand.u32 %s56, 1
        %s201 = scalar_lea.sflag [#allocation6], %s200
        %s202 = sand.u32 %s56, 1
        %s203 = smul.addr %s202, 8192
        %s204 = scalar_lea.vmem [#allocation5], %s203
        %p205 = pneg %p69
        %p206 = pneg %p66
        %p207 = pneg %p95
        %p208 = pneg %p92
        %s209 = sand.u32 %s82, 1
        %s210 = scalar_lea.sflag [#allocation4], %s209
        %s211 = sand.u32 %s82, 1
        %s212 = smul.addr %s211, 8
        %s213 = scalar_lea.vmem [#allocation7], %s212
        %s214 = smul.u32 1024, %s22
        %s215 = ssub.s32 2127, %s214
        %p216 = scmp.lt.s32.totalorder %s215, 1024
        %s217 = scalar_select %p216, %s215, 1024
        %s218 = smul.u32 128, %s217
        %s219 = smul.u32 1024, %s22
        %s220 = ssub.s32 2127, %s219
        %p221 = scmp.lt.s32.totalorder %s220, 1024
        %s222 = scalar_select %p221, %s220, 1024
        %s223 = smul.u32 128, %s222
        %v224 = vld [vmem:[%s179] sm:$0xff]
        %v225 = vld [vmem:[%s179 + $0x8] sm:$0xff]
        %v226 = vld [vmem:[%s179 + $0x10] sm:$0xff]
        %v227 = vld [vmem:[%s179 + $0x18] sm:$0xff]
        %v228 = vld [vmem:[%s179 + $0x20] sm:$0xff]
        %v229 = vld [vmem:[%s179 + $0x28] sm:$0xff]
        %v230 = vld [vmem:[%s179 + $0x30] sm:$0xff]
        %v231 = vld [vmem:[%s179 + $0x38] sm:$0xff]
        %v232 = vld [vmem:[%s179 + $0x40] sm:$0xff]
        %v233 = vld [vmem:[%s179 + $0x48] sm:$0xff]
        %v234 = vld [vmem:[%s179 + $0x50] sm:$0xff]
        %v235 = vld [vmem:[%s179 + $0x58] sm:$0xff]
        %v236 = vld [vmem:[%s179 + $0x60] sm:$0xff]
        %v237 = vld [vmem:[%s179 + $0x68] sm:$0xff]
        %v238 = vld [vmem:[%s179 + $0x70] sm:$0xff]
        %v239 = vld [vmem:[%s179 + $0x78] sm:$0xff]
        %v240 = vld [vmem:[%s179 + $0x80] sm:$0xff]
        %v241 = vld [vmem:[%s179 + $0x88] sm:$0xff]
        %v242 = vld [vmem:[%s179 + $0x90] sm:$0xff]
        %v243 = vld [vmem:[%s179 + $0x98] sm:$0xff]
        %v244 = vld [vmem:[%s179 + $0xa0] sm:$0xff]
        %v245 = vld [vmem:[%s179 + $0xa8] sm:$0xff]
        %v246 = vld [vmem:[%s179 + $0xb0] sm:$0xff]
        %v247 = vld [vmem:[%s179 + $0xb8] sm:$0xff]
        %v248 = vld [vmem:[%s179 + $0xc0] sm:$0xff]
        %v249 = vld [vmem:[%s179 + $0xc8] sm:$0xff]
        %v250 = vld [vmem:[%s179 + $0xd0] sm:$0xff]
        %v251 = vld [vmem:[%s179 + $0xd8] sm:$0xff]
        %v252 = vld [vmem:[%s179 + $0xe0] sm:$0xff]
        %v253 = vld [vmem:[%s179 + $0xe8] sm:$0xff]
        %v254 = vld [vmem:[%s179 + $0xf0] sm:$0xff]
        %v255 = vld [vmem:[%s179 + $0xf8] sm:$0xff]
        %v256 = vld [vmem:[%s179 + $0x100] sm:$0xff]
        %v257 = vld [vmem:[%s179 + $0x108] sm:$0xff]
        %v258 = vld [vmem:[%s179 + $0x110] sm:$0xff]
        %v259 = vld [vmem:[%s179 + $0x118] sm:$0xff]
        %v260 = vld [vmem:[%s179 + $0x120] sm:$0xff]
        %v261 = vld [vmem:[%s179 + $0x128] sm:$0xff]
        %v262 = vld [vmem:[%s179 + $0x130] sm:$0xff]
        %v263 = vld [vmem:[%s179 + $0x138] sm:$0xff]
        %v264 = vld [vmem:[%s179 + $0x140] sm:$0xff]
        %v265 = vld [vmem:[%s179 + $0x148] sm:$0xff]
        %v266 = vld [vmem:[%s179 + $0x150] sm:$0xff]
        %v267 = vld [vmem:[%s179 + $0x158] sm:$0xff]
        %v268 = vld [vmem:[%s179 + $0x160] sm:$0xff]
        %v269 = vld [vmem:[%s179 + $0x168] sm:$0xff]
        %v270 = vld [vmem:[%s179 + $0x170] sm:$0xff]
        %v271 = vld [vmem:[%s179 + $0x178] sm:$0xff]
        %v272 = vld [vmem:[%s179 + $0x180] sm:$0xff]
        %v273 = vld [vmem:[%s179 + $0x188] sm:$0xff]
        %v274 = vld [vmem:[%s179 + $0x190] sm:$0xff]
        %v275 = vld [vmem:[%s179 + $0x198] sm:$0xff]
        %v276 = vld [vmem:[%s179 + $0x1a0] sm:$0xff]
        %v277 = vld [vmem:[%s179 + $0x1a8] sm:$0xff]
        %v278 = vld [vmem:[%s179 + $0x1b0] sm:$0xff]
        %v279 = vld [vmem:[%s179 + $0x1b8] sm:$0xff]
        %v280 = vld [vmem:[%s179 + $0x1c0] sm:$0xff]
        %v281 = vld [vmem:[%s179 + $0x1c8] sm:$0xff]
        %v282 = vld [vmem:[%s179 + $0x1d0] sm:$0xff]
        %v283 = vld [vmem:[%s179 + $0x1d8] sm:$0xff]
        %v284 = vld [vmem:[%s179 + $0x1e0] sm:$0xff]
        %v285 = vld [vmem:[%s179 + $0x1e8] sm:$0xff]
        %v286 = vld [vmem:[%s179 + $0x1f0] sm:$0xff]
        %v287 = vld [vmem:[%s179 + $0x1f8] sm:$0xff]
        %v288 = vld [vmem:[%s179 + $0x200] sm:$0xff]
        %v289 = vld [vmem:[%s179 + $0x208] sm:$0xff]
        %v290 = vld [vmem:[%s179 + $0x210] sm:$0xff]
        %v291 = vld [vmem:[%s179 + $0x218] sm:$0xff]
        %v292 = vld [vmem:[%s179 + $0x220] sm:$0xff]
        %v293 = vld [vmem:[%s179 + $0x228] sm:$0xff]
        %v294 = vld [vmem:[%s179 + $0x230] sm:$0xff]
        %v295 = vld [vmem:[%s179 + $0x238] sm:$0xff]
        %v296 = vld [vmem:[%s179 + $0x240] sm:$0xff]
        %v297 = vld [vmem:[%s179 + $0x248] sm:$0xff]
        %v298 = vld [vmem:[%s179 + $0x250] sm:$0xff]
        %v299 = vld [vmem:[%s179 + $0x258] sm:$0xff]
        %v300 = vld [vmem:[%s179 + $0x260] sm:$0xff]
        %v301 = vld [vmem:[%s179 + $0x268] sm:$0xff]
        %v302 = vld [vmem:[%s179 + $0x270] sm:$0xff]
        %v303 = vld [vmem:[%s179 + $0x278] sm:$0xff]
        %v304 = vld [vmem:[%s179 + $0x280] sm:$0xff]
        %v305 = vld [vmem:[%s179 + $0x288] sm:$0xff]
        %v306 = vld [vmem:[%s179 + $0x290] sm:$0xff]
        %v307 = vld [vmem:[%s179 + $0x298] sm:$0xff]
        %v308 = vld [vmem:[%s179 + $0x2a0] sm:$0xff]
        %v309 = vld [vmem:[%s179 + $0x2a8] sm:$0xff]
        %v310 = vld [vmem:[%s179 + $0x2b0] sm:$0xff]
        %v311 = vld [vmem:[%s179 + $0x2b8] sm:$0xff]
        %v312 = vld [vmem:[%s179 + $0x2c0] sm:$0xff]
        %v313 = vld [vmem:[%s179 + $0x2c8] sm:$0xff]
        %v314 = vld [vmem:[%s179 + $0x2d0] sm:$0xff]
        %v315 = vld [vmem:[%s179 + $0x2d8] sm:$0xff]
        %v316 = vld [vmem:[%s179 + $0x2e0] sm:$0xff]
        %v317 = vld [vmem:[%s179 + $0x2e8] sm:$0xff]
        %v318 = vld [vmem:[%s179 + $0x2f0] sm:$0xff]
        %v319 = vld [vmem:[%s179 + $0x2f8] sm:$0xff]
        %v320 = vld [vmem:[%s179 + $0x300] sm:$0xff]
        %v321 = vld [vmem:[%s179 + $0x308] sm:$0xff]
        %v322 = vld [vmem:[%s179 + $0x310] sm:$0xff]
        %v323 = vld [vmem:[%s179 + $0x318] sm:$0xff]
        %v324 = vld [vmem:[%s179 + $0x320] sm:$0xff]
        %v325 = vld [vmem:[%s179 + $0x328] sm:$0xff]
        %v326 = vld [vmem:[%s179 + $0x330] sm:$0xff]
        %v327 = vld [vmem:[%s179 + $0x338] sm:$0xff]
        %v328 = vld [vmem:[%s179 + $0x340] sm:$0xff]
        %v329 = vld [vmem:[%s179 + $0x348] sm:$0xff]
        %v330 = vld [vmem:[%s179 + $0x350] sm:$0xff]
        %v331 = vld [vmem:[%s179 + $0x358] sm:$0xff]
        %v332 = vld [vmem:[%s179 + $0x360] sm:$0xff]
        %v333 = vld [vmem:[%s179 + $0x368] sm:$0xff]
        %v334 = vld [vmem:[%s179 + $0x370] sm:$0xff]
        %v335 = vld [vmem:[%s179 + $0x378] sm:$0xff]
        %v336 = vld [vmem:[%s179 + $0x380] sm:$0xff]
        %v337 = vld [vmem:[%s179 + $0x388] sm:$0xff]
        %v338 = vld [vmem:[%s179 + $0x390] sm:$0xff]
        %v339 = vld [vmem:[%s179 + $0x398] sm:$0xff]
        %v340 = vld [vmem:[%s179 + $0x3a0] sm:$0xff]
        %v341 = vld [vmem:[%s179 + $0x3a8] sm:$0xff]
        %v342 = vld [vmem:[%s179 + $0x3b0] sm:$0xff]
        %v343 = vld [vmem:[%s179 + $0x3b8] sm:$0xff]
        %v344 = vld [vmem:[%s179 + $0x3c0] sm:$0xff]
        %v345 = vld [vmem:[%s179 + $0x3c8] sm:$0xff]
        %v346 = vld [vmem:[%s179 + $0x3d0] sm:$0xff]
        %v347 = vld [vmem:[%s179 + $0x3d8] sm:$0xff]
        %v348 = vld [vmem:[%s179 + $0x3e0] sm:$0xff]
        %v349 = vld [vmem:[%s179 + $0x3e8] sm:$0xff]
        %v350 = vld [vmem:[%s179 + $0x3f0] sm:$0xff]
        %v351 = vld [vmem:[%s179 + $0x3f8] sm:$0xff]
        %v352 = vld [vmem:[%s179 + $0x400] sm:$0xff]
        %v353 = vld [vmem:[%s179 + $0x408] sm:$0xff]
        %v354 = vld [vmem:[%s179 + $0x410] sm:$0xff]
        %v355 = vld [vmem:[%s179 + $0x418] sm:$0xff]
        %v356 = vld [vmem:[%s179 + $0x420] sm:$0xff]
        %v357 = vld [vmem:[%s179 + $0x428] sm:$0xff]
        %v358 = vld [vmem:[%s179 + $0x430] sm:$0xff]
        %v359 = vld [vmem:[%s179 + $0x438] sm:$0xff]
        %v360 = vld [vmem:[%s179 + $0x440] sm:$0xff]
        %v361 = vld [vmem:[%s179 + $0x448] sm:$0xff]
        %v362 = vld [vmem:[%s179 + $0x450] sm:$0xff]
        %v363 = vld [vmem:[%s179 + $0x458] sm:$0xff]
        %v364 = vld [vmem:[%s179 + $0x460] sm:$0xff]
        %v365 = vld [vmem:[%s179 + $0x468] sm:$0xff]
        %v366 = vld [vmem:[%s179 + $0x470] sm:$0xff]
        %v367 = vld [vmem:[%s179 + $0x478] sm:$0xff]
        %v368 = vld [vmem:[%s179 + $0x480] sm:$0xff]
        %v369 = vld [vmem:[%s179 + $0x488] sm:$0xff]
        %v370 = vld [vmem:[%s179 + $0x490] sm:$0xff]
        %v371 = vld [vmem:[%s179 + $0x498] sm:$0xff]
        %v372 = vld [vmem:[%s179 + $0x4a0] sm:$0xff]
        %v373 = vld [vmem:[%s179 + $0x4a8] sm:$0xff]
        %v374 = vld [vmem:[%s179 + $0x4b0] sm:$0xff]
        %v375 = vld [vmem:[%s179 + $0x4b8] sm:$0xff]
        %v376 = vld [vmem:[%s179 + $0x4c0] sm:$0xff]
        %v377 = vld [vmem:[%s179 + $0x4c8] sm:$0xff]
        %v378 = vld [vmem:[%s179 + $0x4d0] sm:$0xff]
        %v379 = vld [vmem:[%s179 + $0x4d8] sm:$0xff]
        %v380 = vld [vmem:[%s179 + $0x4e0] sm:$0xff]
        %v381 = vld [vmem:[%s179 + $0x4e8] sm:$0xff]
        %v382 = vld [vmem:[%s179 + $0x4f0] sm:$0xff]
        %v383 = vld [vmem:[%s179 + $0x4f8] sm:$0xff]
        %v384 = vld [vmem:[%s179 + $0x500] sm:$0xff]
        %v385 = vld [vmem:[%s179 + $0x508] sm:$0xff]
        %v386 = vld [vmem:[%s179 + $0x510] sm:$0xff]
        %v387 = vld [vmem:[%s179 + $0x518] sm:$0xff]
        %v388 = vld [vmem:[%s179 + $0x520] sm:$0xff]
        %v389 = vld [vmem:[%s179 + $0x528] sm:$0xff]
        %v390 = vld [vmem:[%s179 + $0x530] sm:$0xff]
        %v391 = vld [vmem:[%s179 + $0x538] sm:$0xff]
        %v392 = vld [vmem:[%s179 + $0x540] sm:$0xff]
        %v393 = vld [vmem:[%s179 + $0x548] sm:$0xff]
        %v394 = vld [vmem:[%s179 + $0x550] sm:$0xff]
        %v395 = vld [vmem:[%s179 + $0x558] sm:$0xff]
        %v396 = vld [vmem:[%s179 + $0x560] sm:$0xff]
        %v397 = vld [vmem:[%s179 + $0x568] sm:$0xff]
        %v398 = vld [vmem:[%s179 + $0x570] sm:$0xff]
        %v399 = vld [vmem:[%s179 + $0x578] sm:$0xff]
        %v400 = vld [vmem:[%s179 + $0x580] sm:$0xff]
        %v401 = vld [vmem:[%s179 + $0x588] sm:$0xff]
        %v402 = vld [vmem:[%s179 + $0x590] sm:$0xff]
        %v403 = vld [vmem:[%s179 + $0x598] sm:$0xff]
        %v404 = vld [vmem:[%s179 + $0x5a0] sm:$0xff]
        %v405 = vld [vmem:[%s179 + $0x5a8] sm:$0xff]
        %v406 = vld [vmem:[%s179 + $0x5b0] sm:$0xff]
        %v407 = vld [vmem:[%s179 + $0x5b8] sm:$0xff]
        %v408 = vld [vmem:[%s179 + $0x5c0] sm:$0xff]
        %v409 = vld [vmem:[%s179 + $0x5c8] sm:$0xff]
        %v410 = vld [vmem:[%s179 + $0x5d0] sm:$0xff]
        %v411 = vld [vmem:[%s179 + $0x5d8] sm:$0xff]
        %v412 = vld [vmem:[%s179 + $0x5e0] sm:$0xff]
        %v413 = vld [vmem:[%s179 + $0x5e8] sm:$0xff]
        %v414 = vld [vmem:[%s179 + $0x5f0] sm:$0xff]
        %v415 = vld [vmem:[%s179 + $0x5f8] sm:$0xff]
        %v416 = vld [vmem:[%s179 + $0x600] sm:$0xff]
        %v417 = vld [vmem:[%s179 + $0x608] sm:$0xff]
        %v418 = vld [vmem:[%s179 + $0x610] sm:$0xff]
        %v419 = vld [vmem:[%s179 + $0x618] sm:$0xff]
        %v420 = vld [vmem:[%s179 + $0x620] sm:$0xff]
        %v421 = vld [vmem:[%s179 + $0x628] sm:$0xff]
        %v422 = vld [vmem:[%s179 + $0x630] sm:$0xff]
        %v423 = vld [vmem:[%s179 + $0x638] sm:$0xff]
        %v424 = vld [vmem:[%s179 + $0x640] sm:$0xff]
        %v425 = vld [vmem:[%s179 + $0x648] sm:$0xff]
        %v426 = vld [vmem:[%s179 + $0x650] sm:$0xff]
        %v427 = vld [vmem:[%s179 + $0x658] sm:$0xff]
        %v428 = vld [vmem:[%s179 + $0x660] sm:$0xff]
        %v429 = vld [vmem:[%s179 + $0x668] sm:$0xff]
        %v430 = vld [vmem:[%s179 + $0x670] sm:$0xff]
        %v431 = vld [vmem:[%s179 + $0x678] sm:$0xff]
        %v432 = vld [vmem:[%s179 + $0x680] sm:$0xff]
        %v433 = vld [vmem:[%s179 + $0x688] sm:$0xff]
        %v434 = vld [vmem:[%s179 + $0x690] sm:$0xff]
        %v435 = vld [vmem:[%s179 + $0x698] sm:$0xff]
        %v436 = vld [vmem:[%s179 + $0x6a0] sm:$0xff]
        %v437 = vld [vmem:[%s179 + $0x6a8] sm:$0xff]
        %v438 = vld [vmem:[%s179 + $0x6b0] sm:$0xff]
        %v439 = vld [vmem:[%s179 + $0x6b8] sm:$0xff]
        %v440 = vld [vmem:[%s179 + $0x6c0] sm:$0xff]
        %v441 = vld [vmem:[%s179 + $0x6c8] sm:$0xff]
        %v442 = vld [vmem:[%s179 + $0x6d0] sm:$0xff]
        %v443 = vld [vmem:[%s179 + $0x6d8] sm:$0xff]
        %v444 = vld [vmem:[%s179 + $0x6e0] sm:$0xff]
        %v445 = vld [vmem:[%s179 + $0x6e8] sm:$0xff]
        %v446 = vld [vmem:[%s179 + $0x6f0] sm:$0xff]
        %v447 = vld [vmem:[%s179 + $0x6f8] sm:$0xff]
        %v448 = vld [vmem:[%s179 + $0x700] sm:$0xff]
        %v449 = vld [vmem:[%s179 + $0x708] sm:$0xff]
        %v450 = vld [vmem:[%s179 + $0x710] sm:$0xff]
        %v451 = vld [vmem:[%s179 + $0x718] sm:$0xff]
        %v452 = vld [vmem:[%s179 + $0x720] sm:$0xff]
        %v453 = vld [vmem:[%s179 + $0x728] sm:$0xff]
        %v454 = vld [vmem:[%s179 + $0x730] sm:$0xff]
        %v455 = vld [vmem:[%s179 + $0x738] sm:$0xff]
        %v456 = vld [vmem:[%s179 + $0x740] sm:$0xff]
        %v457 = vld [vmem:[%s179 + $0x748] sm:$0xff]
        %v458 = vld [vmem:[%s179 + $0x750] sm:$0xff]
        %v459 = vld [vmem:[%s179 + $0x758] sm:$0xff]
        %v460 = vld [vmem:[%s179 + $0x760] sm:$0xff]
        %v461 = vld [vmem:[%s179 + $0x768] sm:$0xff]
        %v462 = vld [vmem:[%s179 + $0x770] sm:$0xff]
        %v463 = vld [vmem:[%s179 + $0x778] sm:$0xff]
        %v464 = vld [vmem:[%s179 + $0x780] sm:$0xff]
        %v465 = vld [vmem:[%s179 + $0x788] sm:$0xff]
        %v466 = vld [vmem:[%s179 + $0x790] sm:$0xff]
        %v467 = vld [vmem:[%s179 + $0x798] sm:$0xff]
        %v468 = vld [vmem:[%s179 + $0x7a0] sm:$0xff]
        %v469 = vld [vmem:[%s179 + $0x7a8] sm:$0xff]
        %v470 = vld [vmem:[%s179 + $0x7b0] sm:$0xff]
        %v471 = vld [vmem:[%s179 + $0x7b8] sm:$0xff]
        %v472 = vld [vmem:[%s179 + $0x7c0] sm:$0xff]
        %v473 = vld [vmem:[%s179 + $0x7c8] sm:$0xff]
        %v474 = vld [vmem:[%s179 + $0x7d0] sm:$0xff]
        %v475 = vld [vmem:[%s179 + $0x7d8] sm:$0xff]
        %v476 = vld [vmem:[%s179 + $0x7e0] sm:$0xff]
        %v477 = vld [vmem:[%s179 + $0x7e8] sm:$0xff]
        %v478 = vld [vmem:[%s179 + $0x7f0] sm:$0xff]
        %v479 = vld [vmem:[%s179 + $0x7f8] sm:$0xff]
        %v480 = vld [vmem:[%s179 + $0x800] sm:$0xff]
        %v481 = vld [vmem:[%s179 + $0x808] sm:$0xff]
        %v482 = vld [vmem:[%s179 + $0x810] sm:$0xff]
        %v483 = vld [vmem:[%s179 + $0x818] sm:$0xff]
        %v484 = vld [vmem:[%s179 + $0x820] sm:$0xff]
        %v485 = vld [vmem:[%s179 + $0x828] sm:$0xff]
        %v486 = vld [vmem:[%s179 + $0x830] sm:$0xff]
        %v487 = vld [vmem:[%s179 + $0x838] sm:$0xff]
        %v488 = vld [vmem:[%s179 + $0x840] sm:$0xff]
        %v489 = vld [vmem:[%s179 + $0x848] sm:$0xff]
        %v490 = vld [vmem:[%s179 + $0x850] sm:$0xff]
        %v491 = vld [vmem:[%s179 + $0x858] sm:$0xff]
        %v492 = vld [vmem:[%s179 + $0x860] sm:$0xff]
        %v493 = vld [vmem:[%s179 + $0x868] sm:$0xff]
        %v494 = vld [vmem:[%s179 + $0x870] sm:$0xff]
        %v495 = vld [vmem:[%s179 + $0x878] sm:$0xff]
        %v496 = vld [vmem:[%s179 + $0x880] sm:$0xff]
        %v497 = vld [vmem:[%s179 + $0x888] sm:$0xff]
        %v498 = vld [vmem:[%s179 + $0x890] sm:$0xff]
        %v499 = vld [vmem:[%s179 + $0x898] sm:$0xff]
        %v500 = vld [vmem:[%s179 + $0x8a0] sm:$0xff]
        %v501 = vld [vmem:[%s179 + $0x8a8] sm:$0xff]
        %v502 = vld [vmem:[%s179 + $0x8b0] sm:$0xff]
        %v503 = vld [vmem:[%s179 + $0x8b8] sm:$0xff]
        %v504 = vld [vmem:[%s179 + $0x8c0] sm:$0xff]
        %v505 = vld [vmem:[%s179 + $0x8c8] sm:$0xff]
        %v506 = vld [vmem:[%s179 + $0x8d0] sm:$0xff]
        %v507 = vld [vmem:[%s179 + $0x8d8] sm:$0xff]
        %v508 = vld [vmem:[%s179 + $0x8e0] sm:$0xff]
        %v509 = vld [vmem:[%s179 + $0x8e8] sm:$0xff]
        %v510 = vld [vmem:[%s179 + $0x8f0] sm:$0xff]
        %v511 = vld [vmem:[%s179 + $0x8f8] sm:$0xff]
        %v512 = vld [vmem:[%s179 + $0x900] sm:$0xff]
        %v513 = vld [vmem:[%s179 + $0x908] sm:$0xff]
        %v514 = vld [vmem:[%s179 + $0x910] sm:$0xff]
        %v515 = vld [vmem:[%s179 + $0x918] sm:$0xff]
        %v516 = vld [vmem:[%s179 + $0x920] sm:$0xff]
        %v517 = vld [vmem:[%s179 + $0x928] sm:$0xff]
        %v518 = vld [vmem:[%s179 + $0x930] sm:$0xff]
        %v519 = vld [vmem:[%s179 + $0x938] sm:$0xff]
        %v520 = vld [vmem:[%s179 + $0x940] sm:$0xff]
        %v521 = vld [vmem:[%s179 + $0x948] sm:$0xff]
        %v522 = vld [vmem:[%s179 + $0x950] sm:$0xff]
        %v523 = vld [vmem:[%s179 + $0x958] sm:$0xff]
        %v524 = vld [vmem:[%s179 + $0x960] sm:$0xff]
        %v525 = vld [vmem:[%s179 + $0x968] sm:$0xff]
        %v526 = vld [vmem:[%s179 + $0x970] sm:$0xff]
        %v527 = vld [vmem:[%s179 + $0x978] sm:$0xff]
        %v528 = vld [vmem:[%s179 + $0x980] sm:$0xff]
        %v529 = vld [vmem:[%s179 + $0x988] sm:$0xff]
        %v530 = vld [vmem:[%s179 + $0x990] sm:$0xff]
        %v531 = vld [vmem:[%s179 + $0x998] sm:$0xff]
        %v532 = vld [vmem:[%s179 + $0x9a0] sm:$0xff]
        %v533 = vld [vmem:[%s179 + $0x9a8] sm:$0xff]
        %v534 = vld [vmem:[%s179 + $0x9b0] sm:$0xff]
        %v535 = vld [vmem:[%s179 + $0x9b8] sm:$0xff]
        %v536 = vld [vmem:[%s179 + $0x9c0] sm:$0xff]
        %v537 = vld [vmem:[%s179 + $0x9c8] sm:$0xff]
        %v538 = vld [vmem:[%s179 + $0x9d0] sm:$0xff]
        %v539 = vld [vmem:[%s179 + $0x9d8] sm:$0xff]
        %v540 = vld [vmem:[%s179 + $0x9e0] sm:$0xff]
        %v541 = vld [vmem:[%s179 + $0x9e8] sm:$0xff]
        %v542 = vld [vmem:[%s179 + $0x9f0] sm:$0xff]
        %v543 = vld [vmem:[%s179 + $0x9f8] sm:$0xff]
        %v544 = vld [vmem:[%s179 + $0xa00] sm:$0xff]
        %v545 = vld [vmem:[%s179 + $0xa08] sm:$0xff]
        %v546 = vld [vmem:[%s179 + $0xa10] sm:$0xff]
        %v547 = vld [vmem:[%s179 + $0xa18] sm:$0xff]
        %v548 = vld [vmem:[%s179 + $0xa20] sm:$0xff]
        %v549 = vld [vmem:[%s179 + $0xa28] sm:$0xff]
        %v550 = vld [vmem:[%s179 + $0xa30] sm:$0xff]
        %v551 = vld [vmem:[%s179 + $0xa38] sm:$0xff]
        %v552 = vld [vmem:[%s179 + $0xa40] sm:$0xff]
        %v553 = vld [vmem:[%s179 + $0xa48] sm:$0xff]
        %v554 = vld [vmem:[%s179 + $0xa50] sm:$0xff]
        %v555 = vld [vmem:[%s179 + $0xa58] sm:$0xff]
        %v556 = vld [vmem:[%s179 + $0xa60] sm:$0xff]
        %v557 = vld [vmem:[%s179 + $0xa68] sm:$0xff]
        %v558 = vld [vmem:[%s179 + $0xa70] sm:$0xff]
        %v559 = vld [vmem:[%s179 + $0xa78] sm:$0xff]
        %v560 = vld [vmem:[%s179 + $0xa80] sm:$0xff]
        %v561 = vld [vmem:[%s179 + $0xa88] sm:$0xff]
        %v562 = vld [vmem:[%s179 + $0xa90] sm:$0xff]
        %v563 = vld [vmem:[%s179 + $0xa98] sm:$0xff]
        %v564 = vld [vmem:[%s179 + $0xaa0] sm:$0xff]
        %v565 = vld [vmem:[%s179 + $0xaa8] sm:$0xff]
        %v566 = vld [vmem:[%s179 + $0xab0] sm:$0xff]
        %v567 = vld [vmem:[%s179 + $0xab8] sm:$0xff]
        %v568 = vld [vmem:[%s179 + $0xac0] sm:$0xff]
        %v569 = vld [vmem:[%s179 + $0xac8] sm:$0xff]
        %v570 = vld [vmem:[%s179 + $0xad0] sm:$0xff]
        %v571 = vld [vmem:[%s179 + $0xad8] sm:$0xff]
        %v572 = vld [vmem:[%s179 + $0xae0] sm:$0xff]
        %v573 = vld [vmem:[%s179 + $0xae8] sm:$0xff]
        %v574 = vld [vmem:[%s179 + $0xaf0] sm:$0xff]
        %v575 = vld [vmem:[%s179 + $0xaf8] sm:$0xff]
        %v576 = vld [vmem:[%s179 + $0xb00] sm:$0xff]
        %v577 = vld [vmem:[%s179 + $0xb08] sm:$0xff]
        %v578 = vld [vmem:[%s179 + $0xb10] sm:$0xff]
        %v579 = vld [vmem:[%s179 + $0xb18] sm:$0xff]
        %v580 = vld [vmem:[%s179 + $0xb20] sm:$0xff]
        %v581 = vld [vmem:[%s179 + $0xb28] sm:$0xff]
        %v582 = vld [vmem:[%s179 + $0xb30] sm:$0xff]
        %v583 = vld [vmem:[%s179 + $0xb38] sm:$0xff]
        %v584 = vld [vmem:[%s179 + $0xb40] sm:$0xff]
        %v585 = vld [vmem:[%s179 + $0xb48] sm:$0xff]
        %v586 = vld [vmem:[%s179 + $0xb50] sm:$0xff]
        %v587 = vld [vmem:[%s179 + $0xb58] sm:$0xff]
        %v588 = vld [vmem:[%s179 + $0xb60] sm:$0xff]
        %v589 = vld [vmem:[%s179 + $0xb68] sm:$0xff]
        %v590 = vld [vmem:[%s179 + $0xb70] sm:$0xff]
        %v591 = vld [vmem:[%s179 + $0xb78] sm:$0xff]
        %v592 = vld [vmem:[%s179 + $0xb80] sm:$0xff]
        %v593 = vld [vmem:[%s179 + $0xb88] sm:$0xff]
        %v594 = vld [vmem:[%s179 + $0xb90] sm:$0xff]
        %v595 = vld [vmem:[%s179 + $0xb98] sm:$0xff]
        %v596 = vld [vmem:[%s179 + $0xba0] sm:$0xff]
        %v597 = vld [vmem:[%s179 + $0xba8] sm:$0xff]
        %v598 = vld [vmem:[%s179 + $0xbb0] sm:$0xff]
        %v599 = vld [vmem:[%s179 + $0xbb8] sm:$0xff]
        %v600 = vld [vmem:[%s179 + $0xbc0] sm:$0xff]
        %v601 = vld [vmem:[%s179 + $0xbc8] sm:$0xff]
        %v602 = vld [vmem:[%s179 + $0xbd0] sm:$0xff]
        %v603 = vld [vmem:[%s179 + $0xbd8] sm:$0xff]
        %v604 = vld [vmem:[%s179 + $0xbe0] sm:$0xff]
        %v605 = vld [vmem:[%s179 + $0xbe8] sm:$0xff]
        %v606 = vld [vmem:[%s179 + $0xbf0] sm:$0xff]
        %v607 = vld [vmem:[%s179 + $0xbf8] sm:$0xff]
        %v608 = vld [vmem:[%s179 + $0xc00] sm:$0xff]
        %v609 = vld [vmem:[%s179 + $0xc08] sm:$0xff]
        %v610 = vld [vmem:[%s179 + $0xc10] sm:$0xff]
        %v611 = vld [vmem:[%s179 + $0xc18] sm:$0xff]
        %v612 = vld [vmem:[%s179 + $0xc20] sm:$0xff]
        %v613 = vld [vmem:[%s179 + $0xc28] sm:$0xff]
        %v614 = vld [vmem:[%s179 + $0xc30] sm:$0xff]
        %v615 = vld [vmem:[%s179 + $0xc38] sm:$0xff]
        %v616 = vld [vmem:[%s179 + $0xc40] sm:$0xff]
        %v617 = vld [vmem:[%s179 + $0xc48] sm:$0xff]
        %v618 = vld [vmem:[%s179 + $0xc50] sm:$0xff]
        %v619 = vld [vmem:[%s179 + $0xc58] sm:$0xff]
        %v620 = vld [vmem:[%s179 + $0xc60] sm:$0xff]
        %v621 = vld [vmem:[%s179 + $0xc68] sm:$0xff]
        %v622 = vld [vmem:[%s179 + $0xc70] sm:$0xff]
        %v623 = vld [vmem:[%s179 + $0xc78] sm:$0xff]
        %v624 = vld [vmem:[%s179 + $0xc80] sm:$0xff]
        %v625 = vld [vmem:[%s179 + $0xc88] sm:$0xff]
        %v626 = vld [vmem:[%s179 + $0xc90] sm:$0xff]
        %v627 = vld [vmem:[%s179 + $0xc98] sm:$0xff]
        %v628 = vld [vmem:[%s179 + $0xca0] sm:$0xff]
        %v629 = vld [vmem:[%s179 + $0xca8] sm:$0xff]
        %v630 = vld [vmem:[%s179 + $0xcb0] sm:$0xff]
        %v631 = vld [vmem:[%s179 + $0xcb8] sm:$0xff]
        %v632 = vld [vmem:[%s179 + $0xcc0] sm:$0xff]
        %v633 = vld [vmem:[%s179 + $0xcc8] sm:$0xff]
        %v634 = vld [vmem:[%s179 + $0xcd0] sm:$0xff]
        %v635 = vld [vmem:[%s179 + $0xcd8] sm:$0xff]
        %v636 = vld [vmem:[%s179 + $0xce0] sm:$0xff]
        %v637 = vld [vmem:[%s179 + $0xce8] sm:$0xff]
        %v638 = vld [vmem:[%s179 + $0xcf0] sm:$0xff]
        %v639 = vld [vmem:[%s179 + $0xcf8] sm:$0xff]
        %v640 = vld [vmem:[%s179 + $0xd00] sm:$0xff]
        %v641 = vld [vmem:[%s179 + $0xd08] sm:$0xff]
        %v642 = vld [vmem:[%s179 + $0xd10] sm:$0xff]
        %v643 = vld [vmem:[%s179 + $0xd18] sm:$0xff]
        %v644 = vld [vmem:[%s179 + $0xd20] sm:$0xff]
        %v645 = vld [vmem:[%s179 + $0xd28] sm:$0xff]
        %v646 = vld [vmem:[%s179 + $0xd30] sm:$0xff]
        %v647 = vld [vmem:[%s179 + $0xd38] sm:$0xff]
        %v648 = vld [vmem:[%s179 + $0xd40] sm:$0xff]
        %v649 = vld [vmem:[%s179 + $0xd48] sm:$0xff]
        %v650 = vld [vmem:[%s179 + $0xd50] sm:$0xff]
        %v651 = vld [vmem:[%s179 + $0xd58] sm:$0xff]
        %v652 = vld [vmem:[%s179 + $0xd60] sm:$0xff]
        %v653 = vld [vmem:[%s179 + $0xd68] sm:$0xff]
        %v654 = vld [vmem:[%s179 + $0xd70] sm:$0xff]
        %v655 = vld [vmem:[%s179 + $0xd78] sm:$0xff]
        %v656 = vld [vmem:[%s179 + $0xd80] sm:$0xff]
        %v657 = vld [vmem:[%s179 + $0xd88] sm:$0xff]
        %v658 = vld [vmem:[%s179 + $0xd90] sm:$0xff]
        %v659 = vld [vmem:[%s179 + $0xd98] sm:$0xff]
        %v660 = vld [vmem:[%s179 + $0xda0] sm:$0xff]
        %v661 = vld [vmem:[%s179 + $0xda8] sm:$0xff]
        %v662 = vld [vmem:[%s179 + $0xdb0] sm:$0xff]
        %v663 = vld [vmem:[%s179 + $0xdb8] sm:$0xff]
        %v664 = vld [vmem:[%s179 + $0xdc0] sm:$0xff]
        %v665 = vld [vmem:[%s179 + $0xdc8] sm:$0xff]
        %v666 = vld [vmem:[%s179 + $0xdd0] sm:$0xff]
        %v667 = vld [vmem:[%s179 + $0xdd8] sm:$0xff]
        %v668 = vld [vmem:[%s179 + $0xde0] sm:$0xff]
        %v669 = vld [vmem:[%s179 + $0xde8] sm:$0xff]
        %v670 = vld [vmem:[%s179 + $0xdf0] sm:$0xff]
        %v671 = vld [vmem:[%s179 + $0xdf8] sm:$0xff]
        %v672 = vld [vmem:[%s179 + $0xe00] sm:$0xff]
        %v673 = vld [vmem:[%s179 + $0xe08] sm:$0xff]
        %v674 = vld [vmem:[%s179 + $0xe10] sm:$0xff]
        %v675 = vld [vmem:[%s179 + $0xe18] sm:$0xff]
        %v676 = vld [vmem:[%s179 + $0xe20] sm:$0xff]
        %v677 = vld [vmem:[%s179 + $0xe28] sm:$0xff]
        %v678 = vld [vmem:[%s179 + $0xe30] sm:$0xff]
        %v679 = vld [vmem:[%s179 + $0xe38] sm:$0xff]
        %v680 = vld [vmem:[%s179 + $0xe40] sm:$0xff]
        %v681 = vld [vmem:[%s179 + $0xe48] sm:$0xff]
        %v682 = vld [vmem:[%s179 + $0xe50] sm:$0xff]
        %v683 = vld [vmem:[%s179 + $0xe58] sm:$0xff]
        %v684 = vld [vmem:[%s179 + $0xe60] sm:$0xff]
        %v685 = vld [vmem:[%s179 + $0xe68] sm:$0xff]
        %v686 = vld [vmem:[%s179 + $0xe70] sm:$0xff]
        %v687 = vld [vmem:[%s179 + $0xe78] sm:$0xff]
        %v688 = vld [vmem:[%s179 + $0xe80] sm:$0xff]
        %v689 = vld [vmem:[%s179 + $0xe88] sm:$0xff]
        %v690 = vld [vmem:[%s179 + $0xe90] sm:$0xff]
        %v691 = vld [vmem:[%s179 + $0xe98] sm:$0xff]
        %v692 = vld [vmem:[%s179 + $0xea0] sm:$0xff]
        %v693 = vld [vmem:[%s179 + $0xea8] sm:$0xff]
        %v694 = vld [vmem:[%s179 + $0xeb0] sm:$0xff]
        %v695 = vld [vmem:[%s179 + $0xeb8] sm:$0xff]
        %v696 = vld [vmem:[%s179 + $0xec0] sm:$0xff]
        %v697 = vld [vmem:[%s179 + $0xec8] sm:$0xff]
        %v698 = vld [vmem:[%s179 + $0xed0] sm:$0xff]
        %v699 = vld [vmem:[%s179 + $0xed8] sm:$0xff]
        %v700 = vld [vmem:[%s179 + $0xee0] sm:$0xff]
        %v701 = vld [vmem:[%s179 + $0xee8] sm:$0xff]
        %v702 = vld [vmem:[%s179 + $0xef0] sm:$0xff]
        %v703 = vld [vmem:[%s179 + $0xef8] sm:$0xff]
        %v704 = vld [vmem:[%s179 + $0xf00] sm:$0xff]
        %v705 = vld [vmem:[%s179 + $0xf08] sm:$0xff]
        %v706 = vld [vmem:[%s179 + $0xf10] sm:$0xff]
        %v707 = vld [vmem:[%s179 + $0xf18] sm:$0xff]
        %v708 = vld [vmem:[%s179 + $0xf20] sm:$0xff]
        %v709 = vld [vmem:[%s179 + $0xf28] sm:$0xff]
        %v710 = vld [vmem:[%s179 + $0xf30] sm:$0xff]
        %v711 = vld [vmem:[%s179 + $0xf38] sm:$0xff]
        %v712 = vld [vmem:[%s179 + $0xf40] sm:$0xff]
        %v713 = vld [vmem:[%s179 + $0xf48] sm:$0xff]
        %v714 = vld [vmem:[%s179 + $0xf50] sm:$0xff]
        %v715 = vld [vmem:[%s179 + $0xf58] sm:$0xff]
        %v716 = vld [vmem:[%s179 + $0xf60] sm:$0xff]
        %v717 = vld [vmem:[%s179 + $0xf68] sm:$0xff]
        %v718 = vld [vmem:[%s179 + $0xf70] sm:$0xff]
        %v719 = vld [vmem:[%s179 + $0xf78] sm:$0xff]
        %v720 = vld [vmem:[%s179 + $0xf80] sm:$0xff]
        %v721 = vld [vmem:[%s179 + $0xf88] sm:$0xff]
        %v722 = vld [vmem:[%s179 + $0xf90] sm:$0xff]
        %v723 = vld [vmem:[%s179 + $0xf98] sm:$0xff]
        %v724 = vld [vmem:[%s179 + $0xfa0] sm:$0xff]
        %v725 = vld [vmem:[%s179 + $0xfa8] sm:$0xff]
        %v726 = vld [vmem:[%s179 + $0xfb0] sm:$0xff]
        %v727 = vld [vmem:[%s179 + $0xfb8] sm:$0xff]
        %v728 = vld [vmem:[%s179 + $0xfc0] sm:$0xff]
        %v729 = vld [vmem:[%s179 + $0xfc8] sm:$0xff]
        %v730 = vld [vmem:[%s179 + $0xfd0] sm:$0xff]
        %v731 = vld [vmem:[%s179 + $0xfd8] sm:$0xff]
        %v732 = vld [vmem:[%s179 + $0xfe0] sm:$0xff]
        %v733 = vld [vmem:[%s179 + $0xfe8] sm:$0xff]
        %v734 = vld [vmem:[%s179 + $0xff0] sm:$0xff]
        %v735 = vld [vmem:[%s179 + $0xff8] sm:$0xff]
        %v736 = vld [vmem:[%s179 + $0x1000] sm:$0xff]
        %v737 = vld [vmem:[%s179 + $0x1008] sm:$0xff]
        %v738 = vld [vmem:[%s179 + $0x1010] sm:$0xff]
        %v739 = vld [vmem:[%s179 + $0x1018] sm:$0xff]
        %v740 = vld [vmem:[%s179 + $0x1020] sm:$0xff]
        %v741 = vld [vmem:[%s179 + $0x1028] sm:$0xff]
        %v742 = vld [vmem:[%s179 + $0x1030] sm:$0xff]
        %v743 = vld [vmem:[%s179 + $0x1038] sm:$0xff]
        %v744 = vld [vmem:[%s179 + $0x1040] sm:$0xff]
        %v745 = vld [vmem:[%s179 + $0x1048] sm:$0xff]
        %v746 = vld [vmem:[%s179 + $0x1050] sm:$0xff]
        %v747 = vld [vmem:[%s179 + $0x1058] sm:$0xff]
        %v748 = vld [vmem:[%s179 + $0x1060] sm:$0xff]
        %v749 = vld [vmem:[%s179 + $0x1068] sm:$0xff]
        %v750 = vld [vmem:[%s179 + $0x1070] sm:$0xff]
        %v751 = vld [vmem:[%s179 + $0x1078] sm:$0xff]
        %v752 = vld [vmem:[%s179 + $0x1080] sm:$0xff]
        %v753 = vld [vmem:[%s179 + $0x1088] sm:$0xff]
        %v754 = vld [vmem:[%s179 + $0x1090] sm:$0xff]
        %v755 = vld [vmem:[%s179 + $0x1098] sm:$0xff]
        %v756 = vld [vmem:[%s179 + $0x10a0] sm:$0xff]
        %v757 = vld [vmem:[%s179 + $0x10a8] sm:$0xff]
        %v758 = vld [vmem:[%s179 + $0x10b0] sm:$0xff]
        %v759 = vld [vmem:[%s179 + $0x10b8] sm:$0xff]
        %v760 = vld [vmem:[%s179 + $0x10c0] sm:$0xff]
        %v761 = vld [vmem:[%s179 + $0x10c8] sm:$0xff]
        %v762 = vld [vmem:[%s179 + $0x10d0] sm:$0xff]
        %v763 = vld [vmem:[%s179 + $0x10d8] sm:$0xff]
        %v764 = vld [vmem:[%s179 + $0x10e0] sm:$0xff]
        %v765 = vld [vmem:[%s179 + $0x10e8] sm:$0xff]
        %v766 = vld [vmem:[%s179 + $0x10f0] sm:$0xff]
        %v767 = vld [vmem:[%s179 + $0x10f8] sm:$0xff]
        %v768 = vld [vmem:[%s179 + $0x1100] sm:$0xff]
        %v769 = vld [vmem:[%s179 + $0x1108] sm:$0xff]
        %v770 = vld [vmem:[%s179 + $0x1110] sm:$0xff]
        %v771 = vld [vmem:[%s179 + $0x1118] sm:$0xff]
        %v772 = vld [vmem:[%s179 + $0x1120] sm:$0xff]
        %v773 = vld [vmem:[%s179 + $0x1128] sm:$0xff]
        %v774 = vld [vmem:[%s179 + $0x1130] sm:$0xff]
        %v775 = vld [vmem:[%s179 + $0x1138] sm:$0xff]
        %v776 = vld [vmem:[%s179 + $0x1140] sm:$0xff]
        %v777 = vld [vmem:[%s179 + $0x1148] sm:$0xff]
        %v778 = vld [vmem:[%s179 + $0x1150] sm:$0xff]
        %v779 = vld [vmem:[%s179 + $0x1158] sm:$0xff]
        %v780 = vld [vmem:[%s179 + $0x1160] sm:$0xff]
        %v781 = vld [vmem:[%s179 + $0x1168] sm:$0xff]
        %v782 = vld [vmem:[%s179 + $0x1170] sm:$0xff]
        %v783 = vld [vmem:[%s179 + $0x1178] sm:$0xff]
        %v784 = vld [vmem:[%s179 + $0x1180] sm:$0xff]
        %v785 = vld [vmem:[%s179 + $0x1188] sm:$0xff]
        %v786 = vld [vmem:[%s179 + $0x1190] sm:$0xff]
        %v787 = vld [vmem:[%s179 + $0x1198] sm:$0xff]
        %v788 = vld [vmem:[%s179 + $0x11a0] sm:$0xff]
        %v789 = vld [vmem:[%s179 + $0x11a8] sm:$0xff]
        %v790 = vld [vmem:[%s179 + $0x11b0] sm:$0xff]
        %v791 = vld [vmem:[%s179 + $0x11b8] sm:$0xff]
        %v792 = vld [vmem:[%s179 + $0x11c0] sm:$0xff]
        %v793 = vld [vmem:[%s179 + $0x11c8] sm:$0xff]
        %v794 = vld [vmem:[%s179 + $0x11d0] sm:$0xff]
        %v795 = vld [vmem:[%s179 + $0x11d8] sm:$0xff]
        %v796 = vld [vmem:[%s179 + $0x11e0] sm:$0xff]
        %v797 = vld [vmem:[%s179 + $0x11e8] sm:$0xff]
        %v798 = vld [vmem:[%s179 + $0x11f0] sm:$0xff]
        %v799 = vld [vmem:[%s179 + $0x11f8] sm:$0xff]
        %v800 = vld [vmem:[%s179 + $0x1200] sm:$0xff]
        %v801 = vld [vmem:[%s179 + $0x1208] sm:$0xff]
        %v802 = vld [vmem:[%s179 + $0x1210] sm:$0xff]
        %v803 = vld [vmem:[%s179 + $0x1218] sm:$0xff]
        %v804 = vld [vmem:[%s179 + $0x1220] sm:$0xff]
        %v805 = vld [vmem:[%s179 + $0x1228] sm:$0xff]
        %v806 = vld [vmem:[%s179 + $0x1230] sm:$0xff]
        %v807 = vld [vmem:[%s179 + $0x1238] sm:$0xff]
        %v808 = vld [vmem:[%s179 + $0x1240] sm:$0xff]
        %v809 = vld [vmem:[%s179 + $0x1248] sm:$0xff]
        %v810 = vld [vmem:[%s179 + $0x1250] sm:$0xff]
        %v811 = vld [vmem:[%s179 + $0x1258] sm:$0xff]
        %v812 = vld [vmem:[%s179 + $0x1260] sm:$0xff]
        %v813 = vld [vmem:[%s179 + $0x1268] sm:$0xff]
        %v814 = vld [vmem:[%s179 + $0x1270] sm:$0xff]
        %v815 = vld [vmem:[%s179 + $0x1278] sm:$0xff]
        %v816 = vld [vmem:[%s179 + $0x1280] sm:$0xff]
        %v817 = vld [vmem:[%s179 + $0x1288] sm:$0xff]
        %v818 = vld [vmem:[%s179 + $0x1290] sm:$0xff]
        %v819 = vld [vmem:[%s179 + $0x1298] sm:$0xff]
        %v820 = vld [vmem:[%s179 + $0x12a0] sm:$0xff]
        %v821 = vld [vmem:[%s179 + $0x12a8] sm:$0xff]
        %v822 = vld [vmem:[%s179 + $0x12b0] sm:$0xff]
        %v823 = vld [vmem:[%s179 + $0x12b8] sm:$0xff]
        %v824 = vld [vmem:[%s179 + $0x12c0] sm:$0xff]
        %v825 = vld [vmem:[%s179 + $0x12c8] sm:$0xff]
        %v826 = vld [vmem:[%s179 + $0x12d0] sm:$0xff]
        %v827 = vld [vmem:[%s179 + $0x12d8] sm:$0xff]
        %v828 = vld [vmem:[%s179 + $0x12e0] sm:$0xff]
        %v829 = vld [vmem:[%s179 + $0x12e8] sm:$0xff]
        %v830 = vld [vmem:[%s179 + $0x12f0] sm:$0xff]
        %v831 = vld [vmem:[%s179 + $0x12f8] sm:$0xff]
        %v832 = vld [vmem:[%s179 + $0x1300] sm:$0xff]
        %v833 = vld [vmem:[%s179 + $0x1308] sm:$0xff]
        %v834 = vld [vmem:[%s179 + $0x1310] sm:$0xff]
        %v835 = vld [vmem:[%s179 + $0x1318] sm:$0xff]
        %v836 = vld [vmem:[%s179 + $0x1320] sm:$0xff]
        %v837 = vld [vmem:[%s179 + $0x1328] sm:$0xff]
        %v838 = vld [vmem:[%s179 + $0x1330] sm:$0xff]
        %v839 = vld [vmem:[%s179 + $0x1338] sm:$0xff]
        %v840 = vld [vmem:[%s179 + $0x1340] sm:$0xff]
        %v841 = vld [vmem:[%s179 + $0x1348] sm:$0xff]
        %v842 = vld [vmem:[%s179 + $0x1350] sm:$0xff]
        %v843 = vld [vmem:[%s179 + $0x1358] sm:$0xff]
        %v844 = vld [vmem:[%s179 + $0x1360] sm:$0xff]
        %v845 = vld [vmem:[%s179 + $0x1368] sm:$0xff]
        %v846 = vld [vmem:[%s179 + $0x1370] sm:$0xff]
        %v847 = vld [vmem:[%s179 + $0x1378] sm:$0xff]
        %v848 = vld [vmem:[%s179 + $0x1380] sm:$0xff]
        %v849 = vld [vmem:[%s179 + $0x1388] sm:$0xff]
        %v850 = vld [vmem:[%s179 + $0x1390] sm:$0xff]
        %v851 = vld [vmem:[%s179 + $0x1398] sm:$0xff]
        %v852 = vld [vmem:[%s179 + $0x13a0] sm:$0xff]
        %v853 = vld [vmem:[%s179 + $0x13a8] sm:$0xff]
        %v854 = vld [vmem:[%s179 + $0x13b0] sm:$0xff]
        %v855 = vld [vmem:[%s179 + $0x13b8] sm:$0xff]
        %v856 = vld [vmem:[%s179 + $0x13c0] sm:$0xff]
        %v857 = vld [vmem:[%s179 + $0x13c8] sm:$0xff]
        %v858 = vld [vmem:[%s179 + $0x13d0] sm:$0xff]
        %v859 = vld [vmem:[%s179 + $0x13d8] sm:$0xff]
        %v860 = vld [vmem:[%s179 + $0x13e0] sm:$0xff]
        %v861 = vld [vmem:[%s179 + $0x13e8] sm:$0xff]
        %v862 = vld [vmem:[%s179 + $0x13f0] sm:$0xff]
        %v863 = vld [vmem:[%s179 + $0x13f8] sm:$0xff]
        %v864 = vld [vmem:[%s179 + $0x1400] sm:$0xff]
        %v865 = vld [vmem:[%s179 + $0x1408] sm:$0xff]
        %v866 = vld [vmem:[%s179 + $0x1410] sm:$0xff]
        %v867 = vld [vmem:[%s179 + $0x1418] sm:$0xff]
        %v868 = vld [vmem:[%s179 + $0x1420] sm:$0xff]
        %v869 = vld [vmem:[%s179 + $0x1428] sm:$0xff]
        %v870 = vld [vmem:[%s179 + $0x1430] sm:$0xff]
        %v871 = vld [vmem:[%s179 + $0x1438] sm:$0xff]
        %v872 = vld [vmem:[%s179 + $0x1440] sm:$0xff]
        %v873 = vld [vmem:[%s179 + $0x1448] sm:$0xff]
        %v874 = vld [vmem:[%s179 + $0x1450] sm:$0xff]
        %v875 = vld [vmem:[%s179 + $0x1458] sm:$0xff]
        %v876 = vld [vmem:[%s179 + $0x1460] sm:$0xff]
        %v877 = vld [vmem:[%s179 + $0x1468] sm:$0xff]
        %v878 = vld [vmem:[%s179 + $0x1470] sm:$0xff]
        %v879 = vld [vmem:[%s179 + $0x1478] sm:$0xff]
        %v880 = vld [vmem:[%s179 + $0x1480] sm:$0xff]
        %v881 = vld [vmem:[%s179 + $0x1488] sm:$0xff]
        %v882 = vld [vmem:[%s179 + $0x1490] sm:$0xff]
        %v883 = vld [vmem:[%s179 + $0x1498] sm:$0xff]
        %v884 = vld [vmem:[%s179 + $0x14a0] sm:$0xff]
        %v885 = vld [vmem:[%s179 + $0x14a8] sm:$0xff]
        %v886 = vld [vmem:[%s179 + $0x14b0] sm:$0xff]
        %v887 = vld [vmem:[%s179 + $0x14b8] sm:$0xff]
        %v888 = vld [vmem:[%s179 + $0x14c0] sm:$0xff]
        %v889 = vld [vmem:[%s179 + $0x14c8] sm:$0xff]
        %v890 = vld [vmem:[%s179 + $0x14d0] sm:$0xff]
        %v891 = vld [vmem:[%s179 + $0x14d8] sm:$0xff]
        %v892 = vld [vmem:[%s179 + $0x14e0] sm:$0xff]
        %v893 = vld [vmem:[%s179 + $0x14e8] sm:$0xff]
        %v894 = vld [vmem:[%s179 + $0x14f0] sm:$0xff]
        %v895 = vld [vmem:[%s179 + $0x14f8] sm:$0xff]
        %v896 = vld [vmem:[%s179 + $0x1500] sm:$0xff]
        %v897 = vld [vmem:[%s179 + $0x1508] sm:$0xff]
        %v898 = vld [vmem:[%s179 + $0x1510] sm:$0xff]
        %v899 = vld [vmem:[%s179 + $0x1518] sm:$0xff]
        %v900 = vld [vmem:[%s179 + $0x1520] sm:$0xff]
        %v901 = vld [vmem:[%s179 + $0x1528] sm:$0xff]
        %v902 = vld [vmem:[%s179 + $0x1530] sm:$0xff]
        %v903 = vld [vmem:[%s179 + $0x1538] sm:$0xff]
        %v904 = vld [vmem:[%s179 + $0x1540] sm:$0xff]
        %v905 = vld [vmem:[%s179 + $0x1548] sm:$0xff]
        %v906 = vld [vmem:[%s179 + $0x1550] sm:$0xff]
        %v907 = vld [vmem:[%s179 + $0x1558] sm:$0xff]
        %v908 = vld [vmem:[%s179 + $0x1560] sm:$0xff]
        %v909 = vld [vmem:[%s179 + $0x1568] sm:$0xff]
        %v910 = vld [vmem:[%s179 + $0x1570] sm:$0xff]
        %v911 = vld [vmem:[%s179 + $0x1578] sm:$0xff]
        %v912 = vld [vmem:[%s179 + $0x1580] sm:$0xff]
        %v913 = vld [vmem:[%s179 + $0x1588] sm:$0xff]
        %v914 = vld [vmem:[%s179 + $0x1590] sm:$0xff]
        %v915 = vld [vmem:[%s179 + $0x1598] sm:$0xff]
        %v916 = vld [vmem:[%s179 + $0x15a0] sm:$0xff]
        %v917 = vld [vmem:[%s179 + $0x15a8] sm:$0xff]
        %v918 = vld [vmem:[%s179 + $0x15b0] sm:$0xff]
        %v919 = vld [vmem:[%s179 + $0x15b8] sm:$0xff]
        %v920 = vld [vmem:[%s179 + $0x15c0] sm:$0xff]
        %v921 = vld [vmem:[%s179 + $0x15c8] sm:$0xff]
        %v922 = vld [vmem:[%s179 + $0x15d0] sm:$0xff]
        %v923 = vld [vmem:[%s179 + $0x15d8] sm:$0xff]
        %v924 = vld [vmem:[%s179 + $0x15e0] sm:$0xff]
        %v925 = vld [vmem:[%s179 + $0x15e8] sm:$0xff]
        %v926 = vld [vmem:[%s179 + $0x15f0] sm:$0xff]
        %v927 = vld [vmem:[%s179 + $0x15f8] sm:$0xff]
        %v928 = vld [vmem:[%s179 + $0x1600] sm:$0xff]
        %v929 = vld [vmem:[%s179 + $0x1608] sm:$0xff]
        %v930 = vld [vmem:[%s179 + $0x1610] sm:$0xff]
        %v931 = vld [vmem:[%s179 + $0x1618] sm:$0xff]
        %v932 = vld [vmem:[%s179 + $0x1620] sm:$0xff]
        %v933 = vld [vmem:[%s179 + $0x1628] sm:$0xff]
        %v934 = vld [vmem:[%s179 + $0x1630] sm:$0xff]
        %v935 = vld [vmem:[%s179 + $0x1638] sm:$0xff]
        %v936 = vld [vmem:[%s179 + $0x1640] sm:$0xff]
        %v937 = vld [vmem:[%s179 + $0x1648] sm:$0xff]
        %v938 = vld [vmem:[%s179 + $0x1650] sm:$0xff]
        %v939 = vld [vmem:[%s179 + $0x1658] sm:$0xff]
        %v940 = vld [vmem:[%s179 + $0x1660] sm:$0xff]
        %v941 = vld [vmem:[%s179 + $0x1668] sm:$0xff]
        %v942 = vld [vmem:[%s179 + $0x1670] sm:$0xff]
        %v943 = vld [vmem:[%s179 + $0x1678] sm:$0xff]
        %v944 = vld [vmem:[%s179 + $0x1680] sm:$0xff]
        %v945 = vld [vmem:[%s179 + $0x1688] sm:$0xff]
        %v946 = vld [vmem:[%s179 + $0x1690] sm:$0xff]
        %v947 = vld [vmem:[%s179 + $0x1698] sm:$0xff]
        %v948 = vld [vmem:[%s179 + $0x16a0] sm:$0xff]
        %v949 = vld [vmem:[%s179 + $0x16a8] sm:$0xff]
        %v950 = vld [vmem:[%s179 + $0x16b0] sm:$0xff]
        %v951 = vld [vmem:[%s179 + $0x16b8] sm:$0xff]
        %v952 = vld [vmem:[%s179 + $0x16c0] sm:$0xff]
        %v953 = vld [vmem:[%s179 + $0x16c8] sm:$0xff]
        %v954 = vld [vmem:[%s179 + $0x16d0] sm:$0xff]
        %v955 = vld [vmem:[%s179 + $0x16d8] sm:$0xff]
        %v956 = vld [vmem:[%s179 + $0x16e0] sm:$0xff]
        %v957 = vld [vmem:[%s179 + $0x16e8] sm:$0xff]
        %v958 = vld [vmem:[%s179 + $0x16f0] sm:$0xff]
        %v959 = vld [vmem:[%s179 + $0x16f8] sm:$0xff]
        %v960 = vld [vmem:[%s179 + $0x1700] sm:$0xff]
        %v961 = vld [vmem:[%s179 + $0x1708] sm:$0xff]
        %v962 = vld [vmem:[%s179 + $0x1710] sm:$0xff]
        %v963 = vld [vmem:[%s179 + $0x1718] sm:$0xff]
        %v964 = vld [vmem:[%s179 + $0x1720] sm:$0xff]
        %v965 = vld [vmem:[%s179 + $0x1728] sm:$0xff]
        %v966 = vld [vmem:[%s179 + $0x1730] sm:$0xff]
        %v967 = vld [vmem:[%s179 + $0x1738] sm:$0xff]
        %v968 = vld [vmem:[%s179 + $0x1740] sm:$0xff]
        %v969 = vld [vmem:[%s179 + $0x1748] sm:$0xff]
        %v970 = vld [vmem:[%s179 + $0x1750] sm:$0xff]
        %v971 = vld [vmem:[%s179 + $0x1758] sm:$0xff]
        %v972 = vld [vmem:[%s179 + $0x1760] sm:$0xff]
        %v973 = vld [vmem:[%s179 + $0x1768] sm:$0xff]
        %v974 = vld [vmem:[%s179 + $0x1770] sm:$0xff]
        %v975 = vld [vmem:[%s179 + $0x1778] sm:$0xff]
        %v976 = vld [vmem:[%s179 + $0x1780] sm:$0xff]
        %v977 = vld [vmem:[%s179 + $0x1788] sm:$0xff]
        %v978 = vld [vmem:[%s179 + $0x1790] sm:$0xff]
        %v979 = vld [vmem:[%s179 + $0x1798] sm:$0xff]
        %v980 = vld [vmem:[%s179 + $0x17a0] sm:$0xff]
        %v981 = vld [vmem:[%s179 + $0x17a8] sm:$0xff]
        %v982 = vld [vmem:[%s179 + $0x17b0] sm:$0xff]
        %v983 = vld [vmem:[%s179 + $0x17b8] sm:$0xff]
        %v984 = vld [vmem:[%s179 + $0x17c0] sm:$0xff]
        %v985 = vld [vmem:[%s179 + $0x17c8] sm:$0xff]
        %v986 = vld [vmem:[%s179 + $0x17d0] sm:$0xff]
        %v987 = vld [vmem:[%s179 + $0x17d8] sm:$0xff]
        %v988 = vld [vmem:[%s179 + $0x17e0] sm:$0xff]
        %v989 = vld [vmem:[%s179 + $0x17e8] sm:$0xff]
        %v990 = vld [vmem:[%s179 + $0x17f0] sm:$0xff]
        %v991 = vld [vmem:[%s179 + $0x17f8] sm:$0xff]
        %v992 = vld [vmem:[%s179 + $0x1800] sm:$0xff]
        %v993 = vld [vmem:[%s179 + $0x1808] sm:$0xff]
        %v994 = vld [vmem:[%s179 + $0x1810] sm:$0xff]
        %v995 = vld [vmem:[%s179 + $0x1818] sm:$0xff]
        %v996 = vld [vmem:[%s179 + $0x1820] sm:$0xff]
        %v997 = vld [vmem:[%s179 + $0x1828] sm:$0xff]
        %v998 = vld [vmem:[%s179 + $0x1830] sm:$0xff]
        %v999 = vld [vmem:[%s179 + $0x1838] sm:$0xff]
        %v1000 = vld [vmem:[%s179 + $0x1840] sm:$0xff]
        %v1001 = vld [vmem:[%s179 + $0x1848] sm:$0xff]
        %v1002 = vld [vmem:[%s179 + $0x1850] sm:$0xff]
        %v1003 = vld [vmem:[%s179 + $0x1858] sm:$0xff]
        %v1004 = vld [vmem:[%s179 + $0x1860] sm:$0xff]
        %v1005 = vld [vmem:[%s179 + $0x1868] sm:$0xff]
        %v1006 = vld [vmem:[%s179 + $0x1870] sm:$0xff]
        %v1007 = vld [vmem:[%s179 + $0x1878] sm:$0xff]
        %v1008 = vld [vmem:[%s179 + $0x1880] sm:$0xff]
        %v1009 = vld [vmem:[%s179 + $0x1888] sm:$0xff]
        %v1010 = vld [vmem:[%s179 + $0x1890] sm:$0xff]
        %v1011 = vld [vmem:[%s179 + $0x1898] sm:$0xff]
        %v1012 = vld [vmem:[%s179 + $0x18a0] sm:$0xff]
        %v1013 = vld [vmem:[%s179 + $0x18a8] sm:$0xff]
        %v1014 = vld [vmem:[%s179 + $0x18b0] sm:$0xff]
        %v1015 = vld [vmem:[%s179 + $0x18b8] sm:$0xff]
        %v1016 = vld [vmem:[%s179 + $0x18c0] sm:$0xff]
        %v1017 = vld [vmem:[%s179 + $0x18c8] sm:$0xff]
        %v1018 = vld [vmem:[%s179 + $0x18d0] sm:$0xff]
        %v1019 = vld [vmem:[%s179 + $0x18d8] sm:$0xff]
        %v1020 = vld [vmem:[%s179 + $0x18e0] sm:$0xff]
        %v1021 = vld [vmem:[%s179 + $0x18e8] sm:$0xff]
        %v1022 = vld [vmem:[%s179 + $0x18f0] sm:$0xff]
        %v1023 = vld [vmem:[%s179 + $0x18f8] sm:$0xff]
        %v1024 = vld [vmem:[%s179 + $0x1900] sm:$0xff]
        %v1025 = vld [vmem:[%s179 + $0x1908] sm:$0xff]
        %v1026 = vld [vmem:[%s179 + $0x1910] sm:$0xff]
        %v1027 = vld [vmem:[%s179 + $0x1918] sm:$0xff]
        %v1028 = vld [vmem:[%s179 + $0x1920] sm:$0xff]
        %v1029 = vld [vmem:[%s179 + $0x1928] sm:$0xff]
        %v1030 = vld [vmem:[%s179 + $0x1930] sm:$0xff]
        %v1031 = vld [vmem:[%s179 + $0x1938] sm:$0xff]
        %v1032 = vld [vmem:[%s179 + $0x1940] sm:$0xff]
        %v1033 = vld [vmem:[%s179 + $0x1948] sm:$0xff]
        %v1034 = vld [vmem:[%s179 + $0x1950] sm:$0xff]
        %v1035 = vld [vmem:[%s179 + $0x1958] sm:$0xff]
        %v1036 = vld [vmem:[%s179 + $0x1960] sm:$0xff]
        %v1037 = vld [vmem:[%s179 + $0x1968] sm:$0xff]
        %v1038 = vld [vmem:[%s179 + $0x1970] sm:$0xff]
        %v1039 = vld [vmem:[%s179 + $0x1978] sm:$0xff]
        %v1040 = vld [vmem:[%s179 + $0x1980] sm:$0xff]
        %v1041 = vld [vmem:[%s179 + $0x1988] sm:$0xff]
        %v1042 = vld [vmem:[%s179 + $0x1990] sm:$0xff]
        %v1043 = vld [vmem:[%s179 + $0x1998] sm:$0xff]
        %v1044 = vld [vmem:[%s179 + $0x19a0] sm:$0xff]
        %v1045 = vld [vmem:[%s179 + $0x19a8] sm:$0xff]
        %v1046 = vld [vmem:[%s179 + $0x19b0] sm:$0xff]
        %v1047 = vld [vmem:[%s179 + $0x19b8] sm:$0xff]
        %v1048 = vld [vmem:[%s179 + $0x19c0] sm:$0xff]
        %v1049 = vld [vmem:[%s179 + $0x19c8] sm:$0xff]
        %v1050 = vld [vmem:[%s179 + $0x19d0] sm:$0xff]
        %v1051 = vld [vmem:[%s179 + $0x19d8] sm:$0xff]
        %v1052 = vld [vmem:[%s179 + $0x19e0] sm:$0xff]
        %v1053 = vld [vmem:[%s179 + $0x19e8] sm:$0xff]
        %v1054 = vld [vmem:[%s179 + $0x19f0] sm:$0xff]
        %v1055 = vld [vmem:[%s179 + $0x19f8] sm:$0xff]
        %v1056 = vld [vmem:[%s179 + $0x1a00] sm:$0xff]
        %v1057 = vld [vmem:[%s179 + $0x1a08] sm:$0xff]
        %v1058 = vld [vmem:[%s179 + $0x1a10] sm:$0xff]
        %v1059 = vld [vmem:[%s179 + $0x1a18] sm:$0xff]
        %v1060 = vld [vmem:[%s179 + $0x1a20] sm:$0xff]
        %v1061 = vld [vmem:[%s179 + $0x1a28] sm:$0xff]
        %v1062 = vld [vmem:[%s179 + $0x1a30] sm:$0xff]
        %v1063 = vld [vmem:[%s179 + $0x1a38] sm:$0xff]
        %v1064 = vld [vmem:[%s179 + $0x1a40] sm:$0xff]
        %v1065 = vld [vmem:[%s179 + $0x1a48] sm:$0xff]
        %v1066 = vld [vmem:[%s179 + $0x1a50] sm:$0xff]
        %v1067 = vld [vmem:[%s179 + $0x1a58] sm:$0xff]
        %v1068 = vld [vmem:[%s179 + $0x1a60] sm:$0xff]
        %v1069 = vld [vmem:[%s179 + $0x1a68] sm:$0xff]
        %v1070 = vld [vmem:[%s179 + $0x1a70] sm:$0xff]
        %v1071 = vld [vmem:[%s179 + $0x1a78] sm:$0xff]
        %v1072 = vld [vmem:[%s179 + $0x1a80] sm:$0xff]
        %v1073 = vld [vmem:[%s179 + $0x1a88] sm:$0xff]
        %v1074 = vld [vmem:[%s179 + $0x1a90] sm:$0xff]
        %v1075 = vld [vmem:[%s179 + $0x1a98] sm:$0xff]
        %v1076 = vld [vmem:[%s179 + $0x1aa0] sm:$0xff]
        %v1077 = vld [vmem:[%s179 + $0x1aa8] sm:$0xff]
        %v1078 = vld [vmem:[%s179 + $0x1ab0] sm:$0xff]
        %v1079 = vld [vmem:[%s179 + $0x1ab8] sm:$0xff]
        %v1080 = vld [vmem:[%s179 + $0x1ac0] sm:$0xff]
        %v1081 = vld [vmem:[%s179 + $0x1ac8] sm:$0xff]
        %v1082 = vld [vmem:[%s179 + $0x1ad0] sm:$0xff]
        %v1083 = vld [vmem:[%s179 + $0x1ad8] sm:$0xff]
        %v1084 = vld [vmem:[%s179 + $0x1ae0] sm:$0xff]
        %v1085 = vld [vmem:[%s179 + $0x1ae8] sm:$0xff]
        %v1086 = vld [vmem:[%s179 + $0x1af0] sm:$0xff]
        %v1087 = vld [vmem:[%s179 + $0x1af8] sm:$0xff]
        %v1088 = vld [vmem:[%s179 + $0x1b00] sm:$0xff]
        %v1089 = vld [vmem:[%s179 + $0x1b08] sm:$0xff]
        %v1090 = vld [vmem:[%s179 + $0x1b10] sm:$0xff]
        %v1091 = vld [vmem:[%s179 + $0x1b18] sm:$0xff]
        %v1092 = vld [vmem:[%s179 + $0x1b20] sm:$0xff]
        %v1093 = vld [vmem:[%s179 + $0x1b28] sm:$0xff]
        %v1094 = vld [vmem:[%s179 + $0x1b30] sm:$0xff]
        %v1095 = vld [vmem:[%s179 + $0x1b38] sm:$0xff]
        %v1096 = vld [vmem:[%s179 + $0x1b40] sm:$0xff]
        %v1097 = vld [vmem:[%s179 + $0x1b48] sm:$0xff]
        %v1098 = vld [vmem:[%s179 + $0x1b50] sm:$0xff]
        %v1099 = vld [vmem:[%s179 + $0x1b58] sm:$0xff]
        %v1100 = vld [vmem:[%s179 + $0x1b60] sm:$0xff]
        %v1101 = vld [vmem:[%s179 + $0x1b68] sm:$0xff]
        %v1102 = vld [vmem:[%s179 + $0x1b70] sm:$0xff]
        %v1103 = vld [vmem:[%s179 + $0x1b78] sm:$0xff]
        %v1104 = vld [vmem:[%s179 + $0x1b80] sm:$0xff]
        %v1105 = vld [vmem:[%s179 + $0x1b88] sm:$0xff]
        %v1106 = vld [vmem:[%s179 + $0x1b90] sm:$0xff]
        %v1107 = vld [vmem:[%s179 + $0x1b98] sm:$0xff]
        %v1108 = vld [vmem:[%s179 + $0x1ba0] sm:$0xff]
        %v1109 = vld [vmem:[%s179 + $0x1ba8] sm:$0xff]
        %v1110 = vld [vmem:[%s179 + $0x1bb0] sm:$0xff]
        %v1111 = vld [vmem:[%s179 + $0x1bb8] sm:$0xff]
        %v1112 = vld [vmem:[%s179 + $0x1bc0] sm:$0xff]
        %v1113 = vld [vmem:[%s179 + $0x1bc8] sm:$0xff]
        %v1114 = vld [vmem:[%s179 + $0x1bd0] sm:$0xff]
        %v1115 = vld [vmem:[%s179 + $0x1bd8] sm:$0xff]
        %v1116 = vld [vmem:[%s179 + $0x1be0] sm:$0xff]
        %v1117 = vld [vmem:[%s179 + $0x1be8] sm:$0xff]
        %v1118 = vld [vmem:[%s179 + $0x1bf0] sm:$0xff]
        %v1119 = vld [vmem:[%s179 + $0x1bf8] sm:$0xff]
        %v1120 = vld [vmem:[%s179 + $0x1c00] sm:$0xff]
        %v1121 = vld [vmem:[%s179 + $0x1c08] sm:$0xff]
        %v1122 = vld [vmem:[%s179 + $0x1c10] sm:$0xff]
        %v1123 = vld [vmem:[%s179 + $0x1c18] sm:$0xff]
        %v1124 = vld [vmem:[%s179 + $0x1c20] sm:$0xff]
        %v1125 = vld [vmem:[%s179 + $0x1c28] sm:$0xff]
        %v1126 = vld [vmem:[%s179 + $0x1c30] sm:$0xff]
        %v1127 = vld [vmem:[%s179 + $0x1c38] sm:$0xff]
        %v1128 = vld [vmem:[%s179 + $0x1c40] sm:$0xff]
        %v1129 = vld [vmem:[%s179 + $0x1c48] sm:$0xff]
        %v1130 = vld [vmem:[%s179 + $0x1c50] sm:$0xff]
        %v1131 = vld [vmem:[%s179 + $0x1c58] sm:$0xff]
        %v1132 = vld [vmem:[%s179 + $0x1c60] sm:$0xff]
        %v1133 = vld [vmem:[%s179 + $0x1c68] sm:$0xff]
        %v1134 = vld [vmem:[%s179 + $0x1c70] sm:$0xff]
        %v1135 = vld [vmem:[%s179 + $0x1c78] sm:$0xff]
        %v1136 = vld [vmem:[%s179 + $0x1c80] sm:$0xff]
        %v1137 = vld [vmem:[%s179 + $0x1c88] sm:$0xff]
        %v1138 = vld [vmem:[%s179 + $0x1c90] sm:$0xff]
        %v1139 = vld [vmem:[%s179 + $0x1c98] sm:$0xff]
        %v1140 = vld [vmem:[%s179 + $0x1ca0] sm:$0xff]
        %v1141 = vld [vmem:[%s179 + $0x1ca8] sm:$0xff]
        %v1142 = vld [vmem:[%s179 + $0x1cb0] sm:$0xff]
        %v1143 = vld [vmem:[%s179 + $0x1cb8] sm:$0xff]
        %v1144 = vld [vmem:[%s179 + $0x1cc0] sm:$0xff]
        %v1145 = vld [vmem:[%s179 + $0x1cc8] sm:$0xff]
        %v1146 = vld [vmem:[%s179 + $0x1cd0] sm:$0xff]
        %v1147 = vld [vmem:[%s179 + $0x1cd8] sm:$0xff]
        %v1148 = vld [vmem:[%s179 + $0x1ce0] sm:$0xff]
        %v1149 = vld [vmem:[%s179 + $0x1ce8] sm:$0xff]
        %v1150 = vld [vmem:[%s179 + $0x1cf0] sm:$0xff]
        %v1151 = vld [vmem:[%s179 + $0x1cf8] sm:$0xff]
        %v1152 = vld [vmem:[%s179 + $0x1d00] sm:$0xff]
        %v1153 = vld [vmem:[%s179 + $0x1d08] sm:$0xff]
        %v1154 = vld [vmem:[%s179 + $0x1d10] sm:$0xff]
        %v1155 = vld [vmem:[%s179 + $0x1d18] sm:$0xff]
        %v1156 = vld [vmem:[%s179 + $0x1d20] sm:$0xff]
        %v1157 = vld [vmem:[%s179 + $0x1d28] sm:$0xff]
        %v1158 = vld [vmem:[%s179 + $0x1d30] sm:$0xff]
        %v1159 = vld [vmem:[%s179 + $0x1d38] sm:$0xff]
        %v1160 = vld [vmem:[%s179 + $0x1d40] sm:$0xff]
        %v1161 = vld [vmem:[%s179 + $0x1d48] sm:$0xff]
        %v1162 = vld [vmem:[%s179 + $0x1d50] sm:$0xff]
        %v1163 = vld [vmem:[%s179 + $0x1d58] sm:$0xff]
        %v1164 = vld [vmem:[%s179 + $0x1d60] sm:$0xff]
        %v1165 = vld [vmem:[%s179 + $0x1d68] sm:$0xff]
        %v1166 = vld [vmem:[%s179 + $0x1d70] sm:$0xff]
        %v1167 = vld [vmem:[%s179 + $0x1d78] sm:$0xff]
        %v1168 = vld [vmem:[%s179 + $0x1d80] sm:$0xff]
        %v1169 = vld [vmem:[%s179 + $0x1d88] sm:$0xff]
        %v1170 = vld [vmem:[%s179 + $0x1d90] sm:$0xff]
        %v1171 = vld [vmem:[%s179 + $0x1d98] sm:$0xff]
        %v1172 = vld [vmem:[%s179 + $0x1da0] sm:$0xff]
        %v1173 = vld [vmem:[%s179 + $0x1da8] sm:$0xff]
        %v1174 = vld [vmem:[%s179 + $0x1db0] sm:$0xff]
        %v1175 = vld [vmem:[%s179 + $0x1db8] sm:$0xff]
        %v1176 = vld [vmem:[%s179 + $0x1dc0] sm:$0xff]
        %v1177 = vld [vmem:[%s179 + $0x1dc8] sm:$0xff]
        %v1178 = vld [vmem:[%s179 + $0x1dd0] sm:$0xff]
        %v1179 = vld [vmem:[%s179 + $0x1dd8] sm:$0xff]
        %v1180 = vld [vmem:[%s179 + $0x1de0] sm:$0xff]
        %v1181 = vld [vmem:[%s179 + $0x1de8] sm:$0xff]
        %v1182 = vld [vmem:[%s179 + $0x1df0] sm:$0xff]
        %v1183 = vld [vmem:[%s179 + $0x1df8] sm:$0xff]
        %v1184 = vld [vmem:[%s179 + $0x1e00] sm:$0xff]
        %v1185 = vld [vmem:[%s179 + $0x1e08] sm:$0xff]
        %v1186 = vld [vmem:[%s179 + $0x1e10] sm:$0xff]
        %v1187 = vld [vmem:[%s179 + $0x1e18] sm:$0xff]
        %v1188 = vld [vmem:[%s179 + $0x1e20] sm:$0xff]
        %v1189 = vld [vmem:[%s179 + $0x1e28] sm:$0xff]
        %v1190 = vld [vmem:[%s179 + $0x1e30] sm:$0xff]
        %v1191 = vld [vmem:[%s179 + $0x1e38] sm:$0xff]
        %v1192 = vld [vmem:[%s179 + $0x1e40] sm:$0xff]
        %v1193 = vld [vmem:[%s179 + $0x1e48] sm:$0xff]
        %v1194 = vld [vmem:[%s179 + $0x1e50] sm:$0xff]
        %v1195 = vld [vmem:[%s179 + $0x1e58] sm:$0xff]
        %v1196 = vld [vmem:[%s179 + $0x1e60] sm:$0xff]
        %v1197 = vld [vmem:[%s179 + $0x1e68] sm:$0xff]
        %v1198 = vld [vmem:[%s179 + $0x1e70] sm:$0xff]
        %v1199 = vld [vmem:[%s179 + $0x1e78] sm:$0xff]
        %v1200 = vld [vmem:[%s179 + $0x1e80] sm:$0xff]
        %v1201 = vld [vmem:[%s179 + $0x1e88] sm:$0xff]
        %v1202 = vld [vmem:[%s179 + $0x1e90] sm:$0xff]
        %v1203 = vld [vmem:[%s179 + $0x1e98] sm:$0xff]
        %v1204 = vld [vmem:[%s179 + $0x1ea0] sm:$0xff]
        %v1205 = vld [vmem:[%s179 + $0x1ea8] sm:$0xff]
        %v1206 = vld [vmem:[%s179 + $0x1eb0] sm:$0xff]
        %v1207 = vld [vmem:[%s179 + $0x1eb8] sm:$0xff]
        %v1208 = vld [vmem:[%s179 + $0x1ec0] sm:$0xff]
        %v1209 = vld [vmem:[%s179 + $0x1ec8] sm:$0xff]
        %v1210 = vld [vmem:[%s179 + $0x1ed0] sm:$0xff]
        %v1211 = vld [vmem:[%s179 + $0x1ed8] sm:$0xff]
        %v1212 = vld [vmem:[%s179 + $0x1ee0] sm:$0xff]
        %v1213 = vld [vmem:[%s179 + $0x1ee8] sm:$0xff]
        %v1214 = vld [vmem:[%s179 + $0x1ef0] sm:$0xff]
        %v1215 = vld [vmem:[%s179 + $0x1ef8] sm:$0xff]
        %v1216 = vld [vmem:[%s179 + $0x1f00] sm:$0xff]
        %v1217 = vld [vmem:[%s179 + $0x1f08] sm:$0xff]
        %v1218 = vld [vmem:[%s179 + $0x1f10] sm:$0xff]
        %v1219 = vld [vmem:[%s179 + $0x1f18] sm:$0xff]
        %v1220 = vld [vmem:[%s179 + $0x1f20] sm:$0xff]
        %v1221 = vld [vmem:[%s179 + $0x1f28] sm:$0xff]
        %v1222 = vld [vmem:[%s179 + $0x1f30] sm:$0xff]
        %v1223 = vld [vmem:[%s179 + $0x1f38] sm:$0xff]
        %v1224 = vld [vmem:[%s179 + $0x1f40] sm:$0xff]
        %v1225 = vld [vmem:[%s179 + $0x1f48] sm:$0xff]
        %v1226 = vld [vmem:[%s179 + $0x1f50] sm:$0xff]
        %v1227 = vld [vmem:[%s179 + $0x1f58] sm:$0xff]
        %v1228 = vld [vmem:[%s179 + $0x1f60] sm:$0xff]
        %v1229 = vld [vmem:[%s179 + $0x1f68] sm:$0xff]
        %v1230 = vld [vmem:[%s179 + $0x1f70] sm:$0xff]
        %v1231 = vld [vmem:[%s179 + $0x1f78] sm:$0xff]
        %v1232 = vld [vmem:[%s179 + $0x1f80] sm:$0xff]
        %v1233 = vld [vmem:[%s179 + $0x1f88] sm:$0xff]
        %v1234 = vld [vmem:[%s179 + $0x1f90] sm:$0xff]
        %v1235 = vld [vmem:[%s179 + $0x1f98] sm:$0xff]
        %v1236 = vld [vmem:[%s179 + $0x1fa0] sm:$0xff]
        %v1237 = vld [vmem:[%s179 + $0x1fa8] sm:$0xff]
        %v1238 = vld [vmem:[%s179 + $0x1fb0] sm:$0xff]
        %v1239 = vld [vmem:[%s179 + $0x1fb8] sm:$0xff]
        %v1240 = vld [vmem:[%s179 + $0x1fc0] sm:$0xff]
        %v1241 = vld [vmem:[%s179 + $0x1fc8] sm:$0xff]
        %v1242 = vld [vmem:[%s179 + $0x1fd0] sm:$0xff]
        %v1243 = vld [vmem:[%s179 + $0x1fd8] sm:$0xff]
        %v1244 = vld [vmem:[%s179 + $0x1fe0] sm:$0xff]
        %v1245 = vld [vmem:[%s179 + $0x1fe8] sm:$0xff]
        %v1246 = vld [vmem:[%s179 + $0x1ff0] sm:$0xff]
        %v1247 = vld [vmem:[%s179 + $0x1ff8] sm:$0xff]
        %v1248 = vld [vmem:[%s188] sm:$0xff]
        %v1249 = vld [vmem:[%s188 + $0x8] sm:$0xff]
        %v1250 = vld [vmem:[%s188 + $0x10] sm:$0xff]
        %v1251 = vld [vmem:[%s188 + $0x18] sm:$0xff]
        %v1252 = vld [vmem:[%s188 + $0x20] sm:$0xff]
        %v1253 = vld [vmem:[%s188 + $0x28] sm:$0xff]
        %v1254 = vld [vmem:[%s188 + $0x30] sm:$0xff]
        %v1255 = vld [vmem:[%s188 + $0x38] sm:$0xff]
        %v1256 = vld [vmem:[%s188 + $0x40] sm:$0xff]
        %v1257 = vld [vmem:[%s188 + $0x48] sm:$0xff]
        %v1258 = vld [vmem:[%s188 + $0x50] sm:$0xff]
        %v1259 = vld [vmem:[%s188 + $0x58] sm:$0xff]
        %v1260 = vld [vmem:[%s188 + $0x60] sm:$0xff]
        %v1261 = vld [vmem:[%s188 + $0x68] sm:$0xff]
        %v1262 = vld [vmem:[%s188 + $0x70] sm:$0xff]
        %v1263 = vld [vmem:[%s188 + $0x78] sm:$0xff]
        %v1264 = vld [vmem:[%s188 + $0x80] sm:$0xff]
        %v1265 = vld [vmem:[%s188 + $0x88] sm:$0xff]
        %v1266 = vld [vmem:[%s188 + $0x90] sm:$0xff]
        %v1267 = vld [vmem:[%s188 + $0x98] sm:$0xff]
        %v1268 = vld [vmem:[%s188 + $0xa0] sm:$0xff]
        %v1269 = vld [vmem:[%s188 + $0xa8] sm:$0xff]
        %v1270 = vld [vmem:[%s188 + $0xb0] sm:$0xff]
        %v1271 = vld [vmem:[%s188 + $0xb8] sm:$0xff]
        %v1272 = vld [vmem:[%s188 + $0xc0] sm:$0xff]
        %v1273 = vld [vmem:[%s188 + $0xc8] sm:$0xff]
        %v1274 = vld [vmem:[%s188 + $0xd0] sm:$0xff]
        %v1275 = vld [vmem:[%s188 + $0xd8] sm:$0xff]
        %v1276 = vld [vmem:[%s188 + $0xe0] sm:$0xff]
        %v1277 = vld [vmem:[%s188 + $0xe8] sm:$0xff]
        %v1278 = vld [vmem:[%s188 + $0xf0] sm:$0xff]
        %v1279 = vld [vmem:[%s188 + $0xf8] sm:$0xff]
        %v1280 = vld [vmem:[%s188 + $0x100] sm:$0xff]
        %v1281 = vld [vmem:[%s188 + $0x108] sm:$0xff]
        %v1282 = vld [vmem:[%s188 + $0x110] sm:$0xff]
        %v1283 = vld [vmem:[%s188 + $0x118] sm:$0xff]
        %v1284 = vld [vmem:[%s188 + $0x120] sm:$0xff]
        %v1285 = vld [vmem:[%s188 + $0x128] sm:$0xff]
        %v1286 = vld [vmem:[%s188 + $0x130] sm:$0xff]
        %v1287 = vld [vmem:[%s188 + $0x138] sm:$0xff]
        %v1288 = vld [vmem:[%s188 + $0x140] sm:$0xff]
        %v1289 = vld [vmem:[%s188 + $0x148] sm:$0xff]
        %v1290 = vld [vmem:[%s188 + $0x150] sm:$0xff]
        %v1291 = vld [vmem:[%s188 + $0x158] sm:$0xff]
        %v1292 = vld [vmem:[%s188 + $0x160] sm:$0xff]
        %v1293 = vld [vmem:[%s188 + $0x168] sm:$0xff]
        %v1294 = vld [vmem:[%s188 + $0x170] sm:$0xff]
        %v1295 = vld [vmem:[%s188 + $0x178] sm:$0xff]
        %v1296 = vld [vmem:[%s188 + $0x180] sm:$0xff]
        %v1297 = vld [vmem:[%s188 + $0x188] sm:$0xff]
        %v1298 = vld [vmem:[%s188 + $0x190] sm:$0xff]
        %v1299 = vld [vmem:[%s188 + $0x198] sm:$0xff]
        %v1300 = vld [vmem:[%s188 + $0x1a0] sm:$0xff]
        %v1301 = vld [vmem:[%s188 + $0x1a8] sm:$0xff]
        %v1302 = vld [vmem:[%s188 + $0x1b0] sm:$0xff]
        %v1303 = vld [vmem:[%s188 + $0x1b8] sm:$0xff]
        %v1304 = vld [vmem:[%s188 + $0x1c0] sm:$0xff]
        %v1305 = vld [vmem:[%s188 + $0x1c8] sm:$0xff]
        %v1306 = vld [vmem:[%s188 + $0x1d0] sm:$0xff]
        %v1307 = vld [vmem:[%s188 + $0x1d8] sm:$0xff]
        %v1308 = vld [vmem:[%s188 + $0x1e0] sm:$0xff]
        %v1309 = vld [vmem:[%s188 + $0x1e8] sm:$0xff]
        %v1310 = vld [vmem:[%s188 + $0x1f0] sm:$0xff]
        %v1311 = vld [vmem:[%s188 + $0x1f8] sm:$0xff]
        %v1312 = vld [vmem:[%s188 + $0x200] sm:$0xff]
        %v1313 = vld [vmem:[%s188 + $0x208] sm:$0xff]
        %v1314 = vld [vmem:[%s188 + $0x210] sm:$0xff]
        %v1315 = vld [vmem:[%s188 + $0x218] sm:$0xff]
        %v1316 = vld [vmem:[%s188 + $0x220] sm:$0xff]
        %v1317 = vld [vmem:[%s188 + $0x228] sm:$0xff]
        %v1318 = vld [vmem:[%s188 + $0x230] sm:$0xff]
        %v1319 = vld [vmem:[%s188 + $0x238] sm:$0xff]
        %v1320 = vld [vmem:[%s188 + $0x240] sm:$0xff]
        %v1321 = vld [vmem:[%s188 + $0x248] sm:$0xff]
        %v1322 = vld [vmem:[%s188 + $0x250] sm:$0xff]
        %v1323 = vld [vmem:[%s188 + $0x258] sm:$0xff]
        %v1324 = vld [vmem:[%s188 + $0x260] sm:$0xff]
        %v1325 = vld [vmem:[%s188 + $0x268] sm:$0xff]
        %v1326 = vld [vmem:[%s188 + $0x270] sm:$0xff]
        %v1327 = vld [vmem:[%s188 + $0x278] sm:$0xff]
        %v1328 = vld [vmem:[%s188 + $0x280] sm:$0xff]
        %v1329 = vld [vmem:[%s188 + $0x288] sm:$0xff]
        %v1330 = vld [vmem:[%s188 + $0x290] sm:$0xff]
        %v1331 = vld [vmem:[%s188 + $0x298] sm:$0xff]
        %v1332 = vld [vmem:[%s188 + $0x2a0] sm:$0xff]
        %v1333 = vld [vmem:[%s188 + $0x2a8] sm:$0xff]
        %v1334 = vld [vmem:[%s188 + $0x2b0] sm:$0xff]
        %v1335 = vld [vmem:[%s188 + $0x2b8] sm:$0xff]
        %v1336 = vld [vmem:[%s188 + $0x2c0] sm:$0xff]
        %v1337 = vld [vmem:[%s188 + $0x2c8] sm:$0xff]
        %v1338 = vld [vmem:[%s188 + $0x2d0] sm:$0xff]
        %v1339 = vld [vmem:[%s188 + $0x2d8] sm:$0xff]
        %v1340 = vld [vmem:[%s188 + $0x2e0] sm:$0xff]
        %v1341 = vld [vmem:[%s188 + $0x2e8] sm:$0xff]
        %v1342 = vld [vmem:[%s188 + $0x2f0] sm:$0xff]
        %v1343 = vld [vmem:[%s188 + $0x2f8] sm:$0xff]
        %v1344 = vld [vmem:[%s188 + $0x300] sm:$0xff]
        %v1345 = vld [vmem:[%s188 + $0x308] sm:$0xff]
        %v1346 = vld [vmem:[%s188 + $0x310] sm:$0xff]
        %v1347 = vld [vmem:[%s188 + $0x318] sm:$0xff]
        %v1348 = vld [vmem:[%s188 + $0x320] sm:$0xff]
        %v1349 = vld [vmem:[%s188 + $0x328] sm:$0xff]
        %v1350 = vld [vmem:[%s188 + $0x330] sm:$0xff]
        %v1351 = vld [vmem:[%s188 + $0x338] sm:$0xff]
        %v1352 = vld [vmem:[%s188 + $0x340] sm:$0xff]
        %v1353 = vld [vmem:[%s188 + $0x348] sm:$0xff]
        %v1354 = vld [vmem:[%s188 + $0x350] sm:$0xff]
        %v1355 = vld [vmem:[%s188 + $0x358] sm:$0xff]
        %v1356 = vld [vmem:[%s188 + $0x360] sm:$0xff]
        %v1357 = vld [vmem:[%s188 + $0x368] sm:$0xff]
        %v1358 = vld [vmem:[%s188 + $0x370] sm:$0xff]
        %v1359 = vld [vmem:[%s188 + $0x378] sm:$0xff]
        %v1360 = vld [vmem:[%s188 + $0x380] sm:$0xff]
        %v1361 = vld [vmem:[%s188 + $0x388] sm:$0xff]
        %v1362 = vld [vmem:[%s188 + $0x390] sm:$0xff]
        %v1363 = vld [vmem:[%s188 + $0x398] sm:$0xff]
        %v1364 = vld [vmem:[%s188 + $0x3a0] sm:$0xff]
        %v1365 = vld [vmem:[%s188 + $0x3a8] sm:$0xff]
        %v1366 = vld [vmem:[%s188 + $0x3b0] sm:$0xff]
        %v1367 = vld [vmem:[%s188 + $0x3b8] sm:$0xff]
        %v1368 = vld [vmem:[%s188 + $0x3c0] sm:$0xff]
        %v1369 = vld [vmem:[%s188 + $0x3c8] sm:$0xff]
        %v1370 = vld [vmem:[%s188 + $0x3d0] sm:$0xff]
        %v1371 = vld [vmem:[%s188 + $0x3d8] sm:$0xff]
        %v1372 = vld [vmem:[%s188 + $0x3e0] sm:$0xff]
        %v1373 = vld [vmem:[%s188 + $0x3e8] sm:$0xff]
        %v1374 = vld [vmem:[%s188 + $0x3f0] sm:$0xff]
        %v1375 = vld [vmem:[%s188 + $0x3f8] sm:$0xff]
        %v1376 = vld [vmem:[%s188 + $0x400] sm:$0xff]
        %v1377 = vld [vmem:[%s188 + $0x408] sm:$0xff]
        %v1378 = vld [vmem:[%s188 + $0x410] sm:$0xff]
        %v1379 = vld [vmem:[%s188 + $0x418] sm:$0xff]
        %v1380 = vld [vmem:[%s188 + $0x420] sm:$0xff]
        %v1381 = vld [vmem:[%s188 + $0x428] sm:$0xff]
        %v1382 = vld [vmem:[%s188 + $0x430] sm:$0xff]
        %v1383 = vld [vmem:[%s188 + $0x438] sm:$0xff]
        %v1384 = vld [vmem:[%s188 + $0x440] sm:$0xff]
        %v1385 = vld [vmem:[%s188 + $0x448] sm:$0xff]
        %v1386 = vld [vmem:[%s188 + $0x450] sm:$0xff]
        %v1387 = vld [vmem:[%s188 + $0x458] sm:$0xff]
        %v1388 = vld [vmem:[%s188 + $0x460] sm:$0xff]
        %v1389 = vld [vmem:[%s188 + $0x468] sm:$0xff]
        %v1390 = vld [vmem:[%s188 + $0x470] sm:$0xff]
        %v1391 = vld [vmem:[%s188 + $0x478] sm:$0xff]
        %v1392 = vld [vmem:[%s188 + $0x480] sm:$0xff]
        %v1393 = vld [vmem:[%s188 + $0x488] sm:$0xff]
        %v1394 = vld [vmem:[%s188 + $0x490] sm:$0xff]
        %v1395 = vld [vmem:[%s188 + $0x498] sm:$0xff]
        %v1396 = vld [vmem:[%s188 + $0x4a0] sm:$0xff]
        %v1397 = vld [vmem:[%s188 + $0x4a8] sm:$0xff]
        %v1398 = vld [vmem:[%s188 + $0x4b0] sm:$0xff]
        %v1399 = vld [vmem:[%s188 + $0x4b8] sm:$0xff]
        %v1400 = vld [vmem:[%s188 + $0x4c0] sm:$0xff]
        %v1401 = vld [vmem:[%s188 + $0x4c8] sm:$0xff]
        %v1402 = vld [vmem:[%s188 + $0x4d0] sm:$0xff]
        %v1403 = vld [vmem:[%s188 + $0x4d8] sm:$0xff]
        %v1404 = vld [vmem:[%s188 + $0x4e0] sm:$0xff]
        %v1405 = vld [vmem:[%s188 + $0x4e8] sm:$0xff]
        %v1406 = vld [vmem:[%s188 + $0x4f0] sm:$0xff]
        %v1407 = vld [vmem:[%s188 + $0x4f8] sm:$0xff]
        %v1408 = vld [vmem:[%s188 + $0x500] sm:$0xff]
        %v1409 = vld [vmem:[%s188 + $0x508] sm:$0xff]
        %v1410 = vld [vmem:[%s188 + $0x510] sm:$0xff]
        %v1411 = vld [vmem:[%s188 + $0x518] sm:$0xff]
        %v1412 = vld [vmem:[%s188 + $0x520] sm:$0xff]
        %v1413 = vld [vmem:[%s188 + $0x528] sm:$0xff]
        %v1414 = vld [vmem:[%s188 + $0x530] sm:$0xff]
        %v1415 = vld [vmem:[%s188 + $0x538] sm:$0xff]
        %v1416 = vld [vmem:[%s188 + $0x540] sm:$0xff]
        %v1417 = vld [vmem:[%s188 + $0x548] sm:$0xff]
        %v1418 = vld [vmem:[%s188 + $0x550] sm:$0xff]
        %v1419 = vld [vmem:[%s188 + $0x558] sm:$0xff]
        %v1420 = vld [vmem:[%s188 + $0x560] sm:$0xff]
        %v1421 = vld [vmem:[%s188 + $0x568] sm:$0xff]
        %v1422 = vld [vmem:[%s188 + $0x570] sm:$0xff]
        %v1423 = vld [vmem:[%s188 + $0x578] sm:$0xff]
        %v1424 = vld [vmem:[%s188 + $0x580] sm:$0xff]
        %v1425 = vld [vmem:[%s188 + $0x588] sm:$0xff]
        %v1426 = vld [vmem:[%s188 + $0x590] sm:$0xff]
        %v1427 = vld [vmem:[%s188 + $0x598] sm:$0xff]
        %v1428 = vld [vmem:[%s188 + $0x5a0] sm:$0xff]
        %v1429 = vld [vmem:[%s188 + $0x5a8] sm:$0xff]
        %v1430 = vld [vmem:[%s188 + $0x5b0] sm:$0xff]
        %v1431 = vld [vmem:[%s188 + $0x5b8] sm:$0xff]
        %v1432 = vld [vmem:[%s188 + $0x5c0] sm:$0xff]
        %v1433 = vld [vmem:[%s188 + $0x5c8] sm:$0xff]
        %v1434 = vld [vmem:[%s188 + $0x5d0] sm:$0xff]
        %v1435 = vld [vmem:[%s188 + $0x5d8] sm:$0xff]
        %v1436 = vld [vmem:[%s188 + $0x5e0] sm:$0xff]
        %v1437 = vld [vmem:[%s188 + $0x5e8] sm:$0xff]
        %v1438 = vld [vmem:[%s188 + $0x5f0] sm:$0xff]
        %v1439 = vld [vmem:[%s188 + $0x5f8] sm:$0xff]
        %v1440 = vld [vmem:[%s188 + $0x600] sm:$0xff]
        %v1441 = vld [vmem:[%s188 + $0x608] sm:$0xff]
        %v1442 = vld [vmem:[%s188 + $0x610] sm:$0xff]
        %v1443 = vld [vmem:[%s188 + $0x618] sm:$0xff]
        %v1444 = vld [vmem:[%s188 + $0x620] sm:$0xff]
        %v1445 = vld [vmem:[%s188 + $0x628] sm:$0xff]
        %v1446 = vld [vmem:[%s188 + $0x630] sm:$0xff]
        %v1447 = vld [vmem:[%s188 + $0x638] sm:$0xff]
        %v1448 = vld [vmem:[%s188 + $0x640] sm:$0xff]
        %v1449 = vld [vmem:[%s188 + $0x648] sm:$0xff]
        %v1450 = vld [vmem:[%s188 + $0x650] sm:$0xff]
        %v1451 = vld [vmem:[%s188 + $0x658] sm:$0xff]
        %v1452 = vld [vmem:[%s188 + $0x660] sm:$0xff]
        %v1453 = vld [vmem:[%s188 + $0x668] sm:$0xff]
        %v1454 = vld [vmem:[%s188 + $0x670] sm:$0xff]
        %v1455 = vld [vmem:[%s188 + $0x678] sm:$0xff]
        %v1456 = vld [vmem:[%s188 + $0x680] sm:$0xff]
        %v1457 = vld [vmem:[%s188 + $0x688] sm:$0xff]
        %v1458 = vld [vmem:[%s188 + $0x690] sm:$0xff]
        %v1459 = vld [vmem:[%s188 + $0x698] sm:$0xff]
        %v1460 = vld [vmem:[%s188 + $0x6a0] sm:$0xff]
        %v1461 = vld [vmem:[%s188 + $0x6a8] sm:$0xff]
        %v1462 = vld [vmem:[%s188 + $0x6b0] sm:$0xff]
        %v1463 = vld [vmem:[%s188 + $0x6b8] sm:$0xff]
        %v1464 = vld [vmem:[%s188 + $0x6c0] sm:$0xff]
        %v1465 = vld [vmem:[%s188 + $0x6c8] sm:$0xff]
        %v1466 = vld [vmem:[%s188 + $0x6d0] sm:$0xff]
        %v1467 = vld [vmem:[%s188 + $0x6d8] sm:$0xff]
        %v1468 = vld [vmem:[%s188 + $0x6e0] sm:$0xff]
        %v1469 = vld [vmem:[%s188 + $0x6e8] sm:$0xff]
        %v1470 = vld [vmem:[%s188 + $0x6f0] sm:$0xff]
        %v1471 = vld [vmem:[%s188 + $0x6f8] sm:$0xff]
        %v1472 = vld [vmem:[%s188 + $0x700] sm:$0xff]
        %v1473 = vld [vmem:[%s188 + $0x708] sm:$0xff]
        %v1474 = vld [vmem:[%s188 + $0x710] sm:$0xff]
        %v1475 = vld [vmem:[%s188 + $0x718] sm:$0xff]
        %v1476 = vld [vmem:[%s188 + $0x720] sm:$0xff]
        %v1477 = vld [vmem:[%s188 + $0x728] sm:$0xff]
        %v1478 = vld [vmem:[%s188 + $0x730] sm:$0xff]
        %v1479 = vld [vmem:[%s188 + $0x738] sm:$0xff]
        %v1480 = vld [vmem:[%s188 + $0x740] sm:$0xff]
        %v1481 = vld [vmem:[%s188 + $0x748] sm:$0xff]
        %v1482 = vld [vmem:[%s188 + $0x750] sm:$0xff]
        %v1483 = vld [vmem:[%s188 + $0x758] sm:$0xff]
        %v1484 = vld [vmem:[%s188 + $0x760] sm:$0xff]
        %v1485 = vld [vmem:[%s188 + $0x768] sm:$0xff]
        %v1486 = vld [vmem:[%s188 + $0x770] sm:$0xff]
        %v1487 = vld [vmem:[%s188 + $0x778] sm:$0xff]
        %v1488 = vld [vmem:[%s188 + $0x780] sm:$0xff]
        %v1489 = vld [vmem:[%s188 + $0x788] sm:$0xff]
        %v1490 = vld [vmem:[%s188 + $0x790] sm:$0xff]
        %v1491 = vld [vmem:[%s188 + $0x798] sm:$0xff]
        %v1492 = vld [vmem:[%s188 + $0x7a0] sm:$0xff]
        %v1493 = vld [vmem:[%s188 + $0x7a8] sm:$0xff]
        %v1494 = vld [vmem:[%s188 + $0x7b0] sm:$0xff]
        %v1495 = vld [vmem:[%s188 + $0x7b8] sm:$0xff]
        %v1496 = vld [vmem:[%s188 + $0x7c0] sm:$0xff]
        %v1497 = vld [vmem:[%s188 + $0x7c8] sm:$0xff]
        %v1498 = vld [vmem:[%s188 + $0x7d0] sm:$0xff]
        %v1499 = vld [vmem:[%s188 + $0x7d8] sm:$0xff]
        %v1500 = vld [vmem:[%s188 + $0x7e0] sm:$0xff]
        %v1501 = vld [vmem:[%s188 + $0x7e8] sm:$0xff]
        %v1502 = vld [vmem:[%s188 + $0x7f0] sm:$0xff]
        %v1503 = vld [vmem:[%s188 + $0x7f8] sm:$0xff]
        %v1504 = vld [vmem:[%s188 + $0x800] sm:$0xff]
        %v1505 = vld [vmem:[%s188 + $0x808] sm:$0xff]
        %v1506 = vld [vmem:[%s188 + $0x810] sm:$0xff]
        %v1507 = vld [vmem:[%s188 + $0x818] sm:$0xff]
        %v1508 = vld [vmem:[%s188 + $0x820] sm:$0xff]
        %v1509 = vld [vmem:[%s188 + $0x828] sm:$0xff]
        %v1510 = vld [vmem:[%s188 + $0x830] sm:$0xff]
        %v1511 = vld [vmem:[%s188 + $0x838] sm:$0xff]
        %v1512 = vld [vmem:[%s188 + $0x840] sm:$0xff]
        %v1513 = vld [vmem:[%s188 + $0x848] sm:$0xff]
        %v1514 = vld [vmem:[%s188 + $0x850] sm:$0xff]
        %v1515 = vld [vmem:[%s188 + $0x858] sm:$0xff]
        %v1516 = vld [vmem:[%s188 + $0x860] sm:$0xff]
        %v1517 = vld [vmem:[%s188 + $0x868] sm:$0xff]
        %v1518 = vld [vmem:[%s188 + $0x870] sm:$0xff]
        %v1519 = vld [vmem:[%s188 + $0x878] sm:$0xff]
        %v1520 = vld [vmem:[%s188 + $0x880] sm:$0xff]
        %v1521 = vld [vmem:[%s188 + $0x888] sm:$0xff]
        %v1522 = vld [vmem:[%s188 + $0x890] sm:$0xff]
        %v1523 = vld [vmem:[%s188 + $0x898] sm:$0xff]
        %v1524 = vld [vmem:[%s188 + $0x8a0] sm:$0xff]
        %v1525 = vld [vmem:[%s188 + $0x8a8] sm:$0xff]
        %v1526 = vld [vmem:[%s188 + $0x8b0] sm:$0xff]
        %v1527 = vld [vmem:[%s188 + $0x8b8] sm:$0xff]
        %v1528 = vld [vmem:[%s188 + $0x8c0] sm:$0xff]
        %v1529 = vld [vmem:[%s188 + $0x8c8] sm:$0xff]
        %v1530 = vld [vmem:[%s188 + $0x8d0] sm:$0xff]
        %v1531 = vld [vmem:[%s188 + $0x8d8] sm:$0xff]
        %v1532 = vld [vmem:[%s188 + $0x8e0] sm:$0xff]
        %v1533 = vld [vmem:[%s188 + $0x8e8] sm:$0xff]
        %v1534 = vld [vmem:[%s188 + $0x8f0] sm:$0xff]
        %v1535 = vld [vmem:[%s188 + $0x8f8] sm:$0xff]
        %v1536 = vld [vmem:[%s188 + $0x900] sm:$0xff]
        %v1537 = vld [vmem:[%s188 + $0x908] sm:$0xff]
        %v1538 = vld [vmem:[%s188 + $0x910] sm:$0xff]
        %v1539 = vld [vmem:[%s188 + $0x918] sm:$0xff]
        %v1540 = vld [vmem:[%s188 + $0x920] sm:$0xff]
        %v1541 = vld [vmem:[%s188 + $0x928] sm:$0xff]
        %v1542 = vld [vmem:[%s188 + $0x930] sm:$0xff]
        %v1543 = vld [vmem:[%s188 + $0x938] sm:$0xff]
        %v1544 = vld [vmem:[%s188 + $0x940] sm:$0xff]
        %v1545 = vld [vmem:[%s188 + $0x948] sm:$0xff]
        %v1546 = vld [vmem:[%s188 + $0x950] sm:$0xff]
        %v1547 = vld [vmem:[%s188 + $0x958] sm:$0xff]
        %v1548 = vld [vmem:[%s188 + $0x960] sm:$0xff]
        %v1549 = vld [vmem:[%s188 + $0x968] sm:$0xff]
        %v1550 = vld [vmem:[%s188 + $0x970] sm:$0xff]
        %v1551 = vld [vmem:[%s188 + $0x978] sm:$0xff]
        %v1552 = vld [vmem:[%s188 + $0x980] sm:$0xff]
        %v1553 = vld [vmem:[%s188 + $0x988] sm:$0xff]
        %v1554 = vld [vmem:[%s188 + $0x990] sm:$0xff]
        %v1555 = vld [vmem:[%s188 + $0x998] sm:$0xff]
        %v1556 = vld [vmem:[%s188 + $0x9a0] sm:$0xff]
        %v1557 = vld [vmem:[%s188 + $0x9a8] sm:$0xff]
        %v1558 = vld [vmem:[%s188 + $0x9b0] sm:$0xff]
        %v1559 = vld [vmem:[%s188 + $0x9b8] sm:$0xff]
        %v1560 = vld [vmem:[%s188 + $0x9c0] sm:$0xff]
        %v1561 = vld [vmem:[%s188 + $0x9c8] sm:$0xff]
        %v1562 = vld [vmem:[%s188 + $0x9d0] sm:$0xff]
        %v1563 = vld [vmem:[%s188 + $0x9d8] sm:$0xff]
        %v1564 = vld [vmem:[%s188 + $0x9e0] sm:$0xff]
        %v1565 = vld [vmem:[%s188 + $0x9e8] sm:$0xff]
        %v1566 = vld [vmem:[%s188 + $0x9f0] sm:$0xff]
        %v1567 = vld [vmem:[%s188 + $0x9f8] sm:$0xff]
        %v1568 = vld [vmem:[%s188 + $0xa00] sm:$0xff]
        %v1569 = vld [vmem:[%s188 + $0xa08] sm:$0xff]
        %v1570 = vld [vmem:[%s188 + $0xa10] sm:$0xff]
        %v1571 = vld [vmem:[%s188 + $0xa18] sm:$0xff]
        %v1572 = vld [vmem:[%s188 + $0xa20] sm:$0xff]
        %v1573 = vld [vmem:[%s188 + $0xa28] sm:$0xff]
        %v1574 = vld [vmem:[%s188 + $0xa30] sm:$0xff]
        %v1575 = vld [vmem:[%s188 + $0xa38] sm:$0xff]
        %v1576 = vld [vmem:[%s188 + $0xa40] sm:$0xff]
        %v1577 = vld [vmem:[%s188 + $0xa48] sm:$0xff]
        %v1578 = vld [vmem:[%s188 + $0xa50] sm:$0xff]
        %v1579 = vld [vmem:[%s188 + $0xa58] sm:$0xff]
        %v1580 = vld [vmem:[%s188 + $0xa60] sm:$0xff]
        %v1581 = vld [vmem:[%s188 + $0xa68] sm:$0xff]
        %v1582 = vld [vmem:[%s188 + $0xa70] sm:$0xff]
        %v1583 = vld [vmem:[%s188 + $0xa78] sm:$0xff]
        %v1584 = vld [vmem:[%s188 + $0xa80] sm:$0xff]
        %v1585 = vld [vmem:[%s188 + $0xa88] sm:$0xff]
        %v1586 = vld [vmem:[%s188 + $0xa90] sm:$0xff]
        %v1587 = vld [vmem:[%s188 + $0xa98] sm:$0xff]
        %v1588 = vld [vmem:[%s188 + $0xaa0] sm:$0xff]
        %v1589 = vld [vmem:[%s188 + $0xaa8] sm:$0xff]
        %v1590 = vld [vmem:[%s188 + $0xab0] sm:$0xff]
        %v1591 = vld [vmem:[%s188 + $0xab8] sm:$0xff]
        %v1592 = vld [vmem:[%s188 + $0xac0] sm:$0xff]
        %v1593 = vld [vmem:[%s188 + $0xac8] sm:$0xff]
        %v1594 = vld [vmem:[%s188 + $0xad0] sm:$0xff]
        %v1595 = vld [vmem:[%s188 + $0xad8] sm:$0xff]
        %v1596 = vld [vmem:[%s188 + $0xae0] sm:$0xff]
        %v1597 = vld [vmem:[%s188 + $0xae8] sm:$0xff]
        %v1598 = vld [vmem:[%s188 + $0xaf0] sm:$0xff]
        %v1599 = vld [vmem:[%s188 + $0xaf8] sm:$0xff]
        %v1600 = vld [vmem:[%s188 + $0xb00] sm:$0xff]
        %v1601 = vld [vmem:[%s188 + $0xb08] sm:$0xff]
        %v1602 = vld [vmem:[%s188 + $0xb10] sm:$0xff]
        %v1603 = vld [vmem:[%s188 + $0xb18] sm:$0xff]
        %v1604 = vld [vmem:[%s188 + $0xb20] sm:$0xff]
        %v1605 = vld [vmem:[%s188 + $0xb28] sm:$0xff]
        %v1606 = vld [vmem:[%s188 + $0xb30] sm:$0xff]
        %v1607 = vld [vmem:[%s188 + $0xb38] sm:$0xff]
        %v1608 = vld [vmem:[%s188 + $0xb40] sm:$0xff]
        %v1609 = vld [vmem:[%s188 + $0xb48] sm:$0xff]
        %v1610 = vld [vmem:[%s188 + $0xb50] sm:$0xff]
        %v1611 = vld [vmem:[%s188 + $0xb58] sm:$0xff]
        %v1612 = vld [vmem:[%s188 + $0xb60] sm:$0xff]
        %v1613 = vld [vmem:[%s188 + $0xb68] sm:$0xff]
        %v1614 = vld [vmem:[%s188 + $0xb70] sm:$0xff]
        %v1615 = vld [vmem:[%s188 + $0xb78] sm:$0xff]
        %v1616 = vld [vmem:[%s188 + $0xb80] sm:$0xff]
        %v1617 = vld [vmem:[%s188 + $0xb88] sm:$0xff]
        %v1618 = vld [vmem:[%s188 + $0xb90] sm:$0xff]
        %v1619 = vld [vmem:[%s188 + $0xb98] sm:$0xff]
        %v1620 = vld [vmem:[%s188 + $0xba0] sm:$0xff]
        %v1621 = vld [vmem:[%s188 + $0xba8] sm:$0xff]
        %v1622 = vld [vmem:[%s188 + $0xbb0] sm:$0xff]
        %v1623 = vld [vmem:[%s188 + $0xbb8] sm:$0xff]
        %v1624 = vld [vmem:[%s188 + $0xbc0] sm:$0xff]
        %v1625 = vld [vmem:[%s188 + $0xbc8] sm:$0xff]
        %v1626 = vld [vmem:[%s188 + $0xbd0] sm:$0xff]
        %v1627 = vld [vmem:[%s188 + $0xbd8] sm:$0xff]
        %v1628 = vld [vmem:[%s188 + $0xbe0] sm:$0xff]
        %v1629 = vld [vmem:[%s188 + $0xbe8] sm:$0xff]
        %v1630 = vld [vmem:[%s188 + $0xbf0] sm:$0xff]
        %v1631 = vld [vmem:[%s188 + $0xbf8] sm:$0xff]
        %v1632 = vld [vmem:[%s188 + $0xc00] sm:$0xff]
        %v1633 = vld [vmem:[%s188 + $0xc08] sm:$0xff]
        %v1634 = vld [vmem:[%s188 + $0xc10] sm:$0xff]
        %v1635 = vld [vmem:[%s188 + $0xc18] sm:$0xff]
        %v1636 = vld [vmem:[%s188 + $0xc20] sm:$0xff]
        %v1637 = vld [vmem:[%s188 + $0xc28] sm:$0xff]
        %v1638 = vld [vmem:[%s188 + $0xc30] sm:$0xff]
        %v1639 = vld [vmem:[%s188 + $0xc38] sm:$0xff]
        %v1640 = vld [vmem:[%s188 + $0xc40] sm:$0xff]
        %v1641 = vld [vmem:[%s188 + $0xc48] sm:$0xff]
        %v1642 = vld [vmem:[%s188 + $0xc50] sm:$0xff]
        %v1643 = vld [vmem:[%s188 + $0xc58] sm:$0xff]
        %v1644 = vld [vmem:[%s188 + $0xc60] sm:$0xff]
        %v1645 = vld [vmem:[%s188 + $0xc68] sm:$0xff]
        %v1646 = vld [vmem:[%s188 + $0xc70] sm:$0xff]
        %v1647 = vld [vmem:[%s188 + $0xc78] sm:$0xff]
        %v1648 = vld [vmem:[%s188 + $0xc80] sm:$0xff]
        %v1649 = vld [vmem:[%s188 + $0xc88] sm:$0xff]
        %v1650 = vld [vmem:[%s188 + $0xc90] sm:$0xff]
        %v1651 = vld [vmem:[%s188 + $0xc98] sm:$0xff]
        %v1652 = vld [vmem:[%s188 + $0xca0] sm:$0xff]
        %v1653 = vld [vmem:[%s188 + $0xca8] sm:$0xff]
        %v1654 = vld [vmem:[%s188 + $0xcb0] sm:$0xff]
        %v1655 = vld [vmem:[%s188 + $0xcb8] sm:$0xff]
        %v1656 = vld [vmem:[%s188 + $0xcc0] sm:$0xff]
        %v1657 = vld [vmem:[%s188 + $0xcc8] sm:$0xff]
        %v1658 = vld [vmem:[%s188 + $0xcd0] sm:$0xff]
        %v1659 = vld [vmem:[%s188 + $0xcd8] sm:$0xff]
        %v1660 = vld [vmem:[%s188 + $0xce0] sm:$0xff]
        %v1661 = vld [vmem:[%s188 + $0xce8] sm:$0xff]
        %v1662 = vld [vmem:[%s188 + $0xcf0] sm:$0xff]
        %v1663 = vld [vmem:[%s188 + $0xcf8] sm:$0xff]
        %v1664 = vld [vmem:[%s188 + $0xd00] sm:$0xff]
        %v1665 = vld [vmem:[%s188 + $0xd08] sm:$0xff]
        %v1666 = vld [vmem:[%s188 + $0xd10] sm:$0xff]
        %v1667 = vld [vmem:[%s188 + $0xd18] sm:$0xff]
        %v1668 = vld [vmem:[%s188 + $0xd20] sm:$0xff]
        %v1669 = vld [vmem:[%s188 + $0xd28] sm:$0xff]
        %v1670 = vld [vmem:[%s188 + $0xd30] sm:$0xff]
        %v1671 = vld [vmem:[%s188 + $0xd38] sm:$0xff]
        %v1672 = vld [vmem:[%s188 + $0xd40] sm:$0xff]
        %v1673 = vld [vmem:[%s188 + $0xd48] sm:$0xff]
        %v1674 = vld [vmem:[%s188 + $0xd50] sm:$0xff]
        %v1675 = vld [vmem:[%s188 + $0xd58] sm:$0xff]
        %v1676 = vld [vmem:[%s188 + $0xd60] sm:$0xff]
        %v1677 = vld [vmem:[%s188 + $0xd68] sm:$0xff]
        %v1678 = vld [vmem:[%s188 + $0xd70] sm:$0xff]
        %v1679 = vld [vmem:[%s188 + $0xd78] sm:$0xff]
        %v1680 = vld [vmem:[%s188 + $0xd80] sm:$0xff]
        %v1681 = vld [vmem:[%s188 + $0xd88] sm:$0xff]
        %v1682 = vld [vmem:[%s188 + $0xd90] sm:$0xff]
        %v1683 = vld [vmem:[%s188 + $0xd98] sm:$0xff]
        %v1684 = vld [vmem:[%s188 + $0xda0] sm:$0xff]
        %v1685 = vld [vmem:[%s188 + $0xda8] sm:$0xff]
        %v1686 = vld [vmem:[%s188 + $0xdb0] sm:$0xff]
        %v1687 = vld [vmem:[%s188 + $0xdb8] sm:$0xff]
        %v1688 = vld [vmem:[%s188 + $0xdc0] sm:$0xff]
        %v1689 = vld [vmem:[%s188 + $0xdc8] sm:$0xff]
        %v1690 = vld [vmem:[%s188 + $0xdd0] sm:$0xff]
        %v1691 = vld [vmem:[%s188 + $0xdd8] sm:$0xff]
        %v1692 = vld [vmem:[%s188 + $0xde0] sm:$0xff]
        %v1693 = vld [vmem:[%s188 + $0xde8] sm:$0xff]
        %v1694 = vld [vmem:[%s188 + $0xdf0] sm:$0xff]
        %v1695 = vld [vmem:[%s188 + $0xdf8] sm:$0xff]
        %v1696 = vld [vmem:[%s188 + $0xe00] sm:$0xff]
        %v1697 = vld [vmem:[%s188 + $0xe08] sm:$0xff]
        %v1698 = vld [vmem:[%s188 + $0xe10] sm:$0xff]
        %v1699 = vld [vmem:[%s188 + $0xe18] sm:$0xff]
        %v1700 = vld [vmem:[%s188 + $0xe20] sm:$0xff]
        %v1701 = vld [vmem:[%s188 + $0xe28] sm:$0xff]
        %v1702 = vld [vmem:[%s188 + $0xe30] sm:$0xff]
        %v1703 = vld [vmem:[%s188 + $0xe38] sm:$0xff]
        %v1704 = vld [vmem:[%s188 + $0xe40] sm:$0xff]
        %v1705 = vld [vmem:[%s188 + $0xe48] sm:$0xff]
        %v1706 = vld [vmem:[%s188 + $0xe50] sm:$0xff]
        %v1707 = vld [vmem:[%s188 + $0xe58] sm:$0xff]
        %v1708 = vld [vmem:[%s188 + $0xe60] sm:$0xff]
        %v1709 = vld [vmem:[%s188 + $0xe68] sm:$0xff]
        %v1710 = vld [vmem:[%s188 + $0xe70] sm:$0xff]
        %v1711 = vld [vmem:[%s188 + $0xe78] sm:$0xff]
        %v1712 = vld [vmem:[%s188 + $0xe80] sm:$0xff]
        %v1713 = vld [vmem:[%s188 + $0xe88] sm:$0xff]
        %v1714 = vld [vmem:[%s188 + $0xe90] sm:$0xff]
        %v1715 = vld [vmem:[%s188 + $0xe98] sm:$0xff]
        %v1716 = vld [vmem:[%s188 + $0xea0] sm:$0xff]
        %v1717 = vld [vmem:[%s188 + $0xea8] sm:$0xff]
        %v1718 = vld [vmem:[%s188 + $0xeb0] sm:$0xff]
        %v1719 = vld [vmem:[%s188 + $0xeb8] sm:$0xff]
        %v1720 = vld [vmem:[%s188 + $0xec0] sm:$0xff]
        %v1721 = vld [vmem:[%s188 + $0xec8] sm:$0xff]
        %v1722 = vld [vmem:[%s188 + $0xed0] sm:$0xff]
        %v1723 = vld [vmem:[%s188 + $0xed8] sm:$0xff]
        %v1724 = vld [vmem:[%s188 + $0xee0] sm:$0xff]
        %v1725 = vld [vmem:[%s188 + $0xee8] sm:$0xff]
        %v1726 = vld [vmem:[%s188 + $0xef0] sm:$0xff]
        %v1727 = vld [vmem:[%s188 + $0xef8] sm:$0xff]
        %v1728 = vld [vmem:[%s188 + $0xf00] sm:$0xff]
        %v1729 = vld [vmem:[%s188 + $0xf08] sm:$0xff]
        %v1730 = vld [vmem:[%s188 + $0xf10] sm:$0xff]
        %v1731 = vld [vmem:[%s188 + $0xf18] sm:$0xff]
        %v1732 = vld [vmem:[%s188 + $0xf20] sm:$0xff]
        %v1733 = vld [vmem:[%s188 + $0xf28] sm:$0xff]
        %v1734 = vld [vmem:[%s188 + $0xf30] sm:$0xff]
        %v1735 = vld [vmem:[%s188 + $0xf38] sm:$0xff]
        %v1736 = vld [vmem:[%s188 + $0xf40] sm:$0xff]
        %v1737 = vld [vmem:[%s188 + $0xf48] sm:$0xff]
        %v1738 = vld [vmem:[%s188 + $0xf50] sm:$0xff]
        %v1739 = vld [vmem:[%s188 + $0xf58] sm:$0xff]
        %v1740 = vld [vmem:[%s188 + $0xf60] sm:$0xff]
        %v1741 = vld [vmem:[%s188 + $0xf68] sm:$0xff]
        %v1742 = vld [vmem:[%s188 + $0xf70] sm:$0xff]
        %v1743 = vld [vmem:[%s188 + $0xf78] sm:$0xff]
        %v1744 = vld [vmem:[%s188 + $0xf80] sm:$0xff]
        %v1745 = vld [vmem:[%s188 + $0xf88] sm:$0xff]
        %v1746 = vld [vmem:[%s188 + $0xf90] sm:$0xff]
        %v1747 = vld [vmem:[%s188 + $0xf98] sm:$0xff]
        %v1748 = vld [vmem:[%s188 + $0xfa0] sm:$0xff]
        %v1749 = vld [vmem:[%s188 + $0xfa8] sm:$0xff]
        %v1750 = vld [vmem:[%s188 + $0xfb0] sm:$0xff]
        %v1751 = vld [vmem:[%s188 + $0xfb8] sm:$0xff]
        %v1752 = vld [vmem:[%s188 + $0xfc0] sm:$0xff]
        %v1753 = vld [vmem:[%s188 + $0xfc8] sm:$0xff]
        %v1754 = vld [vmem:[%s188 + $0xfd0] sm:$0xff]
        %v1755 = vld [vmem:[%s188 + $0xfd8] sm:$0xff]
        %v1756 = vld [vmem:[%s188 + $0xfe0] sm:$0xff]
        %v1757 = vld [vmem:[%s188 + $0xfe8] sm:$0xff]
        %v1758 = vld [vmem:[%s188 + $0xff0] sm:$0xff]
        %v1759 = vld [vmem:[%s188 + $0xff8] sm:$0xff]
        %v1760 = vld [vmem:[%s188 + $0x1000] sm:$0xff]
        %v1761 = vld [vmem:[%s188 + $0x1008] sm:$0xff]
        %v1762 = vld [vmem:[%s188 + $0x1010] sm:$0xff]
        %v1763 = vld [vmem:[%s188 + $0x1018] sm:$0xff]
        %v1764 = vld [vmem:[%s188 + $0x1020] sm:$0xff]
        %v1765 = vld [vmem:[%s188 + $0x1028] sm:$0xff]
        %v1766 = vld [vmem:[%s188 + $0x1030] sm:$0xff]
        %v1767 = vld [vmem:[%s188 + $0x1038] sm:$0xff]
        %v1768 = vld [vmem:[%s188 + $0x1040] sm:$0xff]
        %v1769 = vld [vmem:[%s188 + $0x1048] sm:$0xff]
        %v1770 = vld [vmem:[%s188 + $0x1050] sm:$0xff]
        %v1771 = vld [vmem:[%s188 + $0x1058] sm:$0xff]
        %v1772 = vld [vmem:[%s188 + $0x1060] sm:$0xff]
        %v1773 = vld [vmem:[%s188 + $0x1068] sm:$0xff]
        %v1774 = vld [vmem:[%s188 + $0x1070] sm:$0xff]
        %v1775 = vld [vmem:[%s188 + $0x1078] sm:$0xff]
        %v1776 = vld [vmem:[%s188 + $0x1080] sm:$0xff]
        %v1777 = vld [vmem:[%s188 + $0x1088] sm:$0xff]
        %v1778 = vld [vmem:[%s188 + $0x1090] sm:$0xff]
        %v1779 = vld [vmem:[%s188 + $0x1098] sm:$0xff]
        %v1780 = vld [vmem:[%s188 + $0x10a0] sm:$0xff]
        %v1781 = vld [vmem:[%s188 + $0x10a8] sm:$0xff]
        %v1782 = vld [vmem:[%s188 + $0x10b0] sm:$0xff]
        %v1783 = vld [vmem:[%s188 + $0x10b8] sm:$0xff]
        %v1784 = vld [vmem:[%s188 + $0x10c0] sm:$0xff]
        %v1785 = vld [vmem:[%s188 + $0x10c8] sm:$0xff]
        %v1786 = vld [vmem:[%s188 + $0x10d0] sm:$0xff]
        %v1787 = vld [vmem:[%s188 + $0x10d8] sm:$0xff]
        %v1788 = vld [vmem:[%s188 + $0x10e0] sm:$0xff]
        %v1789 = vld [vmem:[%s188 + $0x10e8] sm:$0xff]
        %v1790 = vld [vmem:[%s188 + $0x10f0] sm:$0xff]
        %v1791 = vld [vmem:[%s188 + $0x10f8] sm:$0xff]
        %v1792 = vld [vmem:[%s188 + $0x1100] sm:$0xff]
        %v1793 = vld [vmem:[%s188 + $0x1108] sm:$0xff]
        %v1794 = vld [vmem:[%s188 + $0x1110] sm:$0xff]
        %v1795 = vld [vmem:[%s188 + $0x1118] sm:$0xff]
        %v1796 = vld [vmem:[%s188 + $0x1120] sm:$0xff]
        %v1797 = vld [vmem:[%s188 + $0x1128] sm:$0xff]
        %v1798 = vld [vmem:[%s188 + $0x1130] sm:$0xff]
        %v1799 = vld [vmem:[%s188 + $0x1138] sm:$0xff]
        %v1800 = vld [vmem:[%s188 + $0x1140] sm:$0xff]
        %v1801 = vld [vmem:[%s188 + $0x1148] sm:$0xff]
        %v1802 = vld [vmem:[%s188 + $0x1150] sm:$0xff]
        %v1803 = vld [vmem:[%s188 + $0x1158] sm:$0xff]
        %v1804 = vld [vmem:[%s188 + $0x1160] sm:$0xff]
        %v1805 = vld [vmem:[%s188 + $0x1168] sm:$0xff]
        %v1806 = vld [vmem:[%s188 + $0x1170] sm:$0xff]
        %v1807 = vld [vmem:[%s188 + $0x1178] sm:$0xff]
        %v1808 = vld [vmem:[%s188 + $0x1180] sm:$0xff]
        %v1809 = vld [vmem:[%s188 + $0x1188] sm:$0xff]
        %v1810 = vld [vmem:[%s188 + $0x1190] sm:$0xff]
        %v1811 = vld [vmem:[%s188 + $0x1198] sm:$0xff]
        %v1812 = vld [vmem:[%s188 + $0x11a0] sm:$0xff]
        %v1813 = vld [vmem:[%s188 + $0x11a8] sm:$0xff]
        %v1814 = vld [vmem:[%s188 + $0x11b0] sm:$0xff]
        %v1815 = vld [vmem:[%s188 + $0x11b8] sm:$0xff]
        %v1816 = vld [vmem:[%s188 + $0x11c0] sm:$0xff]
        %v1817 = vld [vmem:[%s188 + $0x11c8] sm:$0xff]
        %v1818 = vld [vmem:[%s188 + $0x11d0] sm:$0xff]
        %v1819 = vld [vmem:[%s188 + $0x11d8] sm:$0xff]
        %v1820 = vld [vmem:[%s188 + $0x11e0] sm:$0xff]
        %v1821 = vld [vmem:[%s188 + $0x11e8] sm:$0xff]
        %v1822 = vld [vmem:[%s188 + $0x11f0] sm:$0xff]
        %v1823 = vld [vmem:[%s188 + $0x11f8] sm:$0xff]
        %v1824 = vld [vmem:[%s188 + $0x1200] sm:$0xff]
        %v1825 = vld [vmem:[%s188 + $0x1208] sm:$0xff]
        %v1826 = vld [vmem:[%s188 + $0x1210] sm:$0xff]
        %v1827 = vld [vmem:[%s188 + $0x1218] sm:$0xff]
        %v1828 = vld [vmem:[%s188 + $0x1220] sm:$0xff]
        %v1829 = vld [vmem:[%s188 + $0x1228] sm:$0xff]
        %v1830 = vld [vmem:[%s188 + $0x1230] sm:$0xff]
        %v1831 = vld [vmem:[%s188 + $0x1238] sm:$0xff]
        %v1832 = vld [vmem:[%s188 + $0x1240] sm:$0xff]
        %v1833 = vld [vmem:[%s188 + $0x1248] sm:$0xff]
        %v1834 = vld [vmem:[%s188 + $0x1250] sm:$0xff]
        %v1835 = vld [vmem:[%s188 + $0x1258] sm:$0xff]
        %v1836 = vld [vmem:[%s188 + $0x1260] sm:$0xff]
        %v1837 = vld [vmem:[%s188 + $0x1268] sm:$0xff]
        %v1838 = vld [vmem:[%s188 + $0x1270] sm:$0xff]
        %v1839 = vld [vmem:[%s188 + $0x1278] sm:$0xff]
        %v1840 = vld [vmem:[%s188 + $0x1280] sm:$0xff]
        %v1841 = vld [vmem:[%s188 + $0x1288] sm:$0xff]
        %v1842 = vld [vmem:[%s188 + $0x1290] sm:$0xff]
        %v1843 = vld [vmem:[%s188 + $0x1298] sm:$0xff]
        %v1844 = vld [vmem:[%s188 + $0x12a0] sm:$0xff]
        %v1845 = vld [vmem:[%s188 + $0x12a8] sm:$0xff]
        %v1846 = vld [vmem:[%s188 + $0x12b0] sm:$0xff]
        %v1847 = vld [vmem:[%s188 + $0x12b8] sm:$0xff]
        %v1848 = vld [vmem:[%s188 + $0x12c0] sm:$0xff]
        %v1849 = vld [vmem:[%s188 + $0x12c8] sm:$0xff]
        %v1850 = vld [vmem:[%s188 + $0x12d0] sm:$0xff]
        %v1851 = vld [vmem:[%s188 + $0x12d8] sm:$0xff]
        %v1852 = vld [vmem:[%s188 + $0x12e0] sm:$0xff]
        %v1853 = vld [vmem:[%s188 + $0x12e8] sm:$0xff]
        %v1854 = vld [vmem:[%s188 + $0x12f0] sm:$0xff]
        %v1855 = vld [vmem:[%s188 + $0x12f8] sm:$0xff]
        %v1856 = vld [vmem:[%s188 + $0x1300] sm:$0xff]
        %v1857 = vld [vmem:[%s188 + $0x1308] sm:$0xff]
        %v1858 = vld [vmem:[%s188 + $0x1310] sm:$0xff]
        %v1859 = vld [vmem:[%s188 + $0x1318] sm:$0xff]
        %v1860 = vld [vmem:[%s188 + $0x1320] sm:$0xff]
        %v1861 = vld [vmem:[%s188 + $0x1328] sm:$0xff]
        %v1862 = vld [vmem:[%s188 + $0x1330] sm:$0xff]
        %v1863 = vld [vmem:[%s188 + $0x1338] sm:$0xff]
        %v1864 = vld [vmem:[%s188 + $0x1340] sm:$0xff]
        %v1865 = vld [vmem:[%s188 + $0x1348] sm:$0xff]
        %v1866 = vld [vmem:[%s188 + $0x1350] sm:$0xff]
        %v1867 = vld [vmem:[%s188 + $0x1358] sm:$0xff]
        %v1868 = vld [vmem:[%s188 + $0x1360] sm:$0xff]
        %v1869 = vld [vmem:[%s188 + $0x1368] sm:$0xff]
        %v1870 = vld [vmem:[%s188 + $0x1370] sm:$0xff]
        %v1871 = vld [vmem:[%s188 + $0x1378] sm:$0xff]
        %v1872 = vld [vmem:[%s188 + $0x1380] sm:$0xff]
        %v1873 = vld [vmem:[%s188 + $0x1388] sm:$0xff]
        %v1874 = vld [vmem:[%s188 + $0x1390] sm:$0xff]
        %v1875 = vld [vmem:[%s188 + $0x1398] sm:$0xff]
        %v1876 = vld [vmem:[%s188 + $0x13a0] sm:$0xff]
        %v1877 = vld [vmem:[%s188 + $0x13a8] sm:$0xff]
        %v1878 = vld [vmem:[%s188 + $0x13b0] sm:$0xff]
        %v1879 = vld [vmem:[%s188 + $0x13b8] sm:$0xff]
        %v1880 = vld [vmem:[%s188 + $0x13c0] sm:$0xff]
        %v1881 = vld [vmem:[%s188 + $0x13c8] sm:$0xff]
        %v1882 = vld [vmem:[%s188 + $0x13d0] sm:$0xff]
        %v1883 = vld [vmem:[%s188 + $0x13d8] sm:$0xff]
        %v1884 = vld [vmem:[%s188 + $0x13e0] sm:$0xff]
        %v1885 = vld [vmem:[%s188 + $0x13e8] sm:$0xff]
        %v1886 = vld [vmem:[%s188 + $0x13f0] sm:$0xff]
        %v1887 = vld [vmem:[%s188 + $0x13f8] sm:$0xff]
        %v1888 = vld [vmem:[%s188 + $0x1400] sm:$0xff]
        %v1889 = vld [vmem:[%s188 + $0x1408] sm:$0xff]
        %v1890 = vld [vmem:[%s188 + $0x1410] sm:$0xff]
        %v1891 = vld [vmem:[%s188 + $0x1418] sm:$0xff]
        %v1892 = vld [vmem:[%s188 + $0x1420] sm:$0xff]
        %v1893 = vld [vmem:[%s188 + $0x1428] sm:$0xff]
        %v1894 = vld [vmem:[%s188 + $0x1430] sm:$0xff]
        %v1895 = vld [vmem:[%s188 + $0x1438] sm:$0xff]
        %v1896 = vld [vmem:[%s188 + $0x1440] sm:$0xff]
        %v1897 = vld [vmem:[%s188 + $0x1448] sm:$0xff]
        %v1898 = vld [vmem:[%s188 + $0x1450] sm:$0xff]
        %v1899 = vld [vmem:[%s188 + $0x1458] sm:$0xff]
        %v1900 = vld [vmem:[%s188 + $0x1460] sm:$0xff]
        %v1901 = vld [vmem:[%s188 + $0x1468] sm:$0xff]
        %v1902 = vld [vmem:[%s188 + $0x1470] sm:$0xff]
        %v1903 = vld [vmem:[%s188 + $0x1478] sm:$0xff]
        %v1904 = vld [vmem:[%s188 + $0x1480] sm:$0xff]
        %v1905 = vld [vmem:[%s188 + $0x1488] sm:$0xff]
        %v1906 = vld [vmem:[%s188 + $0x1490] sm:$0xff]
        %v1907 = vld [vmem:[%s188 + $0x1498] sm:$0xff]
        %v1908 = vld [vmem:[%s188 + $0x14a0] sm:$0xff]
        %v1909 = vld [vmem:[%s188 + $0x14a8] sm:$0xff]
        %v1910 = vld [vmem:[%s188 + $0x14b0] sm:$0xff]
        %v1911 = vld [vmem:[%s188 + $0x14b8] sm:$0xff]
        %v1912 = vld [vmem:[%s188 + $0x14c0] sm:$0xff]
        %v1913 = vld [vmem:[%s188 + $0x14c8] sm:$0xff]
        %v1914 = vld [vmem:[%s188 + $0x14d0] sm:$0xff]
        %v1915 = vld [vmem:[%s188 + $0x14d8] sm:$0xff]
        %v1916 = vld [vmem:[%s188 + $0x14e0] sm:$0xff]
        %v1917 = vld [vmem:[%s188 + $0x14e8] sm:$0xff]
        %v1918 = vld [vmem:[%s188 + $0x14f0] sm:$0xff]
        %v1919 = vld [vmem:[%s188 + $0x14f8] sm:$0xff]
        %v1920 = vld [vmem:[%s188 + $0x1500] sm:$0xff]
        %v1921 = vld [vmem:[%s188 + $0x1508] sm:$0xff]
        %v1922 = vld [vmem:[%s188 + $0x1510] sm:$0xff]
        %v1923 = vld [vmem:[%s188 + $0x1518] sm:$0xff]
        %v1924 = vld [vmem:[%s188 + $0x1520] sm:$0xff]
        %v1925 = vld [vmem:[%s188 + $0x1528] sm:$0xff]
        %v1926 = vld [vmem:[%s188 + $0x1530] sm:$0xff]
        %v1927 = vld [vmem:[%s188 + $0x1538] sm:$0xff]
        %v1928 = vld [vmem:[%s188 + $0x1540] sm:$0xff]
        %v1929 = vld [vmem:[%s188 + $0x1548] sm:$0xff]
        %v1930 = vld [vmem:[%s188 + $0x1550] sm:$0xff]
        %v1931 = vld [vmem:[%s188 + $0x1558] sm:$0xff]
        %v1932 = vld [vmem:[%s188 + $0x1560] sm:$0xff]
        %v1933 = vld [vmem:[%s188 + $0x1568] sm:$0xff]
        %v1934 = vld [vmem:[%s188 + $0x1570] sm:$0xff]
        %v1935 = vld [vmem:[%s188 + $0x1578] sm:$0xff]
        %v1936 = vld [vmem:[%s188 + $0x1580] sm:$0xff]
        %v1937 = vld [vmem:[%s188 + $0x1588] sm:$0xff]
        %v1938 = vld [vmem:[%s188 + $0x1590] sm:$0xff]
        %v1939 = vld [vmem:[%s188 + $0x1598] sm:$0xff]
        %v1940 = vld [vmem:[%s188 + $0x15a0] sm:$0xff]
        %v1941 = vld [vmem:[%s188 + $0x15a8] sm:$0xff]
        %v1942 = vld [vmem:[%s188 + $0x15b0] sm:$0xff]
        %v1943 = vld [vmem:[%s188 + $0x15b8] sm:$0xff]
        %v1944 = vld [vmem:[%s188 + $0x15c0] sm:$0xff]
        %v1945 = vld [vmem:[%s188 + $0x15c8] sm:$0xff]
        %v1946 = vld [vmem:[%s188 + $0x15d0] sm:$0xff]
        %v1947 = vld [vmem:[%s188 + $0x15d8] sm:$0xff]
        %v1948 = vld [vmem:[%s188 + $0x15e0] sm:$0xff]
        %v1949 = vld [vmem:[%s188 + $0x15e8] sm:$0xff]
        %v1950 = vld [vmem:[%s188 + $0x15f0] sm:$0xff]
        %v1951 = vld [vmem:[%s188 + $0x15f8] sm:$0xff]
        %v1952 = vld [vmem:[%s188 + $0x1600] sm:$0xff]
        %v1953 = vld [vmem:[%s188 + $0x1608] sm:$0xff]
        %v1954 = vld [vmem:[%s188 + $0x1610] sm:$0xff]
        %v1955 = vld [vmem:[%s188 + $0x1618] sm:$0xff]
        %v1956 = vld [vmem:[%s188 + $0x1620] sm:$0xff]
        %v1957 = vld [vmem:[%s188 + $0x1628] sm:$0xff]
        %v1958 = vld [vmem:[%s188 + $0x1630] sm:$0xff]
        %v1959 = vld [vmem:[%s188 + $0x1638] sm:$0xff]
        %v1960 = vld [vmem:[%s188 + $0x1640] sm:$0xff]
        %v1961 = vld [vmem:[%s188 + $0x1648] sm:$0xff]
        %v1962 = vld [vmem:[%s188 + $0x1650] sm:$0xff]
        %v1963 = vld [vmem:[%s188 + $0x1658] sm:$0xff]
        %v1964 = vld [vmem:[%s188 + $0x1660] sm:$0xff]
        %v1965 = vld [vmem:[%s188 + $0x1668] sm:$0xff]
        %v1966 = vld [vmem:[%s188 + $0x1670] sm:$0xff]
        %v1967 = vld [vmem:[%s188 + $0x1678] sm:$0xff]
        %v1968 = vld [vmem:[%s188 + $0x1680] sm:$0xff]
        %v1969 = vld [vmem:[%s188 + $0x1688] sm:$0xff]
        %v1970 = vld [vmem:[%s188 + $0x1690] sm:$0xff]
        %v1971 = vld [vmem:[%s188 + $0x1698] sm:$0xff]
        %v1972 = vld [vmem:[%s188 + $0x16a0] sm:$0xff]
        %v1973 = vld [vmem:[%s188 + $0x16a8] sm:$0xff]
        %v1974 = vld [vmem:[%s188 + $0x16b0] sm:$0xff]
        %v1975 = vld [vmem:[%s188 + $0x16b8] sm:$0xff]
        %v1976 = vld [vmem:[%s188 + $0x16c0] sm:$0xff]
        %v1977 = vld [vmem:[%s188 + $0x16c8] sm:$0xff]
        %v1978 = vld [vmem:[%s188 + $0x16d0] sm:$0xff]
        %v1979 = vld [vmem:[%s188 + $0x16d8] sm:$0xff]
        %v1980 = vld [vmem:[%s188 + $0x16e0] sm:$0xff]
        %v1981 = vld [vmem:[%s188 + $0x16e8] sm:$0xff]
        %v1982 = vld [vmem:[%s188 + $0x16f0] sm:$0xff]
        %v1983 = vld [vmem:[%s188 + $0x16f8] sm:$0xff]
        %v1984 = vld [vmem:[%s188 + $0x1700] sm:$0xff]
        %v1985 = vld [vmem:[%s188 + $0x1708] sm:$0xff]
        %v1986 = vld [vmem:[%s188 + $0x1710] sm:$0xff]
        %v1987 = vld [vmem:[%s188 + $0x1718] sm:$0xff]
        %v1988 = vld [vmem:[%s188 + $0x1720] sm:$0xff]
        %v1989 = vld [vmem:[%s188 + $0x1728] sm:$0xff]
        %v1990 = vld [vmem:[%s188 + $0x1730] sm:$0xff]
        %v1991 = vld [vmem:[%s188 + $0x1738] sm:$0xff]
        %v1992 = vld [vmem:[%s188 + $0x1740] sm:$0xff]
        %v1993 = vld [vmem:[%s188 + $0x1748] sm:$0xff]
        %v1994 = vld [vmem:[%s188 + $0x1750] sm:$0xff]
        %v1995 = vld [vmem:[%s188 + $0x1758] sm:$0xff]
        %v1996 = vld [vmem:[%s188 + $0x1760] sm:$0xff]
        %v1997 = vld [vmem:[%s188 + $0x1768] sm:$0xff]
        %v1998 = vld [vmem:[%s188 + $0x1770] sm:$0xff]
        %v1999 = vld [vmem:[%s188 + $0x1778] sm:$0xff]
        %v2000 = vld [vmem:[%s188 + $0x1780] sm:$0xff]
        %v2001 = vld [vmem:[%s188 + $0x1788] sm:$0xff]
        %v2002 = vld [vmem:[%s188 + $0x1790] sm:$0xff]
        %v2003 = vld [vmem:[%s188 + $0x1798] sm:$0xff]
        %v2004 = vld [vmem:[%s188 + $0x17a0] sm:$0xff]
        %v2005 = vld [vmem:[%s188 + $0x17a8] sm:$0xff]
        %v2006 = vld [vmem:[%s188 + $0x17b0] sm:$0xff]
        %v2007 = vld [vmem:[%s188 + $0x17b8] sm:$0xff]
        %v2008 = vld [vmem:[%s188 + $0x17c0] sm:$0xff]
        %v2009 = vld [vmem:[%s188 + $0x17c8] sm:$0xff]
        %v2010 = vld [vmem:[%s188 + $0x17d0] sm:$0xff]
        %v2011 = vld [vmem:[%s188 + $0x17d8] sm:$0xff]
        %v2012 = vld [vmem:[%s188 + $0x17e0] sm:$0xff]
        %v2013 = vld [vmem:[%s188 + $0x17e8] sm:$0xff]
        %v2014 = vld [vmem:[%s188 + $0x17f0] sm:$0xff]
        %v2015 = vld [vmem:[%s188 + $0x17f8] sm:$0xff]
        %v2016 = vld [vmem:[%s188 + $0x1800] sm:$0xff]
        %v2017 = vld [vmem:[%s188 + $0x1808] sm:$0xff]
        %v2018 = vld [vmem:[%s188 + $0x1810] sm:$0xff]
        %v2019 = vld [vmem:[%s188 + $0x1818] sm:$0xff]
        %v2020 = vld [vmem:[%s188 + $0x1820] sm:$0xff]
        %v2021 = vld [vmem:[%s188 + $0x1828] sm:$0xff]
        %v2022 = vld [vmem:[%s188 + $0x1830] sm:$0xff]
        %v2023 = vld [vmem:[%s188 + $0x1838] sm:$0xff]
        %v2024 = vld [vmem:[%s188 + $0x1840] sm:$0xff]
        %v2025 = vld [vmem:[%s188 + $0x1848] sm:$0xff]
        %v2026 = vld [vmem:[%s188 + $0x1850] sm:$0xff]
        %v2027 = vld [vmem:[%s188 + $0x1858] sm:$0xff]
        %v2028 = vld [vmem:[%s188 + $0x1860] sm:$0xff]
        %v2029 = vld [vmem:[%s188 + $0x1868] sm:$0xff]
        %v2030 = vld [vmem:[%s188 + $0x1870] sm:$0xff]
        %v2031 = vld [vmem:[%s188 + $0x1878] sm:$0xff]
        %v2032 = vld [vmem:[%s188 + $0x1880] sm:$0xff]
        %v2033 = vld [vmem:[%s188 + $0x1888] sm:$0xff]
        %v2034 = vld [vmem:[%s188 + $0x1890] sm:$0xff]
        %v2035 = vld [vmem:[%s188 + $0x1898] sm:$0xff]
        %v2036 = vld [vmem:[%s188 + $0x18a0] sm:$0xff]
        %v2037 = vld [vmem:[%s188 + $0x18a8] sm:$0xff]
        %v2038 = vld [vmem:[%s188 + $0x18b0] sm:$0xff]
        %v2039 = vld [vmem:[%s188 + $0x18b8] sm:$0xff]
        %v2040 = vld [vmem:[%s188 + $0x18c0] sm:$0xff]
        %v2041 = vld [vmem:[%s188 + $0x18c8] sm:$0xff]
        %v2042 = vld [vmem:[%s188 + $0x18d0] sm:$0xff]
        %v2043 = vld [vmem:[%s188 + $0x18d8] sm:$0xff]
        %v2044 = vld [vmem:[%s188 + $0x18e0] sm:$0xff]
        %v2045 = vld [vmem:[%s188 + $0x18e8] sm:$0xff]
        %v2046 = vld [vmem:[%s188 + $0x18f0] sm:$0xff]
        %v2047 = vld [vmem:[%s188 + $0x18f8] sm:$0xff]
        %v2048 = vld [vmem:[%s188 + $0x1900] sm:$0xff]
        %v2049 = vld [vmem:[%s188 + $0x1908] sm:$0xff]
        %v2050 = vld [vmem:[%s188 + $0x1910] sm:$0xff]
        %v2051 = vld [vmem:[%s188 + $0x1918] sm:$0xff]
        %v2052 = vld [vmem:[%s188 + $0x1920] sm:$0xff]
        %v2053 = vld [vmem:[%s188 + $0x1928] sm:$0xff]
        %v2054 = vld [vmem:[%s188 + $0x1930] sm:$0xff]
        %v2055 = vld [vmem:[%s188 + $0x1938] sm:$0xff]
        %v2056 = vld [vmem:[%s188 + $0x1940] sm:$0xff]
        %v2057 = vld [vmem:[%s188 + $0x1948] sm:$0xff]
        %v2058 = vld [vmem:[%s188 + $0x1950] sm:$0xff]
        %v2059 = vld [vmem:[%s188 + $0x1958] sm:$0xff]
        %v2060 = vld [vmem:[%s188 + $0x1960] sm:$0xff]
        %v2061 = vld [vmem:[%s188 + $0x1968] sm:$0xff]
        %v2062 = vld [vmem:[%s188 + $0x1970] sm:$0xff]
        %v2063 = vld [vmem:[%s188 + $0x1978] sm:$0xff]
        %v2064 = vld [vmem:[%s188 + $0x1980] sm:$0xff]
        %v2065 = vld [vmem:[%s188 + $0x1988] sm:$0xff]
        %v2066 = vld [vmem:[%s188 + $0x1990] sm:$0xff]
        %v2067 = vld [vmem:[%s188 + $0x1998] sm:$0xff]
        %v2068 = vld [vmem:[%s188 + $0x19a0] sm:$0xff]
        %v2069 = vld [vmem:[%s188 + $0x19a8] sm:$0xff]
        %v2070 = vld [vmem:[%s188 + $0x19b0] sm:$0xff]
        %v2071 = vld [vmem:[%s188 + $0x19b8] sm:$0xff]
        %v2072 = vld [vmem:[%s188 + $0x19c0] sm:$0xff]
        %v2073 = vld [vmem:[%s188 + $0x19c8] sm:$0xff]
        %v2074 = vld [vmem:[%s188 + $0x19d0] sm:$0xff]
        %v2075 = vld [vmem:[%s188 + $0x19d8] sm:$0xff]
        %v2076 = vld [vmem:[%s188 + $0x19e0] sm:$0xff]
        %v2077 = vld [vmem:[%s188 + $0x19e8] sm:$0xff]
        %v2078 = vld [vmem:[%s188 + $0x19f0] sm:$0xff]
        %v2079 = vld [vmem:[%s188 + $0x19f8] sm:$0xff]
        %v2080 = vld [vmem:[%s188 + $0x1a00] sm:$0xff]
        %v2081 = vld [vmem:[%s188 + $0x1a08] sm:$0xff]
        %v2082 = vld [vmem:[%s188 + $0x1a10] sm:$0xff]
        %v2083 = vld [vmem:[%s188 + $0x1a18] sm:$0xff]
        %v2084 = vld [vmem:[%s188 + $0x1a20] sm:$0xff]
        %v2085 = vld [vmem:[%s188 + $0x1a28] sm:$0xff]
        %v2086 = vld [vmem:[%s188 + $0x1a30] sm:$0xff]
        %v2087 = vld [vmem:[%s188 + $0x1a38] sm:$0xff]
        %v2088 = vld [vmem:[%s188 + $0x1a40] sm:$0xff]
        %v2089 = vld [vmem:[%s188 + $0x1a48] sm:$0xff]
        %v2090 = vld [vmem:[%s188 + $0x1a50] sm:$0xff]
        %v2091 = vld [vmem:[%s188 + $0x1a58] sm:$0xff]
        %v2092 = vld [vmem:[%s188 + $0x1a60] sm:$0xff]
        %v2093 = vld [vmem:[%s188 + $0x1a68] sm:$0xff]
        %v2094 = vld [vmem:[%s188 + $0x1a70] sm:$0xff]
        %v2095 = vld [vmem:[%s188 + $0x1a78] sm:$0xff]
        %v2096 = vld [vmem:[%s188 + $0x1a80] sm:$0xff]
        %v2097 = vld [vmem:[%s188 + $0x1a88] sm:$0xff]
        %v2098 = vld [vmem:[%s188 + $0x1a90] sm:$0xff]
        %v2099 = vld [vmem:[%s188 + $0x1a98] sm:$0xff]
        %v2100 = vld [vmem:[%s188 + $0x1aa0] sm:$0xff]
        %v2101 = vld [vmem:[%s188 + $0x1aa8] sm:$0xff]
        %v2102 = vld [vmem:[%s188 + $0x1ab0] sm:$0xff]
        %v2103 = vld [vmem:[%s188 + $0x1ab8] sm:$0xff]
        %v2104 = vld [vmem:[%s188 + $0x1ac0] sm:$0xff]
        %v2105 = vld [vmem:[%s188 + $0x1ac8] sm:$0xff]
        %v2106 = vld [vmem:[%s188 + $0x1ad0] sm:$0xff]
        %v2107 = vld [vmem:[%s188 + $0x1ad8] sm:$0xff]
        %v2108 = vld [vmem:[%s188 + $0x1ae0] sm:$0xff]
        %v2109 = vld [vmem:[%s188 + $0x1ae8] sm:$0xff]
        %v2110 = vld [vmem:[%s188 + $0x1af0] sm:$0xff]
        %v2111 = vld [vmem:[%s188 + $0x1af8] sm:$0xff]
        %v2112 = vld [vmem:[%s188 + $0x1b00] sm:$0xff]
        %v2113 = vld [vmem:[%s188 + $0x1b08] sm:$0xff]
        %v2114 = vld [vmem:[%s188 + $0x1b10] sm:$0xff]
        %v2115 = vld [vmem:[%s188 + $0x1b18] sm:$0xff]
        %v2116 = vld [vmem:[%s188 + $0x1b20] sm:$0xff]
        %v2117 = vld [vmem:[%s188 + $0x1b28] sm:$0xff]
        %v2118 = vld [vmem:[%s188 + $0x1b30] sm:$0xff]
        %v2119 = vld [vmem:[%s188 + $0x1b38] sm:$0xff]
        %v2120 = vld [vmem:[%s188 + $0x1b40] sm:$0xff]
        %v2121 = vld [vmem:[%s188 + $0x1b48] sm:$0xff]
        %v2122 = vld [vmem:[%s188 + $0x1b50] sm:$0xff]
        %v2123 = vld [vmem:[%s188 + $0x1b58] sm:$0xff]
        %v2124 = vld [vmem:[%s188 + $0x1b60] sm:$0xff]
        %v2125 = vld [vmem:[%s188 + $0x1b68] sm:$0xff]
        %v2126 = vld [vmem:[%s188 + $0x1b70] sm:$0xff]
        %v2127 = vld [vmem:[%s188 + $0x1b78] sm:$0xff]
        %v2128 = vld [vmem:[%s188 + $0x1b80] sm:$0xff]
        %v2129 = vld [vmem:[%s188 + $0x1b88] sm:$0xff]
        %v2130 = vld [vmem:[%s188 + $0x1b90] sm:$0xff]
        %v2131 = vld [vmem:[%s188 + $0x1b98] sm:$0xff]
        %v2132 = vld [vmem:[%s188 + $0x1ba0] sm:$0xff]
        %v2133 = vld [vmem:[%s188 + $0x1ba8] sm:$0xff]
        %v2134 = vld [vmem:[%s188 + $0x1bb0] sm:$0xff]
        %v2135 = vld [vmem:[%s188 + $0x1bb8] sm:$0xff]
        %v2136 = vld [vmem:[%s188 + $0x1bc0] sm:$0xff]
        %v2137 = vld [vmem:[%s188 + $0x1bc8] sm:$0xff]
        %v2138 = vld [vmem:[%s188 + $0x1bd0] sm:$0xff]
        %v2139 = vld [vmem:[%s188 + $0x1bd8] sm:$0xff]
        %v2140 = vld [vmem:[%s188 + $0x1be0] sm:$0xff]
        %v2141 = vld [vmem:[%s188 + $0x1be8] sm:$0xff]
        %v2142 = vld [vmem:[%s188 + $0x1bf0] sm:$0xff]
        %v2143 = vld [vmem:[%s188 + $0x1bf8] sm:$0xff]
        %v2144 = vld [vmem:[%s188 + $0x1c00] sm:$0xff]
        %v2145 = vld [vmem:[%s188 + $0x1c08] sm:$0xff]
        %v2146 = vld [vmem:[%s188 + $0x1c10] sm:$0xff]
        %v2147 = vld [vmem:[%s188 + $0x1c18] sm:$0xff]
        %v2148 = vld [vmem:[%s188 + $0x1c20] sm:$0xff]
        %v2149 = vld [vmem:[%s188 + $0x1c28] sm:$0xff]
        %v2150 = vld [vmem:[%s188 + $0x1c30] sm:$0xff]
        %v2151 = vld [vmem:[%s188 + $0x1c38] sm:$0xff]
        %v2152 = vld [vmem:[%s188 + $0x1c40] sm:$0xff]
        %v2153 = vld [vmem:[%s188 + $0x1c48] sm:$0xff]
        %v2154 = vld [vmem:[%s188 + $0x1c50] sm:$0xff]
        %v2155 = vld [vmem:[%s188 + $0x1c58] sm:$0xff]
        %v2156 = vld [vmem:[%s188 + $0x1c60] sm:$0xff]
        %v2157 = vld [vmem:[%s188 + $0x1c68] sm:$0xff]
        %v2158 = vld [vmem:[%s188 + $0x1c70] sm:$0xff]
        %v2159 = vld [vmem:[%s188 + $0x1c78] sm:$0xff]
        %v2160 = vld [vmem:[%s188 + $0x1c80] sm:$0xff]
        %v2161 = vld [vmem:[%s188 + $0x1c88] sm:$0xff]
        %v2162 = vld [vmem:[%s188 + $0x1c90] sm:$0xff]
        %v2163 = vld [vmem:[%s188 + $0x1c98] sm:$0xff]
        %v2164 = vld [vmem:[%s188 + $0x1ca0] sm:$0xff]
        %v2165 = vld [vmem:[%s188 + $0x1ca8] sm:$0xff]
        %v2166 = vld [vmem:[%s188 + $0x1cb0] sm:$0xff]
        %v2167 = vld [vmem:[%s188 + $0x1cb8] sm:$0xff]
        %v2168 = vld [vmem:[%s188 + $0x1cc0] sm:$0xff]
        %v2169 = vld [vmem:[%s188 + $0x1cc8] sm:$0xff]
        %v2170 = vld [vmem:[%s188 + $0x1cd0] sm:$0xff]
        %v2171 = vld [vmem:[%s188 + $0x1cd8] sm:$0xff]
        %v2172 = vld [vmem:[%s188 + $0x1ce0] sm:$0xff]
        %v2173 = vld [vmem:[%s188 + $0x1ce8] sm:$0xff]
        %v2174 = vld [vmem:[%s188 + $0x1cf0] sm:$0xff]
        %v2175 = vld [vmem:[%s188 + $0x1cf8] sm:$0xff]
        %v2176 = vld [vmem:[%s188 + $0x1d00] sm:$0xff]
        %v2177 = vld [vmem:[%s188 + $0x1d08] sm:$0xff]
        %v2178 = vld [vmem:[%s188 + $0x1d10] sm:$0xff]
        %v2179 = vld [vmem:[%s188 + $0x1d18] sm:$0xff]
        %v2180 = vld [vmem:[%s188 + $0x1d20] sm:$0xff]
        %v2181 = vld [vmem:[%s188 + $0x1d28] sm:$0xff]
        %v2182 = vld [vmem:[%s188 + $0x1d30] sm:$0xff]
        %v2183 = vld [vmem:[%s188 + $0x1d38] sm:$0xff]
        %v2184 = vld [vmem:[%s188 + $0x1d40] sm:$0xff]
        %v2185 = vld [vmem:[%s188 + $0x1d48] sm:$0xff]
        %v2186 = vld [vmem:[%s188 + $0x1d50] sm:$0xff]
        %v2187 = vld [vmem:[%s188 + $0x1d58] sm:$0xff]
        %v2188 = vld [vmem:[%s188 + $0x1d60] sm:$0xff]
        %v2189 = vld [vmem:[%s188 + $0x1d68] sm:$0xff]
        %v2190 = vld [vmem:[%s188 + $0x1d70] sm:$0xff]
        %v2191 = vld [vmem:[%s188 + $0x1d78] sm:$0xff]
        %v2192 = vld [vmem:[%s188 + $0x1d80] sm:$0xff]
        %v2193 = vld [vmem:[%s188 + $0x1d88] sm:$0xff]
        %v2194 = vld [vmem:[%s188 + $0x1d90] sm:$0xff]
        %v2195 = vld [vmem:[%s188 + $0x1d98] sm:$0xff]
        %v2196 = vld [vmem:[%s188 + $0x1da0] sm:$0xff]
        %v2197 = vld [vmem:[%s188 + $0x1da8] sm:$0xff]
        %v2198 = vld [vmem:[%s188 + $0x1db0] sm:$0xff]
        %v2199 = vld [vmem:[%s188 + $0x1db8] sm:$0xff]
        %v2200 = vld [vmem:[%s188 + $0x1dc0] sm:$0xff]
        %v2201 = vld [vmem:[%s188 + $0x1dc8] sm:$0xff]
        %v2202 = vld [vmem:[%s188 + $0x1dd0] sm:$0xff]
        %v2203 = vld [vmem:[%s188 + $0x1dd8] sm:$0xff]
        %v2204 = vld [vmem:[%s188 + $0x1de0] sm:$0xff]
        %v2205 = vld [vmem:[%s188 + $0x1de8] sm:$0xff]
        %v2206 = vld [vmem:[%s188 + $0x1df0] sm:$0xff]
        %v2207 = vld [vmem:[%s188 + $0x1df8] sm:$0xff]
        %v2208 = vld [vmem:[%s188 + $0x1e00] sm:$0xff]
        %v2209 = vld [vmem:[%s188 + $0x1e08] sm:$0xff]
        %v2210 = vld [vmem:[%s188 + $0x1e10] sm:$0xff]
        %v2211 = vld [vmem:[%s188 + $0x1e18] sm:$0xff]
        %v2212 = vld [vmem:[%s188 + $0x1e20] sm:$0xff]
        %v2213 = vld [vmem:[%s188 + $0x1e28] sm:$0xff]
        %v2214 = vld [vmem:[%s188 + $0x1e30] sm:$0xff]
        %v2215 = vld [vmem:[%s188 + $0x1e38] sm:$0xff]
        %v2216 = vld [vmem:[%s188 + $0x1e40] sm:$0xff]
        %v2217 = vld [vmem:[%s188 + $0x1e48] sm:$0xff]
        %v2218 = vld [vmem:[%s188 + $0x1e50] sm:$0xff]
        %v2219 = vld [vmem:[%s188 + $0x1e58] sm:$0xff]
        %v2220 = vld [vmem:[%s188 + $0x1e60] sm:$0xff]
        %v2221 = vld [vmem:[%s188 + $0x1e68] sm:$0xff]
        %v2222 = vld [vmem:[%s188 + $0x1e70] sm:$0xff]
        %v2223 = vld [vmem:[%s188 + $0x1e78] sm:$0xff]
        %v2224 = vld [vmem:[%s188 + $0x1e80] sm:$0xff]
        %v2225 = vld [vmem:[%s188 + $0x1e88] sm:$0xff]
        %v2226 = vld [vmem:[%s188 + $0x1e90] sm:$0xff]
        %v2227 = vld [vmem:[%s188 + $0x1e98] sm:$0xff]
        %v2228 = vld [vmem:[%s188 + $0x1ea0] sm:$0xff]
        %v2229 = vld [vmem:[%s188 + $0x1ea8] sm:$0xff]
        %v2230 = vld [vmem:[%s188 + $0x1eb0] sm:$0xff]
        %v2231 = vld [vmem:[%s188 + $0x1eb8] sm:$0xff]
        %v2232 = vld [vmem:[%s188 + $0x1ec0] sm:$0xff]
        %v2233 = vld [vmem:[%s188 + $0x1ec8] sm:$0xff]
        %v2234 = vld [vmem:[%s188 + $0x1ed0] sm:$0xff]
        %v2235 = vld [vmem:[%s188 + $0x1ed8] sm:$0xff]
        %v2236 = vld [vmem:[%s188 + $0x1ee0] sm:$0xff]
        %v2237 = vld [vmem:[%s188 + $0x1ee8] sm:$0xff]
        %v2238 = vld [vmem:[%s188 + $0x1ef0] sm:$0xff]
        %v2239 = vld [vmem:[%s188 + $0x1ef8] sm:$0xff]
        %v2240 = vld [vmem:[%s188 + $0x1f00] sm:$0xff]
        %v2241 = vld [vmem:[%s188 + $0x1f08] sm:$0xff]
        %v2242 = vld [vmem:[%s188 + $0x1f10] sm:$0xff]
        %v2243 = vld [vmem:[%s188 + $0x1f18] sm:$0xff]
        %v2244 = vld [vmem:[%s188 + $0x1f20] sm:$0xff]
        %v2245 = vld [vmem:[%s188 + $0x1f28] sm:$0xff]
        %v2246 = vld [vmem:[%s188 + $0x1f30] sm:$0xff]
        %v2247 = vld [vmem:[%s188 + $0x1f38] sm:$0xff]
        %v2248 = vld [vmem:[%s188 + $0x1f40] sm:$0xff]
        %v2249 = vld [vmem:[%s188 + $0x1f48] sm:$0xff]
        %v2250 = vld [vmem:[%s188 + $0x1f50] sm:$0xff]
        %v2251 = vld [vmem:[%s188 + $0x1f58] sm:$0xff]
        %v2252 = vld [vmem:[%s188 + $0x1f60] sm:$0xff]
        %v2253 = vld [vmem:[%s188 + $0x1f68] sm:$0xff]
        %v2254 = vld [vmem:[%s188 + $0x1f70] sm:$0xff]
        %v2255 = vld [vmem:[%s188 + $0x1f78] sm:$0xff]
        %v2256 = vld [vmem:[%s188 + $0x1f80] sm:$0xff]
        %v2257 = vld [vmem:[%s188 + $0x1f88] sm:$0xff]
        %v2258 = vld [vmem:[%s188 + $0x1f90] sm:$0xff]
        %v2259 = vld [vmem:[%s188 + $0x1f98] sm:$0xff]
        %v2260 = vld [vmem:[%s188 + $0x1fa0] sm:$0xff]
        %v2261 = vld [vmem:[%s188 + $0x1fa8] sm:$0xff]
        %v2262 = vld [vmem:[%s188 + $0x1fb0] sm:$0xff]
        %v2263 = vld [vmem:[%s188 + $0x1fb8] sm:$0xff]
        %v2264 = vld [vmem:[%s188 + $0x1fc0] sm:$0xff]
        %v2265 = vld [vmem:[%s188 + $0x1fc8] sm:$0xff]
        %v2266 = vld [vmem:[%s188 + $0x1fd0] sm:$0xff]
        %v2267 = vld [vmem:[%s188 + $0x1fd8] sm:$0xff]
        %v2268 = vld [vmem:[%s188 + $0x1fe0] sm:$0xff]
        %v2269 = vld [vmem:[%s188 + $0x1fe8] sm:$0xff]
        %v2270 = vld [vmem:[%s188 + $0x1ff0] sm:$0xff]
        %v2271 = vld [vmem:[%s188 + $0x1ff8] sm:$0xff]
        %v2272 = vsub.f32 %v224, %v1248
        %v2273 = vsub.f32 %v225, %v1249
        %v2274 = vsub.f32 %v226, %v1250
        %v2275 = vsub.f32 %v227, %v1251
        %v2276 = vsub.f32 %v228, %v1252
        %v2277 = vsub.f32 %v229, %v1253
        %v2278 = vsub.f32 %v230, %v1254
        %v2279 = vsub.f32 %v231, %v1255
        %v2280 = vsub.f32 %v232, %v1256
        %v2281 = vsub.f32 %v233, %v1257
        %v2282 = vsub.f32 %v234, %v1258
        %v2283 = vsub.f32 %v235, %v1259
        %v2284 = vsub.f32 %v236, %v1260
        %v2285 = vsub.f32 %v237, %v1261
        %v2286 = vsub.f32 %v238, %v1262
        %v2287 = vsub.f32 %v239, %v1263
        %v2288 = vsub.f32 %v240, %v1264
        %v2289 = vsub.f32 %v241, %v1265
        %v2290 = vsub.f32 %v242, %v1266
        %v2291 = vsub.f32 %v243, %v1267
        %v2292 = vsub.f32 %v244, %v1268
        %v2293 = vsub.f32 %v245, %v1269
        %v2294 = vsub.f32 %v246, %v1270
        %v2295 = vsub.f32 %v247, %v1271
        %v2296 = vsub.f32 %v248, %v1272
        %v2297 = vsub.f32 %v249, %v1273
        %v2298 = vsub.f32 %v250, %v1274
        %v2299 = vsub.f32 %v251, %v1275
        %v2300 = vsub.f32 %v252, %v1276
        %v2301 = vsub.f32 %v253, %v1277
        %v2302 = vsub.f32 %v254, %v1278
        %v2303 = vsub.f32 %v255, %v1279
        %v2304 = vsub.f32 %v256, %v1280
        %v2305 = vsub.f32 %v257, %v1281
        %v2306 = vsub.f32 %v258, %v1282
        %v2307 = vsub.f32 %v259, %v1283
        %v2308 = vsub.f32 %v260, %v1284
        %v2309 = vsub.f32 %v261, %v1285
        %v2310 = vsub.f32 %v262, %v1286
        %v2311 = vsub.f32 %v263, %v1287
        %v2312 = vsub.f32 %v264, %v1288
        %v2313 = vsub.f32 %v265, %v1289
        %v2314 = vsub.f32 %v266, %v1290
        %v2315 = vsub.f32 %v267, %v1291
        %v2316 = vsub.f32 %v268, %v1292
        %v2317 = vsub.f32 %v269, %v1293
        %v2318 = vsub.f32 %v270, %v1294
        %v2319 = vsub.f32 %v271, %v1295
        %v2320 = vsub.f32 %v272, %v1296
        %v2321 = vsub.f32 %v273, %v1297
        %v2322 = vsub.f32 %v274, %v1298
        %v2323 = vsub.f32 %v275, %v1299
        %v2324 = vsub.f32 %v276, %v1300
        %v2325 = vsub.f32 %v277, %v1301
        %v2326 = vsub.f32 %v278, %v1302
        %v2327 = vsub.f32 %v279, %v1303
        %v2328 = vsub.f32 %v280, %v1304
        %v2329 = vsub.f32 %v281, %v1305
        %v2330 = vsub.f32 %v282, %v1306
        %v2331 = vsub.f32 %v283, %v1307
        %v2332 = vsub.f32 %v284, %v1308
        %v2333 = vsub.f32 %v285, %v1309
        %v2334 = vsub.f32 %v286, %v1310
        %v2335 = vsub.f32 %v287, %v1311
        %v2336 = vsub.f32 %v288, %v1312
        %v2337 = vsub.f32 %v289, %v1313
        %v2338 = vsub.f32 %v290, %v1314
        %v2339 = vsub.f32 %v291, %v1315
        %v2340 = vsub.f32 %v292, %v1316
        %v2341 = vsub.f32 %v293, %v1317
        %v2342 = vsub.f32 %v294, %v1318
        %v2343 = vsub.f32 %v295, %v1319
        %v2344 = vsub.f32 %v296, %v1320
        %v2345 = vsub.f32 %v297, %v1321
        %v2346 = vsub.f32 %v298, %v1322
        %v2347 = vsub.f32 %v299, %v1323
        %v2348 = vsub.f32 %v300, %v1324
        %v2349 = vsub.f32 %v301, %v1325
        %v2350 = vsub.f32 %v302, %v1326
        %v2351 = vsub.f32 %v303, %v1327
        %v2352 = vsub.f32 %v304, %v1328
        %v2353 = vsub.f32 %v305, %v1329
        %v2354 = vsub.f32 %v306, %v1330
        %v2355 = vsub.f32 %v307, %v1331
        %v2356 = vsub.f32 %v308, %v1332
        %v2357 = vsub.f32 %v309, %v1333
        %v2358 = vsub.f32 %v310, %v1334
        %v2359 = vsub.f32 %v311, %v1335
        %v2360 = vsub.f32 %v312, %v1336
        %v2361 = vsub.f32 %v313, %v1337
        %v2362 = vsub.f32 %v314, %v1338
        %v2363 = vsub.f32 %v315, %v1339
        %v2364 = vsub.f32 %v316, %v1340
        %v2365 = vsub.f32 %v317, %v1341
        %v2366 = vsub.f32 %v318, %v1342
        %v2367 = vsub.f32 %v319, %v1343
        %v2368 = vsub.f32 %v320, %v1344
        %v2369 = vsub.f32 %v321, %v1345
        %v2370 = vsub.f32 %v322, %v1346
        %v2371 = vsub.f32 %v323, %v1347
        %v2372 = vsub.f32 %v324, %v1348
        %v2373 = vsub.f32 %v325, %v1349
        %v2374 = vsub.f32 %v326, %v1350
        %v2375 = vsub.f32 %v327, %v1351
        %v2376 = vsub.f32 %v328, %v1352
        %v2377 = vsub.f32 %v329, %v1353
        %v2378 = vsub.f32 %v330, %v1354
        %v2379 = vsub.f32 %v331, %v1355
        %v2380 = vsub.f32 %v332, %v1356
        %v2381 = vsub.f32 %v333, %v1357
        %v2382 = vsub.f32 %v334, %v1358
        %v2383 = vsub.f32 %v335, %v1359
        %v2384 = vsub.f32 %v336, %v1360
        %v2385 = vsub.f32 %v337, %v1361
        %v2386 = vsub.f32 %v338, %v1362
        %v2387 = vsub.f32 %v339, %v1363
        %v2388 = vsub.f32 %v340, %v1364
        %v2389 = vsub.f32 %v341, %v1365
        %v2390 = vsub.f32 %v342, %v1366
        %v2391 = vsub.f32 %v343, %v1367
        %v2392 = vsub.f32 %v344, %v1368
        %v2393 = vsub.f32 %v345, %v1369
        %v2394 = vsub.f32 %v346, %v1370
        %v2395 = vsub.f32 %v347, %v1371
        %v2396 = vsub.f32 %v348, %v1372
        %v2397 = vsub.f32 %v349, %v1373
        %v2398 = vsub.f32 %v350, %v1374
        %v2399 = vsub.f32 %v351, %v1375
        %v2400 = vsub.f32 %v352, %v1376
        %v2401 = vsub.f32 %v353, %v1377
        %v2402 = vsub.f32 %v354, %v1378
        %v2403 = vsub.f32 %v355, %v1379
        %v2404 = vsub.f32 %v356, %v1380
        %v2405 = vsub.f32 %v357, %v1381
        %v2406 = vsub.f32 %v358, %v1382
        %v2407 = vsub.f32 %v359, %v1383
        %v2408 = vsub.f32 %v360, %v1384
        %v2409 = vsub.f32 %v361, %v1385
        %v2410 = vsub.f32 %v362, %v1386
        %v2411 = vsub.f32 %v363, %v1387
        %v2412 = vsub.f32 %v364, %v1388
        %v2413 = vsub.f32 %v365, %v1389
        %v2414 = vsub.f32 %v366, %v1390
        %v2415 = vsub.f32 %v367, %v1391
        %v2416 = vsub.f32 %v368, %v1392
        %v2417 = vsub.f32 %v369, %v1393
        %v2418 = vsub.f32 %v370, %v1394
        %v2419 = vsub.f32 %v371, %v1395
        %v2420 = vsub.f32 %v372, %v1396
        %v2421 = vsub.f32 %v373, %v1397
        %v2422 = vsub.f32 %v374, %v1398
        %v2423 = vsub.f32 %v375, %v1399
        %v2424 = vsub.f32 %v376, %v1400
        %v2425 = vsub.f32 %v377, %v1401
        %v2426 = vsub.f32 %v378, %v1402
        %v2427 = vsub.f32 %v379, %v1403
        %v2428 = vsub.f32 %v380, %v1404
        %v2429 = vsub.f32 %v381, %v1405
        %v2430 = vsub.f32 %v382, %v1406
        %v2431 = vsub.f32 %v383, %v1407
        %v2432 = vsub.f32 %v384, %v1408
        %v2433 = vsub.f32 %v385, %v1409
        %v2434 = vsub.f32 %v386, %v1410
        %v2435 = vsub.f32 %v387, %v1411
        %v2436 = vsub.f32 %v388, %v1412
        %v2437 = vsub.f32 %v389, %v1413
        %v2438 = vsub.f32 %v390, %v1414
        %v2439 = vsub.f32 %v391, %v1415
        %v2440 = vsub.f32 %v392, %v1416
        %v2441 = vsub.f32 %v393, %v1417
        %v2442 = vsub.f32 %v394, %v1418
        %v2443 = vsub.f32 %v395, %v1419
        %v2444 = vsub.f32 %v396, %v1420
        %v2445 = vsub.f32 %v397, %v1421
        %v2446 = vsub.f32 %v398, %v1422
        %v2447 = vsub.f32 %v399, %v1423
        %v2448 = vsub.f32 %v400, %v1424
        %v2449 = vsub.f32 %v401, %v1425
        %v2450 = vsub.f32 %v402, %v1426
        %v2451 = vsub.f32 %v403, %v1427
        %v2452 = vsub.f32 %v404, %v1428
        %v2453 = vsub.f32 %v405, %v1429
        %v2454 = vsub.f32 %v406, %v1430
        %v2455 = vsub.f32 %v407, %v1431
        %v2456 = vsub.f32 %v408, %v1432
        %v2457 = vsub.f32 %v409, %v1433
        %v2458 = vsub.f32 %v410, %v1434
        %v2459 = vsub.f32 %v411, %v1435
        %v2460 = vsub.f32 %v412, %v1436
        %v2461 = vsub.f32 %v413, %v1437
        %v2462 = vsub.f32 %v414, %v1438
        %v2463 = vsub.f32 %v415, %v1439
        %v2464 = vsub.f32 %v416, %v1440
        %v2465 = vsub.f32 %v417, %v1441
        %v2466 = vsub.f32 %v418, %v1442
        %v2467 = vsub.f32 %v419, %v1443
        %v2468 = vsub.f32 %v420, %v1444
        %v2469 = vsub.f32 %v421, %v1445
        %v2470 = vsub.f32 %v422, %v1446
        %v2471 = vsub.f32 %v423, %v1447
        %v2472 = vsub.f32 %v424, %v1448
        %v2473 = vsub.f32 %v425, %v1449
        %v2474 = vsub.f32 %v426, %v1450
        %v2475 = vsub.f32 %v427, %v1451
        %v2476 = vsub.f32 %v428, %v1452
        %v2477 = vsub.f32 %v429, %v1453
        %v2478 = vsub.f32 %v430, %v1454
        %v2479 = vsub.f32 %v431, %v1455
        %v2480 = vsub.f32 %v432, %v1456
        %v2481 = vsub.f32 %v433, %v1457
        %v2482 = vsub.f32 %v434, %v1458
        %v2483 = vsub.f32 %v435, %v1459
        %v2484 = vsub.f32 %v436, %v1460
        %v2485 = vsub.f32 %v437, %v1461
        %v2486 = vsub.f32 %v438, %v1462
        %v2487 = vsub.f32 %v439, %v1463
        %v2488 = vsub.f32 %v440, %v1464
        %v2489 = vsub.f32 %v441, %v1465
        %v2490 = vsub.f32 %v442, %v1466
        %v2491 = vsub.f32 %v443, %v1467
        %v2492 = vsub.f32 %v444, %v1468
        %v2493 = vsub.f32 %v445, %v1469
        %v2494 = vsub.f32 %v446, %v1470
        %v2495 = vsub.f32 %v447, %v1471
        %v2496 = vsub.f32 %v448, %v1472
        %v2497 = vsub.f32 %v449, %v1473
        %v2498 = vsub.f32 %v450, %v1474
        %v2499 = vsub.f32 %v451, %v1475
        %v2500 = vsub.f32 %v452, %v1476
        %v2501 = vsub.f32 %v453, %v1477
        %v2502 = vsub.f32 %v454, %v1478
        %v2503 = vsub.f32 %v455, %v1479
        %v2504 = vsub.f32 %v456, %v1480
        %v2505 = vsub.f32 %v457, %v1481
        %v2506 = vsub.f32 %v458, %v1482
        %v2507 = vsub.f32 %v459, %v1483
        %v2508 = vsub.f32 %v460, %v1484
        %v2509 = vsub.f32 %v461, %v1485
        %v2510 = vsub.f32 %v462, %v1486
        %v2511 = vsub.f32 %v463, %v1487
        %v2512 = vsub.f32 %v464, %v1488
        %v2513 = vsub.f32 %v465, %v1489
        %v2514 = vsub.f32 %v466, %v1490
        %v2515 = vsub.f32 %v467, %v1491
        %v2516 = vsub.f32 %v468, %v1492
        %v2517 = vsub.f32 %v469, %v1493
        %v2518 = vsub.f32 %v470, %v1494
        %v2519 = vsub.f32 %v471, %v1495
        %v2520 = vsub.f32 %v472, %v1496
        %v2521 = vsub.f32 %v473, %v1497
        %v2522 = vsub.f32 %v474, %v1498
        %v2523 = vsub.f32 %v475, %v1499
        %v2524 = vsub.f32 %v476, %v1500
        %v2525 = vsub.f32 %v477, %v1501
        %v2526 = vsub.f32 %v478, %v1502
        %v2527 = vsub.f32 %v479, %v1503
        %v2528 = vsub.f32 %v480, %v1504
        %v2529 = vsub.f32 %v481, %v1505
        %v2530 = vsub.f32 %v482, %v1506
        %v2531 = vsub.f32 %v483, %v1507
        %v2532 = vsub.f32 %v484, %v1508
        %v2533 = vsub.f32 %v485, %v1509
        %v2534 = vsub.f32 %v486, %v1510
        %v2535 = vsub.f32 %v487, %v1511
        %v2536 = vsub.f32 %v488, %v1512
        %v2537 = vsub.f32 %v489, %v1513
        %v2538 = vsub.f32 %v490, %v1514
        %v2539 = vsub.f32 %v491, %v1515
        %v2540 = vsub.f32 %v492, %v1516
        %v2541 = vsub.f32 %v493, %v1517
        %v2542 = vsub.f32 %v494, %v1518
        %v2543 = vsub.f32 %v495, %v1519
        %v2544 = vsub.f32 %v496, %v1520
        %v2545 = vsub.f32 %v497, %v1521
        %v2546 = vsub.f32 %v498, %v1522
        %v2547 = vsub.f32 %v499, %v1523
        %v2548 = vsub.f32 %v500, %v1524
        %v2549 = vsub.f32 %v501, %v1525
        %v2550 = vsub.f32 %v502, %v1526
        %v2551 = vsub.f32 %v503, %v1527
        %v2552 = vsub.f32 %v504, %v1528
        %v2553 = vsub.f32 %v505, %v1529
        %v2554 = vsub.f32 %v506, %v1530
        %v2555 = vsub.f32 %v507, %v1531
        %v2556 = vsub.f32 %v508, %v1532
        %v2557 = vsub.f32 %v509, %v1533
        %v2558 = vsub.f32 %v510, %v1534
        %v2559 = vsub.f32 %v511, %v1535
        %v2560 = vsub.f32 %v512, %v1536
        %v2561 = vsub.f32 %v513, %v1537
        %v2562 = vsub.f32 %v514, %v1538
        %v2563 = vsub.f32 %v515, %v1539
        %v2564 = vsub.f32 %v516, %v1540
        %v2565 = vsub.f32 %v517, %v1541
        %v2566 = vsub.f32 %v518, %v1542
        %v2567 = vsub.f32 %v519, %v1543
        %v2568 = vsub.f32 %v520, %v1544
        %v2569 = vsub.f32 %v521, %v1545
        %v2570 = vsub.f32 %v522, %v1546
        %v2571 = vsub.f32 %v523, %v1547
        %v2572 = vsub.f32 %v524, %v1548
        %v2573 = vsub.f32 %v525, %v1549
        %v2574 = vsub.f32 %v526, %v1550
        %v2575 = vsub.f32 %v527, %v1551
        %v2576 = vsub.f32 %v528, %v1552
        %v2577 = vsub.f32 %v529, %v1553
        %v2578 = vsub.f32 %v530, %v1554
        %v2579 = vsub.f32 %v531, %v1555
        %v2580 = vsub.f32 %v532, %v1556
        %v2581 = vsub.f32 %v533, %v1557
        %v2582 = vsub.f32 %v534, %v1558
        %v2583 = vsub.f32 %v535, %v1559
        %v2584 = vsub.f32 %v536, %v1560
        %v2585 = vsub.f32 %v537, %v1561
        %v2586 = vsub.f32 %v538, %v1562
        %v2587 = vsub.f32 %v539, %v1563
        %v2588 = vsub.f32 %v540, %v1564
        %v2589 = vsub.f32 %v541, %v1565
        %v2590 = vsub.f32 %v542, %v1566
        %v2591 = vsub.f32 %v543, %v1567
        %v2592 = vsub.f32 %v544, %v1568
        %v2593 = vsub.f32 %v545, %v1569
        %v2594 = vsub.f32 %v546, %v1570
        %v2595 = vsub.f32 %v547, %v1571
        %v2596 = vsub.f32 %v548, %v1572
        %v2597 = vsub.f32 %v549, %v1573
        %v2598 = vsub.f32 %v550, %v1574
        %v2599 = vsub.f32 %v551, %v1575
        %v2600 = vsub.f32 %v552, %v1576
        %v2601 = vsub.f32 %v553, %v1577
        %v2602 = vsub.f32 %v554, %v1578
        %v2603 = vsub.f32 %v555, %v1579
        %v2604 = vsub.f32 %v556, %v1580
        %v2605 = vsub.f32 %v557, %v1581
        %v2606 = vsub.f32 %v558, %v1582
        %v2607 = vsub.f32 %v559, %v1583
        %v2608 = vsub.f32 %v560, %v1584
        %v2609 = vsub.f32 %v561, %v1585
        %v2610 = vsub.f32 %v562, %v1586
        %v2611 = vsub.f32 %v563, %v1587
        %v2612 = vsub.f32 %v564, %v1588
        %v2613 = vsub.f32 %v565, %v1589
        %v2614 = vsub.f32 %v566, %v1590
        %v2615 = vsub.f32 %v567, %v1591
        %v2616 = vsub.f32 %v568, %v1592
        %v2617 = vsub.f32 %v569, %v1593
        %v2618 = vsub.f32 %v570, %v1594
        %v2619 = vsub.f32 %v571, %v1595
        %v2620 = vsub.f32 %v572, %v1596
        %v2621 = vsub.f32 %v573, %v1597
        %v2622 = vsub.f32 %v574, %v1598
        %v2623 = vsub.f32 %v575, %v1599
        %v2624 = vsub.f32 %v576, %v1600
        %v2625 = vsub.f32 %v577, %v1601
        %v2626 = vsub.f32 %v578, %v1602
        %v2627 = vsub.f32 %v579, %v1603
        %v2628 = vsub.f32 %v580, %v1604
        %v2629 = vsub.f32 %v581, %v1605
        %v2630 = vsub.f32 %v582, %v1606
        %v2631 = vsub.f32 %v583, %v1607
        %v2632 = vsub.f32 %v584, %v1608
        %v2633 = vsub.f32 %v585, %v1609
        %v2634 = vsub.f32 %v586, %v1610
        %v2635 = vsub.f32 %v587, %v1611
        %v2636 = vsub.f32 %v588, %v1612
        %v2637 = vsub.f32 %v589, %v1613
        %v2638 = vsub.f32 %v590, %v1614
        %v2639 = vsub.f32 %v591, %v1615
        %v2640 = vsub.f32 %v592, %v1616
        %v2641 = vsub.f32 %v593, %v1617
        %v2642 = vsub.f32 %v594, %v1618
        %v2643 = vsub.f32 %v595, %v1619
        %v2644 = vsub.f32 %v596, %v1620
        %v2645 = vsub.f32 %v597, %v1621
        %v2646 = vsub.f32 %v598, %v1622
        %v2647 = vsub.f32 %v599, %v1623
        %v2648 = vsub.f32 %v600, %v1624
        %v2649 = vsub.f32 %v601, %v1625
        %v2650 = vsub.f32 %v602, %v1626
        %v2651 = vsub.f32 %v603, %v1627
        %v2652 = vsub.f32 %v604, %v1628
        %v2653 = vsub.f32 %v605, %v1629
        %v2654 = vsub.f32 %v606, %v1630
        %v2655 = vsub.f32 %v607, %v1631
        %v2656 = vsub.f32 %v608, %v1632
        %v2657 = vsub.f32 %v609, %v1633
        %v2658 = vsub.f32 %v610, %v1634
        %v2659 = vsub.f32 %v611, %v1635
        %v2660 = vsub.f32 %v612, %v1636
        %v2661 = vsub.f32 %v613, %v1637
        %v2662 = vsub.f32 %v614, %v1638
        %v2663 = vsub.f32 %v615, %v1639
        %v2664 = vsub.f32 %v616, %v1640
        %v2665 = vsub.f32 %v617, %v1641
        %v2666 = vsub.f32 %v618, %v1642
        %v2667 = vsub.f32 %v619, %v1643
        %v2668 = vsub.f32 %v620, %v1644
        %v2669 = vsub.f32 %v621, %v1645
        %v2670 = vsub.f32 %v622, %v1646
        %v2671 = vsub.f32 %v623, %v1647
        %v2672 = vsub.f32 %v624, %v1648
        %v2673 = vsub.f32 %v625, %v1649
        %v2674 = vsub.f32 %v626, %v1650
        %v2675 = vsub.f32 %v627, %v1651
        %v2676 = vsub.f32 %v628, %v1652
        %v2677 = vsub.f32 %v629, %v1653
        %v2678 = vsub.f32 %v630, %v1654
        %v2679 = vsub.f32 %v631, %v1655
        %v2680 = vsub.f32 %v632, %v1656
        %v2681 = vsub.f32 %v633, %v1657
        %v2682 = vsub.f32 %v634, %v1658
        %v2683 = vsub.f32 %v635, %v1659
        %v2684 = vsub.f32 %v636, %v1660
        %v2685 = vsub.f32 %v637, %v1661
        %v2686 = vsub.f32 %v638, %v1662
        %v2687 = vsub.f32 %v639, %v1663
        %v2688 = vsub.f32 %v640, %v1664
        %v2689 = vsub.f32 %v641, %v1665
        %v2690 = vsub.f32 %v642, %v1666
        %v2691 = vsub.f32 %v643, %v1667
        %v2692 = vsub.f32 %v644, %v1668
        %v2693 = vsub.f32 %v645, %v1669
        %v2694 = vsub.f32 %v646, %v1670
        %v2695 = vsub.f32 %v647, %v1671
        %v2696 = vsub.f32 %v648, %v1672
        %v2697 = vsub.f32 %v649, %v1673
        %v2698 = vsub.f32 %v650, %v1674
        %v2699 = vsub.f32 %v651, %v1675
        %v2700 = vsub.f32 %v652, %v1676
        %v2701 = vsub.f32 %v653, %v1677
        %v2702 = vsub.f32 %v654, %v1678
        %v2703 = vsub.f32 %v655, %v1679
        %v2704 = vsub.f32 %v656, %v1680
        %v2705 = vsub.f32 %v657, %v1681
        %v2706 = vsub.f32 %v658, %v1682
        %v2707 = vsub.f32 %v659, %v1683
        %v2708 = vsub.f32 %v660, %v1684
        %v2709 = vsub.f32 %v661, %v1685
        %v2710 = vsub.f32 %v662, %v1686
        %v2711 = vsub.f32 %v663, %v1687
        %v2712 = vsub.f32 %v664, %v1688
        %v2713 = vsub.f32 %v665, %v1689
        %v2714 = vsub.f32 %v666, %v1690
        %v2715 = vsub.f32 %v667, %v1691
        %v2716 = vsub.f32 %v668, %v1692
        %v2717 = vsub.f32 %v669, %v1693
        %v2718 = vsub.f32 %v670, %v1694
        %v2719 = vsub.f32 %v671, %v1695
        %v2720 = vsub.f32 %v672, %v1696
        %v2721 = vsub.f32 %v673, %v1697
        %v2722 = vsub.f32 %v674, %v1698
        %v2723 = vsub.f32 %v675, %v1699
        %v2724 = vsub.f32 %v676, %v1700
        %v2725 = vsub.f32 %v677, %v1701
        %v2726 = vsub.f32 %v678, %v1702
        %v2727 = vsub.f32 %v679, %v1703
        %v2728 = vsub.f32 %v680, %v1704
        %v2729 = vsub.f32 %v681, %v1705
        %v2730 = vsub.f32 %v682, %v1706
        %v2731 = vsub.f32 %v683, %v1707
        %v2732 = vsub.f32 %v684, %v1708
        %v2733 = vsub.f32 %v685, %v1709
        %v2734 = vsub.f32 %v686, %v1710
        %v2735 = vsub.f32 %v687, %v1711
        %v2736 = vsub.f32 %v688, %v1712
        %v2737 = vsub.f32 %v689, %v1713
        %v2738 = vsub.f32 %v690, %v1714
        %v2739 = vsub.f32 %v691, %v1715
        %v2740 = vsub.f32 %v692, %v1716
        %v2741 = vsub.f32 %v693, %v1717
        %v2742 = vsub.f32 %v694, %v1718
        %v2743 = vsub.f32 %v695, %v1719
        %v2744 = vsub.f32 %v696, %v1720
        %v2745 = vsub.f32 %v697, %v1721
        %v2746 = vsub.f32 %v698, %v1722
        %v2747 = vsub.f32 %v699, %v1723
        %v2748 = vsub.f32 %v700, %v1724
        %v2749 = vsub.f32 %v701, %v1725
        %v2750 = vsub.f32 %v702, %v1726
        %v2751 = vsub.f32 %v703, %v1727
        %v2752 = vsub.f32 %v704, %v1728
        %v2753 = vsub.f32 %v705, %v1729
        %v2754 = vsub.f32 %v706, %v1730
        %v2755 = vsub.f32 %v707, %v1731
        %v2756 = vsub.f32 %v708, %v1732
        %v2757 = vsub.f32 %v709, %v1733
        %v2758 = vsub.f32 %v710, %v1734
        %v2759 = vsub.f32 %v711, %v1735
        %v2760 = vsub.f32 %v712, %v1736
        %v2761 = vsub.f32 %v713, %v1737
        %v2762 = vsub.f32 %v714, %v1738
        %v2763 = vsub.f32 %v715, %v1739
        %v2764 = vsub.f32 %v716, %v1740
        %v2765 = vsub.f32 %v717, %v1741
        %v2766 = vsub.f32 %v718, %v1742
        %v2767 = vsub.f32 %v719, %v1743
        %v2768 = vsub.f32 %v720, %v1744
        %v2769 = vsub.f32 %v721, %v1745
        %v2770 = vsub.f32 %v722, %v1746
        %v2771 = vsub.f32 %v723, %v1747
        %v2772 = vsub.f32 %v724, %v1748
        %v2773 = vsub.f32 %v725, %v1749
        %v2774 = vsub.f32 %v726, %v1750
        %v2775 = vsub.f32 %v727, %v1751
        %v2776 = vsub.f32 %v728, %v1752
        %v2777 = vsub.f32 %v729, %v1753
        %v2778 = vsub.f32 %v730, %v1754
        %v2779 = vsub.f32 %v731, %v1755
        %v2780 = vsub.f32 %v732, %v1756
        %v2781 = vsub.f32 %v733, %v1757
        %v2782 = vsub.f32 %v734, %v1758
        %v2783 = vsub.f32 %v735, %v1759
        %v2784 = vsub.f32 %v736, %v1760
        %v2785 = vsub.f32 %v737, %v1761
        %v2786 = vsub.f32 %v738, %v1762
        %v2787 = vsub.f32 %v739, %v1763
        %v2788 = vsub.f32 %v740, %v1764
        %v2789 = vsub.f32 %v741, %v1765
        %v2790 = vsub.f32 %v742, %v1766
        %v2791 = vsub.f32 %v743, %v1767
        %v2792 = vsub.f32 %v744, %v1768
        %v2793 = vsub.f32 %v745, %v1769
        %v2794 = vsub.f32 %v746, %v1770
        %v2795 = vsub.f32 %v747, %v1771
        %v2796 = vsub.f32 %v748, %v1772
        %v2797 = vsub.f32 %v749, %v1773
        %v2798 = vsub.f32 %v750, %v1774
        %v2799 = vsub.f32 %v751, %v1775
        %v2800 = vsub.f32 %v752, %v1776
        %v2801 = vsub.f32 %v753, %v1777
        %v2802 = vsub.f32 %v754, %v1778
        %v2803 = vsub.f32 %v755, %v1779
        %v2804 = vsub.f32 %v756, %v1780
        %v2805 = vsub.f32 %v757, %v1781
        %v2806 = vsub.f32 %v758, %v1782
        %v2807 = vsub.f32 %v759, %v1783
        %v2808 = vsub.f32 %v760, %v1784
        %v2809 = vsub.f32 %v761, %v1785
        %v2810 = vsub.f32 %v762, %v1786
        %v2811 = vsub.f32 %v763, %v1787
        %v2812 = vsub.f32 %v764, %v1788
        %v2813 = vsub.f32 %v765, %v1789
        %v2814 = vsub.f32 %v766, %v1790
        %v2815 = vsub.f32 %v767, %v1791
        %v2816 = vsub.f32 %v768, %v1792
        %v2817 = vsub.f32 %v769, %v1793
        %v2818 = vsub.f32 %v770, %v1794
        %v2819 = vsub.f32 %v771, %v1795
        %v2820 = vsub.f32 %v772, %v1796
        %v2821 = vsub.f32 %v773, %v1797
        %v2822 = vsub.f32 %v774, %v1798
        %v2823 = vsub.f32 %v775, %v1799
        %v2824 = vsub.f32 %v776, %v1800
        %v2825 = vsub.f32 %v777, %v1801
        %v2826 = vsub.f32 %v778, %v1802
        %v2827 = vsub.f32 %v779, %v1803
        %v2828 = vsub.f32 %v780, %v1804
        %v2829 = vsub.f32 %v781, %v1805
        %v2830 = vsub.f32 %v782, %v1806
        %v2831 = vsub.f32 %v783, %v1807
        %v2832 = vsub.f32 %v784, %v1808
        %v2833 = vsub.f32 %v785, %v1809
        %v2834 = vsub.f32 %v786, %v1810
        %v2835 = vsub.f32 %v787, %v1811
        %v2836 = vsub.f32 %v788, %v1812
        %v2837 = vsub.f32 %v789, %v1813
        %v2838 = vsub.f32 %v790, %v1814
        %v2839 = vsub.f32 %v791, %v1815
        %v2840 = vsub.f32 %v792, %v1816
        %v2841 = vsub.f32 %v793, %v1817
        %v2842 = vsub.f32 %v794, %v1818
        %v2843 = vsub.f32 %v795, %v1819
        %v2844 = vsub.f32 %v796, %v1820
        %v2845 = vsub.f32 %v797, %v1821
        %v2846 = vsub.f32 %v798, %v1822
        %v2847 = vsub.f32 %v799, %v1823
        %v2848 = vsub.f32 %v800, %v1824
        %v2849 = vsub.f32 %v801, %v1825
        %v2850 = vsub.f32 %v802, %v1826
        %v2851 = vsub.f32 %v803, %v1827
        %v2852 = vsub.f32 %v804, %v1828
        %v2853 = vsub.f32 %v805, %v1829
        %v2854 = vsub.f32 %v806, %v1830
        %v2855 = vsub.f32 %v807, %v1831
        %v2856 = vsub.f32 %v808, %v1832
        %v2857 = vsub.f32 %v809, %v1833
        %v2858 = vsub.f32 %v810, %v1834
        %v2859 = vsub.f32 %v811, %v1835
        %v2860 = vsub.f32 %v812, %v1836
        %v2861 = vsub.f32 %v813, %v1837
        %v2862 = vsub.f32 %v814, %v1838
        %v2863 = vsub.f32 %v815, %v1839
        %v2864 = vsub.f32 %v816, %v1840
        %v2865 = vsub.f32 %v817, %v1841
        %v2866 = vsub.f32 %v818, %v1842
        %v2867 = vsub.f32 %v819, %v1843
        %v2868 = vsub.f32 %v820, %v1844
        %v2869 = vsub.f32 %v821, %v1845
        %v2870 = vsub.f32 %v822, %v1846
        %v2871 = vsub.f32 %v823, %v1847
        %v2872 = vsub.f32 %v824, %v1848
        %v2873 = vsub.f32 %v825, %v1849
        %v2874 = vsub.f32 %v826, %v1850
        %v2875 = vsub.f32 %v827, %v1851
        %v2876 = vsub.f32 %v828, %v1852
        %v2877 = vsub.f32 %v829, %v1853
        %v2878 = vsub.f32 %v830, %v1854
        %v2879 = vsub.f32 %v831, %v1855
        %v2880 = vsub.f32 %v832, %v1856
        %v2881 = vsub.f32 %v833, %v1857
        %v2882 = vsub.f32 %v834, %v1858
        %v2883 = vsub.f32 %v835, %v1859
        %v2884 = vsub.f32 %v836, %v1860
        %v2885 = vsub.f32 %v837, %v1861
        %v2886 = vsub.f32 %v838, %v1862
        %v2887 = vsub.f32 %v839, %v1863
        %v2888 = vsub.f32 %v840, %v1864
        %v2889 = vsub.f32 %v841, %v1865
        %v2890 = vsub.f32 %v842, %v1866
        %v2891 = vsub.f32 %v843, %v1867
        %v2892 = vsub.f32 %v844, %v1868
        %v2893 = vsub.f32 %v845, %v1869
        %v2894 = vsub.f32 %v846, %v1870
        %v2895 = vsub.f32 %v847, %v1871
        %v2896 = vsub.f32 %v848, %v1872
        %v2897 = vsub.f32 %v849, %v1873
        %v2898 = vsub.f32 %v850, %v1874
        %v2899 = vsub.f32 %v851, %v1875
        %v2900 = vsub.f32 %v852, %v1876
        %v2901 = vsub.f32 %v853, %v1877
        %v2902 = vsub.f32 %v854, %v1878
        %v2903 = vsub.f32 %v855, %v1879
        %v2904 = vsub.f32 %v856, %v1880
        %v2905 = vsub.f32 %v857, %v1881
        %v2906 = vsub.f32 %v858, %v1882
        %v2907 = vsub.f32 %v859, %v1883
        %v2908 = vsub.f32 %v860, %v1884
        %v2909 = vsub.f32 %v861, %v1885
        %v2910 = vsub.f32 %v862, %v1886
        %v2911 = vsub.f32 %v863, %v1887
        %v2912 = vsub.f32 %v864, %v1888
        %v2913 = vsub.f32 %v865, %v1889
        %v2914 = vsub.f32 %v866, %v1890
        %v2915 = vsub.f32 %v867, %v1891
        %v2916 = vsub.f32 %v868, %v1892
        %v2917 = vsub.f32 %v869, %v1893
        %v2918 = vsub.f32 %v870, %v1894
        %v2919 = vsub.f32 %v871, %v1895
        %v2920 = vsub.f32 %v872, %v1896
        %v2921 = vsub.f32 %v873, %v1897
        %v2922 = vsub.f32 %v874, %v1898
        %v2923 = vsub.f32 %v875, %v1899
        %v2924 = vsub.f32 %v876, %v1900
        %v2925 = vsub.f32 %v877, %v1901
        %v2926 = vsub.f32 %v878, %v1902
        %v2927 = vsub.f32 %v879, %v1903
        %v2928 = vsub.f32 %v880, %v1904
        %v2929 = vsub.f32 %v881, %v1905
        %v2930 = vsub.f32 %v882, %v1906
        %v2931 = vsub.f32 %v883, %v1907
        %v2932 = vsub.f32 %v884, %v1908
        %v2933 = vsub.f32 %v885, %v1909
        %v2934 = vsub.f32 %v886, %v1910
        %v2935 = vsub.f32 %v887, %v1911
        %v2936 = vsub.f32 %v888, %v1912
        %v2937 = vsub.f32 %v889, %v1913
        %v2938 = vsub.f32 %v890, %v1914
        %v2939 = vsub.f32 %v891, %v1915
        %v2940 = vsub.f32 %v892, %v1916
        %v2941 = vsub.f32 %v893, %v1917
        %v2942 = vsub.f32 %v894, %v1918
        %v2943 = vsub.f32 %v895, %v1919
        %v2944 = vsub.f32 %v896, %v1920
        %v2945 = vsub.f32 %v897, %v1921
        %v2946 = vsub.f32 %v898, %v1922
        %v2947 = vsub.f32 %v899, %v1923
        %v2948 = vsub.f32 %v900, %v1924
        %v2949 = vsub.f32 %v901, %v1925
        %v2950 = vsub.f32 %v902, %v1926
        %v2951 = vsub.f32 %v903, %v1927
        %v2952 = vsub.f32 %v904, %v1928
        %v2953 = vsub.f32 %v905, %v1929
        %v2954 = vsub.f32 %v906, %v1930
        %v2955 = vsub.f32 %v907, %v1931
        %v2956 = vsub.f32 %v908, %v1932
        %v2957 = vsub.f32 %v909, %v1933
        %v2958 = vsub.f32 %v910, %v1934
        %v2959 = vsub.f32 %v911, %v1935
        %v2960 = vsub.f32 %v912, %v1936
        %v2961 = vsub.f32 %v913, %v1937
        %v2962 = vsub.f32 %v914, %v1938
        %v2963 = vsub.f32 %v915, %v1939
        %v2964 = vsub.f32 %v916, %v1940
        %v2965 = vsub.f32 %v917, %v1941
        %v2966 = vsub.f32 %v918, %v1942
        %v2967 = vsub.f32 %v919, %v1943
        %v2968 = vsub.f32 %v920, %v1944
        %v2969 = vsub.f32 %v921, %v1945
        %v2970 = vsub.f32 %v922, %v1946
        %v2971 = vsub.f32 %v923, %v1947
        %v2972 = vsub.f32 %v924, %v1948
        %v2973 = vsub.f32 %v925, %v1949
        %v2974 = vsub.f32 %v926, %v1950
        %v2975 = vsub.f32 %v927, %v1951
        %v2976 = vsub.f32 %v928, %v1952
        %v2977 = vsub.f32 %v929, %v1953
        %v2978 = vsub.f32 %v930, %v1954
        %v2979 = vsub.f32 %v931, %v1955
        %v2980 = vsub.f32 %v932, %v1956
        %v2981 = vsub.f32 %v933, %v1957
        %v2982 = vsub.f32 %v934, %v1958
        %v2983 = vsub.f32 %v935, %v1959
        %v2984 = vsub.f32 %v936, %v1960
        %v2985 = vsub.f32 %v937, %v1961
        %v2986 = vsub.f32 %v938, %v1962
        %v2987 = vsub.f32 %v939, %v1963
        %v2988 = vsub.f32 %v940, %v1964
        %v2989 = vsub.f32 %v941, %v1965
        %v2990 = vsub.f32 %v942, %v1966
        %v2991 = vsub.f32 %v943, %v1967
        %v2992 = vsub.f32 %v944, %v1968
        %v2993 = vsub.f32 %v945, %v1969
        %v2994 = vsub.f32 %v946, %v1970
        %v2995 = vsub.f32 %v947, %v1971
        %v2996 = vsub.f32 %v948, %v1972
        %v2997 = vsub.f32 %v949, %v1973
        %v2998 = vsub.f32 %v950, %v1974
        %v2999 = vsub.f32 %v951, %v1975
        %v3000 = vsub.f32 %v952, %v1976
        %v3001 = vsub.f32 %v953, %v1977
        %v3002 = vsub.f32 %v954, %v1978
        %v3003 = vsub.f32 %v955, %v1979
        %v3004 = vsub.f32 %v956, %v1980
        %v3005 = vsub.f32 %v957, %v1981
        %v3006 = vsub.f32 %v958, %v1982
        %v3007 = vsub.f32 %v959, %v1983
        %v3008 = vsub.f32 %v960, %v1984
        %v3009 = vsub.f32 %v961, %v1985
        %v3010 = vsub.f32 %v962, %v1986
        %v3011 = vsub.f32 %v963, %v1987
        %v3012 = vsub.f32 %v964, %v1988
        %v3013 = vsub.f32 %v965, %v1989
        %v3014 = vsub.f32 %v966, %v1990
        %v3015 = vsub.f32 %v967, %v1991
        %v3016 = vsub.f32 %v968, %v1992
        %v3017 = vsub.f32 %v969, %v1993
        %v3018 = vsub.f32 %v970, %v1994
        %v3019 = vsub.f32 %v971, %v1995
        %v3020 = vsub.f32 %v972, %v1996
        %v3021 = vsub.f32 %v973, %v1997
        %v3022 = vsub.f32 %v974, %v1998
        %v3023 = vsub.f32 %v975, %v1999
        %v3024 = vsub.f32 %v976, %v2000
        %v3025 = vsub.f32 %v977, %v2001
        %v3026 = vsub.f32 %v978, %v2002
        %v3027 = vsub.f32 %v979, %v2003
        %v3028 = vsub.f32 %v980, %v2004
        %v3029 = vsub.f32 %v981, %v2005
        %v3030 = vsub.f32 %v982, %v2006
        %v3031 = vsub.f32 %v983, %v2007
        %v3032 = vsub.f32 %v984, %v2008
        %v3033 = vsub.f32 %v985, %v2009
        %v3034 = vsub.f32 %v986, %v2010
        %v3035 = vsub.f32 %v987, %v2011
        %v3036 = vsub.f32 %v988, %v2012
        %v3037 = vsub.f32 %v989, %v2013
        %v3038 = vsub.f32 %v990, %v2014
        %v3039 = vsub.f32 %v991, %v2015
        %v3040 = vsub.f32 %v992, %v2016
        %v3041 = vsub.f32 %v993, %v2017
        %v3042 = vsub.f32 %v994, %v2018
        %v3043 = vsub.f32 %v995, %v2019
        %v3044 = vsub.f32 %v996, %v2020
        %v3045 = vsub.f32 %v997, %v2021
        %v3046 = vsub.f32 %v998, %v2022
        %v3047 = vsub.f32 %v999, %v2023
        %v3048 = vsub.f32 %v1000, %v2024
        %v3049 = vsub.f32 %v1001, %v2025
        %v3050 = vsub.f32 %v1002, %v2026
        %v3051 = vsub.f32 %v1003, %v2027
        %v3052 = vsub.f32 %v1004, %v2028
        %v3053 = vsub.f32 %v1005, %v2029
        %v3054 = vsub.f32 %v1006, %v2030
        %v3055 = vsub.f32 %v1007, %v2031
        %v3056 = vsub.f32 %v1008, %v2032
        %v3057 = vsub.f32 %v1009, %v2033
        %v3058 = vsub.f32 %v1010, %v2034
        %v3059 = vsub.f32 %v1011, %v2035
        %v3060 = vsub.f32 %v1012, %v2036
        %v3061 = vsub.f32 %v1013, %v2037
        %v3062 = vsub.f32 %v1014, %v2038
        %v3063 = vsub.f32 %v1015, %v2039
        %v3064 = vsub.f32 %v1016, %v2040
        %v3065 = vsub.f32 %v1017, %v2041
        %v3066 = vsub.f32 %v1018, %v2042
        %v3067 = vsub.f32 %v1019, %v2043
        %v3068 = vsub.f32 %v1020, %v2044
        %v3069 = vsub.f32 %v1021, %v2045
        %v3070 = vsub.f32 %v1022, %v2046
        %v3071 = vsub.f32 %v1023, %v2047
        %v3072 = vsub.f32 %v1024, %v2048
        %v3073 = vsub.f32 %v1025, %v2049
        %v3074 = vsub.f32 %v1026, %v2050
        %v3075 = vsub.f32 %v1027, %v2051
        %v3076 = vsub.f32 %v1028, %v2052
        %v3077 = vsub.f32 %v1029, %v2053
        %v3078 = vsub.f32 %v1030, %v2054
        %v3079 = vsub.f32 %v1031, %v2055
        %v3080 = vsub.f32 %v1032, %v2056
        %v3081 = vsub.f32 %v1033, %v2057
        %v3082 = vsub.f32 %v1034, %v2058
        %v3083 = vsub.f32 %v1035, %v2059
        %v3084 = vsub.f32 %v1036, %v2060
        %v3085 = vsub.f32 %v1037, %v2061
        %v3086 = vsub.f32 %v1038, %v2062
        %v3087 = vsub.f32 %v1039, %v2063
        %v3088 = vsub.f32 %v1040, %v2064
        %v3089 = vsub.f32 %v1041, %v2065
        %v3090 = vsub.f32 %v1042, %v2066
        %v3091 = vsub.f32 %v1043, %v2067
        %v3092 = vsub.f32 %v1044, %v2068
        %v3093 = vsub.f32 %v1045, %v2069
        %v3094 = vsub.f32 %v1046, %v2070
        %v3095 = vsub.f32 %v1047, %v2071
        %v3096 = vsub.f32 %v1048, %v2072
        %v3097 = vsub.f32 %v1049, %v2073
        %v3098 = vsub.f32 %v1050, %v2074
        %v3099 = vsub.f32 %v1051, %v2075
        %v3100 = vsub.f32 %v1052, %v2076
        %v3101 = vsub.f32 %v1053, %v2077
        %v3102 = vsub.f32 %v1054, %v2078
        %v3103 = vsub.f32 %v1055, %v2079
        %v3104 = vsub.f32 %v1056, %v2080
        %v3105 = vsub.f32 %v1057, %v2081
        %v3106 = vsub.f32 %v1058, %v2082
        %v3107 = vsub.f32 %v1059, %v2083
        %v3108 = vsub.f32 %v1060, %v2084
        %v3109 = vsub.f32 %v1061, %v2085
        %v3110 = vsub.f32 %v1062, %v2086
        %v3111 = vsub.f32 %v1063, %v2087
        %v3112 = vsub.f32 %v1064, %v2088
        %v3113 = vsub.f32 %v1065, %v2089
        %v3114 = vsub.f32 %v1066, %v2090
        %v3115 = vsub.f32 %v1067, %v2091
        %v3116 = vsub.f32 %v1068, %v2092
        %v3117 = vsub.f32 %v1069, %v2093
        %v3118 = vsub.f32 %v1070, %v2094
        %v3119 = vsub.f32 %v1071, %v2095
        %v3120 = vsub.f32 %v1072, %v2096
        %v3121 = vsub.f32 %v1073, %v2097
        %v3122 = vsub.f32 %v1074, %v2098
        %v3123 = vsub.f32 %v1075, %v2099
        %v3124 = vsub.f32 %v1076, %v2100
        %v3125 = vsub.f32 %v1077, %v2101
        %v3126 = vsub.f32 %v1078, %v2102
        %v3127 = vsub.f32 %v1079, %v2103
        %v3128 = vsub.f32 %v1080, %v2104
        %v3129 = vsub.f32 %v1081, %v2105
        %v3130 = vsub.f32 %v1082, %v2106
        %v3131 = vsub.f32 %v1083, %v2107
        %v3132 = vsub.f32 %v1084, %v2108
        %v3133 = vsub.f32 %v1085, %v2109
        %v3134 = vsub.f32 %v1086, %v2110
        %v3135 = vsub.f32 %v1087, %v2111
        %v3136 = vsub.f32 %v1088, %v2112
        %v3137 = vsub.f32 %v1089, %v2113
        %v3138 = vsub.f32 %v1090, %v2114
        %v3139 = vsub.f32 %v1091, %v2115
        %v3140 = vsub.f32 %v1092, %v2116
        %v3141 = vsub.f32 %v1093, %v2117
        %v3142 = vsub.f32 %v1094, %v2118
        %v3143 = vsub.f32 %v1095, %v2119
        %v3144 = vsub.f32 %v1096, %v2120
        %v3145 = vsub.f32 %v1097, %v2121
        %v3146 = vsub.f32 %v1098, %v2122
        %v3147 = vsub.f32 %v1099, %v2123
        %v3148 = vsub.f32 %v1100, %v2124
        %v3149 = vsub.f32 %v1101, %v2125
        %v3150 = vsub.f32 %v1102, %v2126
        %v3151 = vsub.f32 %v1103, %v2127
        %v3152 = vsub.f32 %v1104, %v2128
        %v3153 = vsub.f32 %v1105, %v2129
        %v3154 = vsub.f32 %v1106, %v2130
        %v3155 = vsub.f32 %v1107, %v2131
        %v3156 = vsub.f32 %v1108, %v2132
        %v3157 = vsub.f32 %v1109, %v2133
        %v3158 = vsub.f32 %v1110, %v2134
        %v3159 = vsub.f32 %v1111, %v2135
        %v3160 = vsub.f32 %v1112, %v2136
        %v3161 = vsub.f32 %v1113, %v2137
        %v3162 = vsub.f32 %v1114, %v2138
        %v3163 = vsub.f32 %v1115, %v2139
        %v3164 = vsub.f32 %v1116, %v2140
        %v3165 = vsub.f32 %v1117, %v2141
        %v3166 = vsub.f32 %v1118, %v2142
        %v3167 = vsub.f32 %v1119, %v2143
        %v3168 = vsub.f32 %v1120, %v2144
        %v3169 = vsub.f32 %v1121, %v2145
        %v3170 = vsub.f32 %v1122, %v2146
        %v3171 = vsub.f32 %v1123, %v2147
        %v3172 = vsub.f32 %v1124, %v2148
        %v3173 = vsub.f32 %v1125, %v2149
        %v3174 = vsub.f32 %v1126, %v2150
        %v3175 = vsub.f32 %v1127, %v2151
        %v3176 = vsub.f32 %v1128, %v2152
        %v3177 = vsub.f32 %v1129, %v2153
        %v3178 = vsub.f32 %v1130, %v2154
        %v3179 = vsub.f32 %v1131, %v2155
        %v3180 = vsub.f32 %v1132, %v2156
        %v3181 = vsub.f32 %v1133, %v2157
        %v3182 = vsub.f32 %v1134, %v2158
        %v3183 = vsub.f32 %v1135, %v2159
        %v3184 = vsub.f32 %v1136, %v2160
        %v3185 = vsub.f32 %v1137, %v2161
        %v3186 = vsub.f32 %v1138, %v2162
        %v3187 = vsub.f32 %v1139, %v2163
        %v3188 = vsub.f32 %v1140, %v2164
        %v3189 = vsub.f32 %v1141, %v2165
        %v3190 = vsub.f32 %v1142, %v2166
        %v3191 = vsub.f32 %v1143, %v2167
        %v3192 = vsub.f32 %v1144, %v2168
        %v3193 = vsub.f32 %v1145, %v2169
        %v3194 = vsub.f32 %v1146, %v2170
        %v3195 = vsub.f32 %v1147, %v2171
        %v3196 = vsub.f32 %v1148, %v2172
        %v3197 = vsub.f32 %v1149, %v2173
        %v3198 = vsub.f32 %v1150, %v2174
        %v3199 = vsub.f32 %v1151, %v2175
        %v3200 = vsub.f32 %v1152, %v2176
        %v3201 = vsub.f32 %v1153, %v2177
        %v3202 = vsub.f32 %v1154, %v2178
        %v3203 = vsub.f32 %v1155, %v2179
        %v3204 = vsub.f32 %v1156, %v2180
        %v3205 = vsub.f32 %v1157, %v2181
        %v3206 = vsub.f32 %v1158, %v2182
        %v3207 = vsub.f32 %v1159, %v2183
        %v3208 = vsub.f32 %v1160, %v2184
        %v3209 = vsub.f32 %v1161, %v2185
        %v3210 = vsub.f32 %v1162, %v2186
        %v3211 = vsub.f32 %v1163, %v2187
        %v3212 = vsub.f32 %v1164, %v2188
        %v3213 = vsub.f32 %v1165, %v2189
        %v3214 = vsub.f32 %v1166, %v2190
        %v3215 = vsub.f32 %v1167, %v2191
        %v3216 = vsub.f32 %v1168, %v2192
        %v3217 = vsub.f32 %v1169, %v2193
        %v3218 = vsub.f32 %v1170, %v2194
        %v3219 = vsub.f32 %v1171, %v2195
        %v3220 = vsub.f32 %v1172, %v2196
        %v3221 = vsub.f32 %v1173, %v2197
        %v3222 = vsub.f32 %v1174, %v2198
        %v3223 = vsub.f32 %v1175, %v2199
        %v3224 = vsub.f32 %v1176, %v2200
        %v3225 = vsub.f32 %v1177, %v2201
        %v3226 = vsub.f32 %v1178, %v2202
        %v3227 = vsub.f32 %v1179, %v2203
        %v3228 = vsub.f32 %v1180, %v2204
        %v3229 = vsub.f32 %v1181, %v2205
        %v3230 = vsub.f32 %v1182, %v2206
        %v3231 = vsub.f32 %v1183, %v2207
        %v3232 = vsub.f32 %v1184, %v2208
        %v3233 = vsub.f32 %v1185, %v2209
        %v3234 = vsub.f32 %v1186, %v2210
        %v3235 = vsub.f32 %v1187, %v2211
        %v3236 = vsub.f32 %v1188, %v2212
        %v3237 = vsub.f32 %v1189, %v2213
        %v3238 = vsub.f32 %v1190, %v2214
        %v3239 = vsub.f32 %v1191, %v2215
        %v3240 = vsub.f32 %v1192, %v2216
        %v3241 = vsub.f32 %v1193, %v2217
        %v3242 = vsub.f32 %v1194, %v2218
        %v3243 = vsub.f32 %v1195, %v2219
        %v3244 = vsub.f32 %v1196, %v2220
        %v3245 = vsub.f32 %v1197, %v2221
        %v3246 = vsub.f32 %v1198, %v2222
        %v3247 = vsub.f32 %v1199, %v2223
        %v3248 = vsub.f32 %v1200, %v2224
        %v3249 = vsub.f32 %v1201, %v2225
        %v3250 = vsub.f32 %v1202, %v2226
        %v3251 = vsub.f32 %v1203, %v2227
        %v3252 = vsub.f32 %v1204, %v2228
        %v3253 = vsub.f32 %v1205, %v2229
        %v3254 = vsub.f32 %v1206, %v2230
        %v3255 = vsub.f32 %v1207, %v2231
        %v3256 = vsub.f32 %v1208, %v2232
        %v3257 = vsub.f32 %v1209, %v2233
        %v3258 = vsub.f32 %v1210, %v2234
        %v3259 = vsub.f32 %v1211, %v2235
        %v3260 = vsub.f32 %v1212, %v2236
        %v3261 = vsub.f32 %v1213, %v2237
        %v3262 = vsub.f32 %v1214, %v2238
        %v3263 = vsub.f32 %v1215, %v2239
        %v3264 = vsub.f32 %v1216, %v2240
        %v3265 = vsub.f32 %v1217, %v2241
        %v3266 = vsub.f32 %v1218, %v2242
        %v3267 = vsub.f32 %v1219, %v2243
        %v3268 = vsub.f32 %v1220, %v2244
        %v3269 = vsub.f32 %v1221, %v2245
        %v3270 = vsub.f32 %v1222, %v2246
        %v3271 = vsub.f32 %v1223, %v2247
        %v3272 = vsub.f32 %v1224, %v2248
        %v3273 = vsub.f32 %v1225, %v2249
        %v3274 = vsub.f32 %v1226, %v2250
        %v3275 = vsub.f32 %v1227, %v2251
        %v3276 = vsub.f32 %v1228, %v2252
        %v3277 = vsub.f32 %v1229, %v2253
        %v3278 = vsub.f32 %v1230, %v2254
        %v3279 = vsub.f32 %v1231, %v2255
        %v3280 = vsub.f32 %v1232, %v2256
        %v3281 = vsub.f32 %v1233, %v2257
        %v3282 = vsub.f32 %v1234, %v2258
        %v3283 = vsub.f32 %v1235, %v2259
        %v3284 = vsub.f32 %v1236, %v2260
        %v3285 = vsub.f32 %v1237, %v2261
        %v3286 = vsub.f32 %v1238, %v2262
        %v3287 = vsub.f32 %v1239, %v2263
        %v3288 = vsub.f32 %v1240, %v2264
        %v3289 = vsub.f32 %v1241, %v2265
        %v3290 = vsub.f32 %v1242, %v2266
        %v3291 = vsub.f32 %v1243, %v2267
        %v3292 = vsub.f32 %v1244, %v2268
        %v3293 = vsub.f32 %v1245, %v2269
        %v3294 = vsub.f32 %v1246, %v2270
        %v3295 = vsub.f32 %v1247, %v2271
        %v3296 = vmul.f32 %v2272, %v2272
        %v3297 = vmul.f32 %v2273, %v2273
        %v3298 = vmul.f32 %v2274, %v2274
        %v3299 = vmul.f32 %v2275, %v2275
        %v3300 = vmul.f32 %v2276, %v2276
        %v3301 = vmul.f32 %v2277, %v2277
        %v3302 = vmul.f32 %v2278, %v2278
        %v3303 = vmul.f32 %v2279, %v2279
        %v3304 = vmul.f32 %v2280, %v2280
        %v3305 = vmul.f32 %v2281, %v2281
        %v3306 = vmul.f32 %v2282, %v2282
        %v3307 = vmul.f32 %v2283, %v2283
        %v3308 = vmul.f32 %v2284, %v2284
        %v3309 = vmul.f32 %v2285, %v2285
        %v3310 = vmul.f32 %v2286, %v2286
        %v3311 = vmul.f32 %v2287, %v2287
        %v3312 = vmul.f32 %v2288, %v2288
        %v3313 = vmul.f32 %v2289, %v2289
        %v3314 = vmul.f32 %v2290, %v2290
        %v3315 = vmul.f32 %v2291, %v2291
        %v3316 = vmul.f32 %v2292, %v2292
        %v3317 = vmul.f32 %v2293, %v2293
        %v3318 = vmul.f32 %v2294, %v2294
        %v3319 = vmul.f32 %v2295, %v2295
        %v3320 = vmul.f32 %v2296, %v2296
        %v3321 = vmul.f32 %v2297, %v2297
        %v3322 = vmul.f32 %v2298, %v2298
        %v3323 = vmul.f32 %v2299, %v2299
        %v3324 = vmul.f32 %v2300, %v2300
        %v3325 = vmul.f32 %v2301, %v2301
        %v3326 = vmul.f32 %v2302, %v2302
        %v3327 = vmul.f32 %v2303, %v2303
        %v3328 = vmul.f32 %v2304, %v2304
        %v3329 = vmul.f32 %v2305, %v2305
        %v3330 = vmul.f32 %v2306, %v2306
        %v3331 = vmul.f32 %v2307, %v2307
        %v3332 = vmul.f32 %v2308, %v2308
        %v3333 = vmul.f32 %v2309, %v2309
        %v3334 = vmul.f32 %v2310, %v2310
        %v3335 = vmul.f32 %v2311, %v2311
        %v3336 = vmul.f32 %v2312, %v2312
        %v3337 = vmul.f32 %v2313, %v2313
        %v3338 = vmul.f32 %v2314, %v2314
        %v3339 = vmul.f32 %v2315, %v2315
        %v3340 = vmul.f32 %v2316, %v2316
        %v3341 = vmul.f32 %v2317, %v2317
        %v3342 = vmul.f32 %v2318, %v2318
        %v3343 = vmul.f32 %v2319, %v2319
        %v3344 = vmul.f32 %v2320, %v2320
        %v3345 = vmul.f32 %v2321, %v2321
        %v3346 = vmul.f32 %v2322, %v2322
        %v3347 = vmul.f32 %v2323, %v2323
        %v3348 = vmul.f32 %v2324, %v2324
        %v3349 = vmul.f32 %v2325, %v2325
        %v3350 = vmul.f32 %v2326, %v2326
        %v3351 = vmul.f32 %v2327, %v2327
        %v3352 = vmul.f32 %v2328, %v2328
        %v3353 = vmul.f32 %v2329, %v2329
        %v3354 = vmul.f32 %v2330, %v2330
        %v3355 = vmul.f32 %v2331, %v2331
        %v3356 = vmul.f32 %v2332, %v2332
        %v3357 = vmul.f32 %v2333, %v2333
        %v3358 = vmul.f32 %v2334, %v2334
        %v3359 = vmul.f32 %v2335, %v2335
        %v3360 = vmul.f32 %v2336, %v2336
        %v3361 = vmul.f32 %v2337, %v2337
        %v3362 = vmul.f32 %v2338, %v2338
        %v3363 = vmul.f32 %v2339, %v2339
        %v3364 = vmul.f32 %v2340, %v2340
        %v3365 = vmul.f32 %v2341, %v2341
        %v3366 = vmul.f32 %v2342, %v2342
        %v3367 = vmul.f32 %v2343, %v2343
        %v3368 = vmul.f32 %v2344, %v2344
        %v3369 = vmul.f32 %v2345, %v2345
        %v3370 = vmul.f32 %v2346, %v2346
        %v3371 = vmul.f32 %v2347, %v2347
        %v3372 = vmul.f32 %v2348, %v2348
        %v3373 = vmul.f32 %v2349, %v2349
        %v3374 = vmul.f32 %v2350, %v2350
        %v3375 = vmul.f32 %v2351, %v2351
        %v3376 = vmul.f32 %v2352, %v2352
        %v3377 = vmul.f32 %v2353, %v2353
        %v3378 = vmul.f32 %v2354, %v2354
        %v3379 = vmul.f32 %v2355, %v2355
        %v3380 = vmul.f32 %v2356, %v2356
        %v3381 = vmul.f32 %v2357, %v2357
        %v3382 = vmul.f32 %v2358, %v2358
        %v3383 = vmul.f32 %v2359, %v2359
        %v3384 = vmul.f32 %v2360, %v2360
        %v3385 = vmul.f32 %v2361, %v2361
        %v3386 = vmul.f32 %v2362, %v2362
        %v3387 = vmul.f32 %v2363, %v2363
        %v3388 = vmul.f32 %v2364, %v2364
        %v3389 = vmul.f32 %v2365, %v2365
        %v3390 = vmul.f32 %v2366, %v2366
        %v3391 = vmul.f32 %v2367, %v2367
        %v3392 = vmul.f32 %v2368, %v2368
        %v3393 = vmul.f32 %v2369, %v2369
        %v3394 = vmul.f32 %v2370, %v2370
        %v3395 = vmul.f32 %v2371, %v2371
        %v3396 = vmul.f32 %v2372, %v2372
        %v3397 = vmul.f32 %v2373, %v2373
        %v3398 = vmul.f32 %v2374, %v2374
        %v3399 = vmul.f32 %v2375, %v2375
        %v3400 = vmul.f32 %v2376, %v2376
        %v3401 = vmul.f32 %v2377, %v2377
        %v3402 = vmul.f32 %v2378, %v2378
        %v3403 = vmul.f32 %v2379, %v2379
        %v3404 = vmul.f32 %v2380, %v2380
        %v3405 = vmul.f32 %v2381, %v2381
        %v3406 = vmul.f32 %v2382, %v2382
        %v3407 = vmul.f32 %v2383, %v2383
        %v3408 = vmul.f32 %v2384, %v2384
        %v3409 = vmul.f32 %v2385, %v2385
        %v3410 = vmul.f32 %v2386, %v2386
        %v3411 = vmul.f32 %v2387, %v2387
        %v3412 = vmul.f32 %v2388, %v2388
        %v3413 = vmul.f32 %v2389, %v2389
        %v3414 = vmul.f32 %v2390, %v2390
        %v3415 = vmul.f32 %v2391, %v2391
        %v3416 = vmul.f32 %v2392, %v2392
        %v3417 = vmul.f32 %v2393, %v2393
        %v3418 = vmul.f32 %v2394, %v2394
        %v3419 = vmul.f32 %v2395, %v2395
        %v3420 = vmul.f32 %v2396, %v2396
        %v3421 = vmul.f32 %v2397, %v2397
        %v3422 = vmul.f32 %v2398, %v2398
        %v3423 = vmul.f32 %v2399, %v2399
        %v3424 = vmul.f32 %v2400, %v2400
        %v3425 = vmul.f32 %v2401, %v2401
        %v3426 = vmul.f32 %v2402, %v2402
        %v3427 = vmul.f32 %v2403, %v2403
        %v3428 = vmul.f32 %v2404, %v2404
        %v3429 = vmul.f32 %v2405, %v2405
        %v3430 = vmul.f32 %v2406, %v2406
        %v3431 = vmul.f32 %v2407, %v2407
        %v3432 = vmul.f32 %v2408, %v2408
        %v3433 = vmul.f32 %v2409, %v2409
        %v3434 = vmul.f32 %v2410, %v2410
        %v3435 = vmul.f32 %v2411, %v2411
        %v3436 = vmul.f32 %v2412, %v2412
        %v3437 = vmul.f32 %v2413, %v2413
        %v3438 = vmul.f32 %v2414, %v2414
        %v3439 = vmul.f32 %v2415, %v2415
        %v3440 = vmul.f32 %v2416, %v2416
        %v3441 = vmul.f32 %v2417, %v2417
        %v3442 = vmul.f32 %v2418, %v2418
        %v3443 = vmul.f32 %v2419, %v2419
        %v3444 = vmul.f32 %v2420, %v2420
        %v3445 = vmul.f32 %v2421, %v2421
        %v3446 = vmul.f32 %v2422, %v2422
        %v3447 = vmul.f32 %v2423, %v2423
        %v3448 = vmul.f32 %v2424, %v2424
        %v3449 = vmul.f32 %v2425, %v2425
        %v3450 = vmul.f32 %v2426, %v2426
        %v3451 = vmul.f32 %v2427, %v2427
        %v3452 = vmul.f32 %v2428, %v2428
        %v3453 = vmul.f32 %v2429, %v2429
        %v3454 = vmul.f32 %v2430, %v2430
        %v3455 = vmul.f32 %v2431, %v2431
        %v3456 = vmul.f32 %v2432, %v2432
        %v3457 = vmul.f32 %v2433, %v2433
        %v3458 = vmul.f32 %v2434, %v2434
        %v3459 = vmul.f32 %v2435, %v2435
        %v3460 = vmul.f32 %v2436, %v2436
        %v3461 = vmul.f32 %v2437, %v2437
        %v3462 = vmul.f32 %v2438, %v2438
        %v3463 = vmul.f32 %v2439, %v2439
        %v3464 = vmul.f32 %v2440, %v2440
        %v3465 = vmul.f32 %v2441, %v2441
        %v3466 = vmul.f32 %v2442, %v2442
        %v3467 = vmul.f32 %v2443, %v2443
        %v3468 = vmul.f32 %v2444, %v2444
        %v3469 = vmul.f32 %v2445, %v2445
        %v3470 = vmul.f32 %v2446, %v2446
        %v3471 = vmul.f32 %v2447, %v2447
        %v3472 = vmul.f32 %v2448, %v2448
        %v3473 = vmul.f32 %v2449, %v2449
        %v3474 = vmul.f32 %v2450, %v2450
        %v3475 = vmul.f32 %v2451, %v2451
        %v3476 = vmul.f32 %v2452, %v2452
        %v3477 = vmul.f32 %v2453, %v2453
        %v3478 = vmul.f32 %v2454, %v2454
        %v3479 = vmul.f32 %v2455, %v2455
        %v3480 = vmul.f32 %v2456, %v2456
        %v3481 = vmul.f32 %v2457, %v2457
        %v3482 = vmul.f32 %v2458, %v2458
        %v3483 = vmul.f32 %v2459, %v2459
        %v3484 = vmul.f32 %v2460, %v2460
        %v3485 = vmul.f32 %v2461, %v2461
        %v3486 = vmul.f32 %v2462, %v2462
        %v3487 = vmul.f32 %v2463, %v2463
        %v3488 = vmul.f32 %v2464, %v2464
        %v3489 = vmul.f32 %v2465, %v2465
        %v3490 = vmul.f32 %v2466, %v2466
        %v3491 = vmul.f32 %v2467, %v2467
        %v3492 = vmul.f32 %v2468, %v2468
        %v3493 = vmul.f32 %v2469, %v2469
        %v3494 = vmul.f32 %v2470, %v2470
        %v3495 = vmul.f32 %v2471, %v2471
        %v3496 = vmul.f32 %v2472, %v2472
        %v3497 = vmul.f32 %v2473, %v2473
        %v3498 = vmul.f32 %v2474, %v2474
        %v3499 = vmul.f32 %v2475, %v2475
        %v3500 = vmul.f32 %v2476, %v2476
        %v3501 = vmul.f32 %v2477, %v2477
        %v3502 = vmul.f32 %v2478, %v2478
        %v3503 = vmul.f32 %v2479, %v2479
        %v3504 = vmul.f32 %v2480, %v2480
        %v3505 = vmul.f32 %v2481, %v2481
        %v3506 = vmul.f32 %v2482, %v2482
        %v3507 = vmul.f32 %v2483, %v2483
        %v3508 = vmul.f32 %v2484, %v2484
        %v3509 = vmul.f32 %v2485, %v2485
        %v3510 = vmul.f32 %v2486, %v2486
        %v3511 = vmul.f32 %v2487, %v2487
        %v3512 = vmul.f32 %v2488, %v2488
        %v3513 = vmul.f32 %v2489, %v2489
        %v3514 = vmul.f32 %v2490, %v2490
        %v3515 = vmul.f32 %v2491, %v2491
        %v3516 = vmul.f32 %v2492, %v2492
        %v3517 = vmul.f32 %v2493, %v2493
        %v3518 = vmul.f32 %v2494, %v2494
        %v3519 = vmul.f32 %v2495, %v2495
        %v3520 = vmul.f32 %v2496, %v2496
        %v3521 = vmul.f32 %v2497, %v2497
        %v3522 = vmul.f32 %v2498, %v2498
        %v3523 = vmul.f32 %v2499, %v2499
        %v3524 = vmul.f32 %v2500, %v2500
        %v3525 = vmul.f32 %v2501, %v2501
        %v3526 = vmul.f32 %v2502, %v2502
        %v3527 = vmul.f32 %v2503, %v2503
        %v3528 = vmul.f32 %v2504, %v2504
        %v3529 = vmul.f32 %v2505, %v2505
        %v3530 = vmul.f32 %v2506, %v2506
        %v3531 = vmul.f32 %v2507, %v2507
        %v3532 = vmul.f32 %v2508, %v2508
        %v3533 = vmul.f32 %v2509, %v2509
        %v3534 = vmul.f32 %v2510, %v2510
        %v3535 = vmul.f32 %v2511, %v2511
        %v3536 = vmul.f32 %v2512, %v2512
        %v3537 = vmul.f32 %v2513, %v2513
        %v3538 = vmul.f32 %v2514, %v2514
        %v3539 = vmul.f32 %v2515, %v2515
        %v3540 = vmul.f32 %v2516, %v2516
        %v3541 = vmul.f32 %v2517, %v2517
        %v3542 = vmul.f32 %v2518, %v2518
        %v3543 = vmul.f32 %v2519, %v2519
        %v3544 = vmul.f32 %v2520, %v2520
        %v3545 = vmul.f32 %v2521, %v2521
        %v3546 = vmul.f32 %v2522, %v2522
        %v3547 = vmul.f32 %v2523, %v2523
        %v3548 = vmul.f32 %v2524, %v2524
        %v3549 = vmul.f32 %v2525, %v2525
        %v3550 = vmul.f32 %v2526, %v2526
        %v3551 = vmul.f32 %v2527, %v2527
        %v3552 = vmul.f32 %v2528, %v2528
        %v3553 = vmul.f32 %v2529, %v2529
        %v3554 = vmul.f32 %v2530, %v2530
        %v3555 = vmul.f32 %v2531, %v2531
        %v3556 = vmul.f32 %v2532, %v2532
        %v3557 = vmul.f32 %v2533, %v2533
        %v3558 = vmul.f32 %v2534, %v2534
        %v3559 = vmul.f32 %v2535, %v2535
        %v3560 = vmul.f32 %v2536, %v2536
        %v3561 = vmul.f32 %v2537, %v2537
        %v3562 = vmul.f32 %v2538, %v2538
        %v3563 = vmul.f32 %v2539, %v2539
        %v3564 = vmul.f32 %v2540, %v2540
        %v3565 = vmul.f32 %v2541, %v2541
        %v3566 = vmul.f32 %v2542, %v2542
        %v3567 = vmul.f32 %v2543, %v2543
        %v3568 = vmul.f32 %v2544, %v2544
        %v3569 = vmul.f32 %v2545, %v2545
        %v3570 = vmul.f32 %v2546, %v2546
        %v3571 = vmul.f32 %v2547, %v2547
        %v3572 = vmul.f32 %v2548, %v2548
        %v3573 = vmul.f32 %v2549, %v2549
        %v3574 = vmul.f32 %v2550, %v2550
        %v3575 = vmul.f32 %v2551, %v2551
        %v3576 = vmul.f32 %v2552, %v2552
        %v3577 = vmul.f32 %v2553, %v2553
        %v3578 = vmul.f32 %v2554, %v2554
        %v3579 = vmul.f32 %v2555, %v2555
        %v3580 = vmul.f32 %v2556, %v2556
        %v3581 = vmul.f32 %v2557, %v2557
        %v3582 = vmul.f32 %v2558, %v2558
        %v3583 = vmul.f32 %v2559, %v2559
        %v3584 = vmul.f32 %v2560, %v2560
        %v3585 = vmul.f32 %v2561, %v2561
        %v3586 = vmul.f32 %v2562, %v2562
        %v3587 = vmul.f32 %v2563, %v2563
        %v3588 = vmul.f32 %v2564, %v2564
        %v3589 = vmul.f32 %v2565, %v2565
        %v3590 = vmul.f32 %v2566, %v2566
        %v3591 = vmul.f32 %v2567, %v2567
        %v3592 = vmul.f32 %v2568, %v2568
        %v3593 = vmul.f32 %v2569, %v2569
        %v3594 = vmul.f32 %v2570, %v2570
        %v3595 = vmul.f32 %v2571, %v2571
        %v3596 = vmul.f32 %v2572, %v2572
        %v3597 = vmul.f32 %v2573, %v2573
        %v3598 = vmul.f32 %v2574, %v2574
        %v3599 = vmul.f32 %v2575, %v2575
        %v3600 = vmul.f32 %v2576, %v2576
        %v3601 = vmul.f32 %v2577, %v2577
        %v3602 = vmul.f32 %v2578, %v2578
        %v3603 = vmul.f32 %v2579, %v2579
        %v3604 = vmul.f32 %v2580, %v2580
        %v3605 = vmul.f32 %v2581, %v2581
        %v3606 = vmul.f32 %v2582, %v2582
        %v3607 = vmul.f32 %v2583, %v2583
        %v3608 = vmul.f32 %v2584, %v2584
        %v3609 = vmul.f32 %v2585, %v2585
        %v3610 = vmul.f32 %v2586, %v2586
        %v3611 = vmul.f32 %v2587, %v2587
        %v3612 = vmul.f32 %v2588, %v2588
        %v3613 = vmul.f32 %v2589, %v2589
        %v3614 = vmul.f32 %v2590, %v2590
        %v3615 = vmul.f32 %v2591, %v2591
        %v3616 = vmul.f32 %v2592, %v2592
        %v3617 = vmul.f32 %v2593, %v2593
        %v3618 = vmul.f32 %v2594, %v2594
        %v3619 = vmul.f32 %v2595, %v2595
        %v3620 = vmul.f32 %v2596, %v2596
        %v3621 = vmul.f32 %v2597, %v2597
        %v3622 = vmul.f32 %v2598, %v2598
        %v3623 = vmul.f32 %v2599, %v2599
        %v3624 = vmul.f32 %v2600, %v2600
        %v3625 = vmul.f32 %v2601, %v2601
        %v3626 = vmul.f32 %v2602, %v2602
        %v3627 = vmul.f32 %v2603, %v2603
        %v3628 = vmul.f32 %v2604, %v2604
        %v3629 = vmul.f32 %v2605, %v2605
        %v3630 = vmul.f32 %v2606, %v2606
        %v3631 = vmul.f32 %v2607, %v2607
        %v3632 = vmul.f32 %v2608, %v2608
        %v3633 = vmul.f32 %v2609, %v2609
        %v3634 = vmul.f32 %v2610, %v2610
        %v3635 = vmul.f32 %v2611, %v2611
        %v3636 = vmul.f32 %v2612, %v2612
        %v3637 = vmul.f32 %v2613, %v2613
        %v3638 = vmul.f32 %v2614, %v2614
        %v3639 = vmul.f32 %v2615, %v2615
        %v3640 = vmul.f32 %v2616, %v2616
        %v3641 = vmul.f32 %v2617, %v2617
        %v3642 = vmul.f32 %v2618, %v2618
        %v3643 = vmul.f32 %v2619, %v2619
        %v3644 = vmul.f32 %v2620, %v2620
        %v3645 = vmul.f32 %v2621, %v2621
        %v3646 = vmul.f32 %v2622, %v2622
        %v3647 = vmul.f32 %v2623, %v2623
        %v3648 = vmul.f32 %v2624, %v2624
        %v3649 = vmul.f32 %v2625, %v2625
        %v3650 = vmul.f32 %v2626, %v2626
        %v3651 = vmul.f32 %v2627, %v2627
        %v3652 = vmul.f32 %v2628, %v2628
        %v3653 = vmul.f32 %v2629, %v2629
        %v3654 = vmul.f32 %v2630, %v2630
        %v3655 = vmul.f32 %v2631, %v2631
        %v3656 = vmul.f32 %v2632, %v2632
        %v3657 = vmul.f32 %v2633, %v2633
        %v3658 = vmul.f32 %v2634, %v2634
        %v3659 = vmul.f32 %v2635, %v2635
        %v3660 = vmul.f32 %v2636, %v2636
        %v3661 = vmul.f32 %v2637, %v2637
        %v3662 = vmul.f32 %v2638, %v2638
        %v3663 = vmul.f32 %v2639, %v2639
        %v3664 = vmul.f32 %v2640, %v2640
        %v3665 = vmul.f32 %v2641, %v2641
        %v3666 = vmul.f32 %v2642, %v2642
        %v3667 = vmul.f32 %v2643, %v2643
        %v3668 = vmul.f32 %v2644, %v2644
        %v3669 = vmul.f32 %v2645, %v2645
        %v3670 = vmul.f32 %v2646, %v2646
        %v3671 = vmul.f32 %v2647, %v2647
        %v3672 = vmul.f32 %v2648, %v2648
        %v3673 = vmul.f32 %v2649, %v2649
        %v3674 = vmul.f32 %v2650, %v2650
        %v3675 = vmul.f32 %v2651, %v2651
        %v3676 = vmul.f32 %v2652, %v2652
        %v3677 = vmul.f32 %v2653, %v2653
        %v3678 = vmul.f32 %v2654, %v2654
        %v3679 = vmul.f32 %v2655, %v2655
        %v3680 = vmul.f32 %v2656, %v2656
        %v3681 = vmul.f32 %v2657, %v2657
        %v3682 = vmul.f32 %v2658, %v2658
        %v3683 = vmul.f32 %v2659, %v2659
        %v3684 = vmul.f32 %v2660, %v2660
        %v3685 = vmul.f32 %v2661, %v2661
        %v3686 = vmul.f32 %v2662, %v2662
        %v3687 = vmul.f32 %v2663, %v2663
        %v3688 = vmul.f32 %v2664, %v2664
        %v3689 = vmul.f32 %v2665, %v2665
        %v3690 = vmul.f32 %v2666, %v2666
        %v3691 = vmul.f32 %v2667, %v2667
        %v3692 = vmul.f32 %v2668, %v2668
        %v3693 = vmul.f32 %v2669, %v2669
        %v3694 = vmul.f32 %v2670, %v2670
        %v3695 = vmul.f32 %v2671, %v2671
        %v3696 = vmul.f32 %v2672, %v2672
        %v3697 = vmul.f32 %v2673, %v2673
        %v3698 = vmul.f32 %v2674, %v2674
        %v3699 = vmul.f32 %v2675, %v2675
        %v3700 = vmul.f32 %v2676, %v2676
        %v3701 = vmul.f32 %v2677, %v2677
        %v3702 = vmul.f32 %v2678, %v2678
        %v3703 = vmul.f32 %v2679, %v2679
        %v3704 = vmul.f32 %v2680, %v2680
        %v3705 = vmul.f32 %v2681, %v2681
        %v3706 = vmul.f32 %v2682, %v2682
        %v3707 = vmul.f32 %v2683, %v2683
        %v3708 = vmul.f32 %v2684, %v2684
        %v3709 = vmul.f32 %v2685, %v2685
        %v3710 = vmul.f32 %v2686, %v2686
        %v3711 = vmul.f32 %v2687, %v2687
        %v3712 = vmul.f32 %v2688, %v2688
        %v3713 = vmul.f32 %v2689, %v2689
        %v3714 = vmul.f32 %v2690, %v2690
        %v3715 = vmul.f32 %v2691, %v2691
        %v3716 = vmul.f32 %v2692, %v2692
        %v3717 = vmul.f32 %v2693, %v2693
        %v3718 = vmul.f32 %v2694, %v2694
        %v3719 = vmul.f32 %v2695, %v2695
        %v3720 = vmul.f32 %v2696, %v2696
        %v3721 = vmul.f32 %v2697, %v2697
        %v3722 = vmul.f32 %v2698, %v2698
        %v3723 = vmul.f32 %v2699, %v2699
        %v3724 = vmul.f32 %v2700, %v2700
        %v3725 = vmul.f32 %v2701, %v2701
        %v3726 = vmul.f32 %v2702, %v2702
        %v3727 = vmul.f32 %v2703, %v2703
        %v3728 = vmul.f32 %v2704, %v2704
        %v3729 = vmul.f32 %v2705, %v2705
        %v3730 = vmul.f32 %v2706, %v2706
        %v3731 = vmul.f32 %v2707, %v2707
        %v3732 = vmul.f32 %v2708, %v2708
        %v3733 = vmul.f32 %v2709, %v2709
        %v3734 = vmul.f32 %v2710, %v2710
        %v3735 = vmul.f32 %v2711, %v2711
        %v3736 = vmul.f32 %v2712, %v2712
        %v3737 = vmul.f32 %v2713, %v2713
        %v3738 = vmul.f32 %v2714, %v2714
        %v3739 = vmul.f32 %v2715, %v2715
        %v3740 = vmul.f32 %v2716, %v2716
        %v3741 = vmul.f32 %v2717, %v2717
        %v3742 = vmul.f32 %v2718, %v2718
        %v3743 = vmul.f32 %v2719, %v2719
        %v3744 = vmul.f32 %v2720, %v2720
        %v3745 = vmul.f32 %v2721, %v2721
        %v3746 = vmul.f32 %v2722, %v2722
        %v3747 = vmul.f32 %v2723, %v2723
        %v3748 = vmul.f32 %v2724, %v2724
        %v3749 = vmul.f32 %v2725, %v2725
        %v3750 = vmul.f32 %v2726, %v2726
        %v3751 = vmul.f32 %v2727, %v2727
        %v3752 = vmul.f32 %v2728, %v2728
        %v3753 = vmul.f32 %v2729, %v2729
        %v3754 = vmul.f32 %v2730, %v2730
        %v3755 = vmul.f32 %v2731, %v2731
        %v3756 = vmul.f32 %v2732, %v2732
        %v3757 = vmul.f32 %v2733, %v2733
        %v3758 = vmul.f32 %v2734, %v2734
        %v3759 = vmul.f32 %v2735, %v2735
        %v3760 = vmul.f32 %v2736, %v2736
        %v3761 = vmul.f32 %v2737, %v2737
        %v3762 = vmul.f32 %v2738, %v2738
        %v3763 = vmul.f32 %v2739, %v2739
        %v3764 = vmul.f32 %v2740, %v2740
        %v3765 = vmul.f32 %v2741, %v2741
        %v3766 = vmul.f32 %v2742, %v2742
        %v3767 = vmul.f32 %v2743, %v2743
        %v3768 = vmul.f32 %v2744, %v2744
        %v3769 = vmul.f32 %v2745, %v2745
        %v3770 = vmul.f32 %v2746, %v2746
        %v3771 = vmul.f32 %v2747, %v2747
        %v3772 = vmul.f32 %v2748, %v2748
        %v3773 = vmul.f32 %v2749, %v2749
        %v3774 = vmul.f32 %v2750, %v2750
        %v3775 = vmul.f32 %v2751, %v2751
        %v3776 = vmul.f32 %v2752, %v2752
        %v3777 = vmul.f32 %v2753, %v2753
        %v3778 = vmul.f32 %v2754, %v2754
        %v3779 = vmul.f32 %v2755, %v2755
        %v3780 = vmul.f32 %v2756, %v2756
        %v3781 = vmul.f32 %v2757, %v2757
        %v3782 = vmul.f32 %v2758, %v2758
        %v3783 = vmul.f32 %v2759, %v2759
        %v3784 = vmul.f32 %v2760, %v2760
        %v3785 = vmul.f32 %v2761, %v2761
        %v3786 = vmul.f32 %v2762, %v2762
        %v3787 = vmul.f32 %v2763, %v2763
        %v3788 = vmul.f32 %v2764, %v2764
        %v3789 = vmul.f32 %v2765, %v2765
        %v3790 = vmul.f32 %v2766, %v2766
        %v3791 = vmul.f32 %v2767, %v2767
        %v3792 = vmul.f32 %v2768, %v2768
        %v3793 = vmul.f32 %v2769, %v2769
        %v3794 = vmul.f32 %v2770, %v2770
        %v3795 = vmul.f32 %v2771, %v2771
        %v3796 = vmul.f32 %v2772, %v2772
        %v3797 = vmul.f32 %v2773, %v2773
        %v3798 = vmul.f32 %v2774, %v2774
        %v3799 = vmul.f32 %v2775, %v2775
        %v3800 = vmul.f32 %v2776, %v2776
        %v3801 = vmul.f32 %v2777, %v2777
        %v3802 = vmul.f32 %v2778, %v2778
        %v3803 = vmul.f32 %v2779, %v2779
        %v3804 = vmul.f32 %v2780, %v2780
        %v3805 = vmul.f32 %v2781, %v2781
        %v3806 = vmul.f32 %v2782, %v2782
        %v3807 = vmul.f32 %v2783, %v2783
        %v3808 = vmul.f32 %v2784, %v2784
        %v3809 = vmul.f32 %v2785, %v2785
        %v3810 = vmul.f32 %v2786, %v2786
        %v3811 = vmul.f32 %v2787, %v2787
        %v3812 = vmul.f32 %v2788, %v2788
        %v3813 = vmul.f32 %v2789, %v2789
        %v3814 = vmul.f32 %v2790, %v2790
        %v3815 = vmul.f32 %v2791, %v2791
        %v3816 = vmul.f32 %v2792, %v2792
        %v3817 = vmul.f32 %v2793, %v2793
        %v3818 = vmul.f32 %v2794, %v2794
        %v3819 = vmul.f32 %v2795, %v2795
        %v3820 = vmul.f32 %v2796, %v2796
        %v3821 = vmul.f32 %v2797, %v2797
        %v3822 = vmul.f32 %v2798, %v2798
        %v3823 = vmul.f32 %v2799, %v2799
        %v3824 = vmul.f32 %v2800, %v2800
        %v3825 = vmul.f32 %v2801, %v2801
        %v3826 = vmul.f32 %v2802, %v2802
        %v3827 = vmul.f32 %v2803, %v2803
        %v3828 = vmul.f32 %v2804, %v2804
        %v3829 = vmul.f32 %v2805, %v2805
        %v3830 = vmul.f32 %v2806, %v2806
        %v3831 = vmul.f32 %v2807, %v2807
        %v3832 = vmul.f32 %v2808, %v2808
        %v3833 = vmul.f32 %v2809, %v2809
        %v3834 = vmul.f32 %v2810, %v2810
        %v3835 = vmul.f32 %v2811, %v2811
        %v3836 = vmul.f32 %v2812, %v2812
        %v3837 = vmul.f32 %v2813, %v2813
        %v3838 = vmul.f32 %v2814, %v2814
        %v3839 = vmul.f32 %v2815, %v2815
        %v3840 = vmul.f32 %v2816, %v2816
        %v3841 = vmul.f32 %v2817, %v2817
        %v3842 = vmul.f32 %v2818, %v2818
        %v3843 = vmul.f32 %v2819, %v2819
        %v3844 = vmul.f32 %v2820, %v2820
        %v3845 = vmul.f32 %v2821, %v2821
        %v3846 = vmul.f32 %v2822, %v2822
        %v3847 = vmul.f32 %v2823, %v2823
        %v3848 = vmul.f32 %v2824, %v2824
        %v3849 = vmul.f32 %v2825, %v2825
        %v3850 = vmul.f32 %v2826, %v2826
        %v3851 = vmul.f32 %v2827, %v2827
        %v3852 = vmul.f32 %v2828, %v2828
        %v3853 = vmul.f32 %v2829, %v2829
        %v3854 = vmul.f32 %v2830, %v2830
        %v3855 = vmul.f32 %v2831, %v2831
        %v3856 = vmul.f32 %v2832, %v2832
        %v3857 = vmul.f32 %v2833, %v2833
        %v3858 = vmul.f32 %v2834, %v2834
        %v3859 = vmul.f32 %v2835, %v2835
        %v3860 = vmul.f32 %v2836, %v2836
        %v3861 = vmul.f32 %v2837, %v2837
        %v3862 = vmul.f32 %v2838, %v2838
        %v3863 = vmul.f32 %v2839, %v2839
        %v3864 = vmul.f32 %v2840, %v2840
        %v3865 = vmul.f32 %v2841, %v2841
        %v3866 = vmul.f32 %v2842, %v2842
        %v3867 = vmul.f32 %v2843, %v2843
        %v3868 = vmul.f32 %v2844, %v2844
        %v3869 = vmul.f32 %v2845, %v2845
        %v3870 = vmul.f32 %v2846, %v2846
        %v3871 = vmul.f32 %v2847, %v2847
        %v3872 = vmul.f32 %v2848, %v2848
        %v3873 = vmul.f32 %v2849, %v2849
        %v3874 = vmul.f32 %v2850, %v2850
        %v3875 = vmul.f32 %v2851, %v2851
        %v3876 = vmul.f32 %v2852, %v2852
        %v3877 = vmul.f32 %v2853, %v2853
        %v3878 = vmul.f32 %v2854, %v2854
        %v3879 = vmul.f32 %v2855, %v2855
        %v3880 = vmul.f32 %v2856, %v2856
        %v3881 = vmul.f32 %v2857, %v2857
        %v3882 = vmul.f32 %v2858, %v2858
        %v3883 = vmul.f32 %v2859, %v2859
        %v3884 = vmul.f32 %v2860, %v2860
        %v3885 = vmul.f32 %v2861, %v2861
        %v3886 = vmul.f32 %v2862, %v2862
        %v3887 = vmul.f32 %v2863, %v2863
        %v3888 = vmul.f32 %v2864, %v2864
        %v3889 = vmul.f32 %v2865, %v2865
        %v3890 = vmul.f32 %v2866, %v2866
        %v3891 = vmul.f32 %v2867, %v2867
        %v3892 = vmul.f32 %v2868, %v2868
        %v3893 = vmul.f32 %v2869, %v2869
        %v3894 = vmul.f32 %v2870, %v2870
        %v3895 = vmul.f32 %v2871, %v2871
        %v3896 = vmul.f32 %v2872, %v2872
        %v3897 = vmul.f32 %v2873, %v2873
        %v3898 = vmul.f32 %v2874, %v2874
        %v3899 = vmul.f32 %v2875, %v2875
        %v3900 = vmul.f32 %v2876, %v2876
        %v3901 = vmul.f32 %v2877, %v2877
        %v3902 = vmul.f32 %v2878, %v2878
        %v3903 = vmul.f32 %v2879, %v2879
        %v3904 = vmul.f32 %v2880, %v2880
        %v3905 = vmul.f32 %v2881, %v2881
        %v3906 = vmul.f32 %v2882, %v2882
        %v3907 = vmul.f32 %v2883, %v2883
        %v3908 = vmul.f32 %v2884, %v2884
        %v3909 = vmul.f32 %v2885, %v2885
        %v3910 = vmul.f32 %v2886, %v2886
        %v3911 = vmul.f32 %v2887, %v2887
        %v3912 = vmul.f32 %v2888, %v2888
        %v3913 = vmul.f32 %v2889, %v2889
        %v3914 = vmul.f32 %v2890, %v2890
        %v3915 = vmul.f32 %v2891, %v2891
        %v3916 = vmul.f32 %v2892, %v2892
        %v3917 = vmul.f32 %v2893, %v2893
        %v3918 = vmul.f32 %v2894, %v2894
        %v3919 = vmul.f32 %v2895, %v2895
        %v3920 = vmul.f32 %v2896, %v2896
        %v3921 = vmul.f32 %v2897, %v2897
        %v3922 = vmul.f32 %v2898, %v2898
        %v3923 = vmul.f32 %v2899, %v2899
        %v3924 = vmul.f32 %v2900, %v2900
        %v3925 = vmul.f32 %v2901, %v2901
        %v3926 = vmul.f32 %v2902, %v2902
        %v3927 = vmul.f32 %v2903, %v2903
        %v3928 = vmul.f32 %v2904, %v2904
        %v3929 = vmul.f32 %v2905, %v2905
        %v3930 = vmul.f32 %v2906, %v2906
        %v3931 = vmul.f32 %v2907, %v2907
        %v3932 = vmul.f32 %v2908, %v2908
        %v3933 = vmul.f32 %v2909, %v2909
        %v3934 = vmul.f32 %v2910, %v2910
        %v3935 = vmul.f32 %v2911, %v2911
        %v3936 = vmul.f32 %v2912, %v2912
        %v3937 = vmul.f32 %v2913, %v2913
        %v3938 = vmul.f32 %v2914, %v2914
        %v3939 = vmul.f32 %v2915, %v2915
        %v3940 = vmul.f32 %v2916, %v2916
        %v3941 = vmul.f32 %v2917, %v2917
        %v3942 = vmul.f32 %v2918, %v2918
        %v3943 = vmul.f32 %v2919, %v2919
        %v3944 = vmul.f32 %v2920, %v2920
        %v3945 = vmul.f32 %v2921, %v2921
        %v3946 = vmul.f32 %v2922, %v2922
        %v3947 = vmul.f32 %v2923, %v2923
        %v3948 = vmul.f32 %v2924, %v2924
        %v3949 = vmul.f32 %v2925, %v2925
        %v3950 = vmul.f32 %v2926, %v2926
        %v3951 = vmul.f32 %v2927, %v2927
        %v3952 = vmul.f32 %v2928, %v2928
        %v3953 = vmul.f32 %v2929, %v2929
        %v3954 = vmul.f32 %v2930, %v2930
        %v3955 = vmul.f32 %v2931, %v2931
        %v3956 = vmul.f32 %v2932, %v2932
        %v3957 = vmul.f32 %v2933, %v2933
        %v3958 = vmul.f32 %v2934, %v2934
        %v3959 = vmul.f32 %v2935, %v2935
        %v3960 = vmul.f32 %v2936, %v2936
        %v3961 = vmul.f32 %v2937, %v2937
        %v3962 = vmul.f32 %v2938, %v2938
        %v3963 = vmul.f32 %v2939, %v2939
        %v3964 = vmul.f32 %v2940, %v2940
        %v3965 = vmul.f32 %v2941, %v2941
        %v3966 = vmul.f32 %v2942, %v2942
        %v3967 = vmul.f32 %v2943, %v2943
        %v3968 = vmul.f32 %v2944, %v2944
        %v3969 = vmul.f32 %v2945, %v2945
        %v3970 = vmul.f32 %v2946, %v2946
        %v3971 = vmul.f32 %v2947, %v2947
        %v3972 = vmul.f32 %v2948, %v2948
        %v3973 = vmul.f32 %v2949, %v2949
        %v3974 = vmul.f32 %v2950, %v2950
        %v3975 = vmul.f32 %v2951, %v2951
        %v3976 = vmul.f32 %v2952, %v2952
        %v3977 = vmul.f32 %v2953, %v2953
        %v3978 = vmul.f32 %v2954, %v2954
        %v3979 = vmul.f32 %v2955, %v2955
        %v3980 = vmul.f32 %v2956, %v2956
        %v3981 = vmul.f32 %v2957, %v2957
        %v3982 = vmul.f32 %v2958, %v2958
        %v3983 = vmul.f32 %v2959, %v2959
        %v3984 = vmul.f32 %v2960, %v2960
        %v3985 = vmul.f32 %v2961, %v2961
        %v3986 = vmul.f32 %v2962, %v2962
        %v3987 = vmul.f32 %v2963, %v2963
        %v3988 = vmul.f32 %v2964, %v2964
        %v3989 = vmul.f32 %v2965, %v2965
        %v3990 = vmul.f32 %v2966, %v2966
        %v3991 = vmul.f32 %v2967, %v2967
        %v3992 = vmul.f32 %v2968, %v2968
        %v3993 = vmul.f32 %v2969, %v2969
        %v3994 = vmul.f32 %v2970, %v2970
        %v3995 = vmul.f32 %v2971, %v2971
        %v3996 = vmul.f32 %v2972, %v2972
        %v3997 = vmul.f32 %v2973, %v2973
        %v3998 = vmul.f32 %v2974, %v2974
        %v3999 = vmul.f32 %v2975, %v2975
        %v4000 = vmul.f32 %v2976, %v2976
        %v4001 = vmul.f32 %v2977, %v2977
        %v4002 = vmul.f32 %v2978, %v2978
        %v4003 = vmul.f32 %v2979, %v2979
        %v4004 = vmul.f32 %v2980, %v2980
        %v4005 = vmul.f32 %v2981, %v2981
        %v4006 = vmul.f32 %v2982, %v2982
        %v4007 = vmul.f32 %v2983, %v2983
        %v4008 = vmul.f32 %v2984, %v2984
        %v4009 = vmul.f32 %v2985, %v2985
        %v4010 = vmul.f32 %v2986, %v2986
        %v4011 = vmul.f32 %v2987, %v2987
        %v4012 = vmul.f32 %v2988, %v2988
        %v4013 = vmul.f32 %v2989, %v2989
        %v4014 = vmul.f32 %v2990, %v2990
        %v4015 = vmul.f32 %v2991, %v2991
        %v4016 = vmul.f32 %v2992, %v2992
        %v4017 = vmul.f32 %v2993, %v2993
        %v4018 = vmul.f32 %v2994, %v2994
        %v4019 = vmul.f32 %v2995, %v2995
        %v4020 = vmul.f32 %v2996, %v2996
        %v4021 = vmul.f32 %v2997, %v2997
        %v4022 = vmul.f32 %v2998, %v2998
        %v4023 = vmul.f32 %v2999, %v2999
        %v4024 = vmul.f32 %v3000, %v3000
        %v4025 = vmul.f32 %v3001, %v3001
        %v4026 = vmul.f32 %v3002, %v3002
        %v4027 = vmul.f32 %v3003, %v3003
        %v4028 = vmul.f32 %v3004, %v3004
        %v4029 = vmul.f32 %v3005, %v3005
        %v4030 = vmul.f32 %v3006, %v3006
        %v4031 = vmul.f32 %v3007, %v3007
        %v4032 = vmul.f32 %v3008, %v3008
        %v4033 = vmul.f32 %v3009, %v3009
        %v4034 = vmul.f32 %v3010, %v3010
        %v4035 = vmul.f32 %v3011, %v3011
        %v4036 = vmul.f32 %v3012, %v3012
        %v4037 = vmul.f32 %v3013, %v3013
        %v4038 = vmul.f32 %v3014, %v3014
        %v4039 = vmul.f32 %v3015, %v3015
        %v4040 = vmul.f32 %v3016, %v3016
        %v4041 = vmul.f32 %v3017, %v3017
        %v4042 = vmul.f32 %v3018, %v3018
        %v4043 = vmul.f32 %v3019, %v3019
        %v4044 = vmul.f32 %v3020, %v3020
        %v4045 = vmul.f32 %v3021, %v3021
        %v4046 = vmul.f32 %v3022, %v3022
        %v4047 = vmul.f32 %v3023, %v3023
        %v4048 = vmul.f32 %v3024, %v3024
        %v4049 = vmul.f32 %v3025, %v3025
        %v4050 = vmul.f32 %v3026, %v3026
        %v4051 = vmul.f32 %v3027, %v3027
        %v4052 = vmul.f32 %v3028, %v3028
        %v4053 = vmul.f32 %v3029, %v3029
        %v4054 = vmul.f32 %v3030, %v3030
        %v4055 = vmul.f32 %v3031, %v3031
        %v4056 = vmul.f32 %v3032, %v3032
        %v4057 = vmul.f32 %v3033, %v3033
        %v4058 = vmul.f32 %v3034, %v3034
        %v4059 = vmul.f32 %v3035, %v3035
        %v4060 = vmul.f32 %v3036, %v3036
        %v4061 = vmul.f32 %v3037, %v3037
        %v4062 = vmul.f32 %v3038, %v3038
        %v4063 = vmul.f32 %v3039, %v3039
        %v4064 = vmul.f32 %v3040, %v3040
        %v4065 = vmul.f32 %v3041, %v3041
        %v4066 = vmul.f32 %v3042, %v3042
        %v4067 = vmul.f32 %v3043, %v3043
        %v4068 = vmul.f32 %v3044, %v3044
        %v4069 = vmul.f32 %v3045, %v3045
        %v4070 = vmul.f32 %v3046, %v3046
        %v4071 = vmul.f32 %v3047, %v3047
        %v4072 = vmul.f32 %v3048, %v3048
        %v4073 = vmul.f32 %v3049, %v3049
        %v4074 = vmul.f32 %v3050, %v3050
        %v4075 = vmul.f32 %v3051, %v3051
        %v4076 = vmul.f32 %v3052, %v3052
        %v4077 = vmul.f32 %v3053, %v3053
        %v4078 = vmul.f32 %v3054, %v3054
        %v4079 = vmul.f32 %v3055, %v3055
        %v4080 = vmul.f32 %v3056, %v3056
        %v4081 = vmul.f32 %v3057, %v3057
        %v4082 = vmul.f32 %v3058, %v3058
        %v4083 = vmul.f32 %v3059, %v3059
        %v4084 = vmul.f32 %v3060, %v3060
        %v4085 = vmul.f32 %v3061, %v3061
        %v4086 = vmul.f32 %v3062, %v3062
        %v4087 = vmul.f32 %v3063, %v3063
        %v4088 = vmul.f32 %v3064, %v3064
        %v4089 = vmul.f32 %v3065, %v3065
        %v4090 = vmul.f32 %v3066, %v3066
        %v4091 = vmul.f32 %v3067, %v3067
        %v4092 = vmul.f32 %v3068, %v3068
        %v4093 = vmul.f32 %v3069, %v3069
        %v4094 = vmul.f32 %v3070, %v3070
        %v4095 = vmul.f32 %v3071, %v3071
        %v4096 = vmul.f32 %v3072, %v3072
        %v4097 = vmul.f32 %v3073, %v3073
        %v4098 = vmul.f32 %v3074, %v3074
        %v4099 = vmul.f32 %v3075, %v3075
        %v4100 = vmul.f32 %v3076, %v3076
        %v4101 = vmul.f32 %v3077, %v3077
        %v4102 = vmul.f32 %v3078, %v3078
        %v4103 = vmul.f32 %v3079, %v3079
        %v4104 = vmul.f32 %v3080, %v3080
        %v4105 = vmul.f32 %v3081, %v3081
        %v4106 = vmul.f32 %v3082, %v3082
        %v4107 = vmul.f32 %v3083, %v3083
        %v4108 = vmul.f32 %v3084, %v3084
        %v4109 = vmul.f32 %v3085, %v3085
        %v4110 = vmul.f32 %v3086, %v3086
        %v4111 = vmul.f32 %v3087, %v3087
        %v4112 = vmul.f32 %v3088, %v3088
        %v4113 = vmul.f32 %v3089, %v3089
        %v4114 = vmul.f32 %v3090, %v3090
        %v4115 = vmul.f32 %v3091, %v3091
        %v4116 = vmul.f32 %v3092, %v3092
        %v4117 = vmul.f32 %v3093, %v3093
        %v4118 = vmul.f32 %v3094, %v3094
        %v4119 = vmul.f32 %v3095, %v3095
        %v4120 = vmul.f32 %v3096, %v3096
        %v4121 = vmul.f32 %v3097, %v3097
        %v4122 = vmul.f32 %v3098, %v3098
        %v4123 = vmul.f32 %v3099, %v3099
        %v4124 = vmul.f32 %v3100, %v3100
        %v4125 = vmul.f32 %v3101, %v3101
        %v4126 = vmul.f32 %v3102, %v3102
        %v4127 = vmul.f32 %v3103, %v3103
        %v4128 = vmul.f32 %v3104, %v3104
        %v4129 = vmul.f32 %v3105, %v3105
        %v4130 = vmul.f32 %v3106, %v3106
        %v4131 = vmul.f32 %v3107, %v3107
        %v4132 = vmul.f32 %v3108, %v3108
        %v4133 = vmul.f32 %v3109, %v3109
        %v4134 = vmul.f32 %v3110, %v3110
        %v4135 = vmul.f32 %v3111, %v3111
        %v4136 = vmul.f32 %v3112, %v3112
        %v4137 = vmul.f32 %v3113, %v3113
        %v4138 = vmul.f32 %v3114, %v3114
        %v4139 = vmul.f32 %v3115, %v3115
        %v4140 = vmul.f32 %v3116, %v3116
        %v4141 = vmul.f32 %v3117, %v3117
        %v4142 = vmul.f32 %v3118, %v3118
        %v4143 = vmul.f32 %v3119, %v3119
        %v4144 = vmul.f32 %v3120, %v3120
        %v4145 = vmul.f32 %v3121, %v3121
        %v4146 = vmul.f32 %v3122, %v3122
        %v4147 = vmul.f32 %v3123, %v3123
        %v4148 = vmul.f32 %v3124, %v3124
        %v4149 = vmul.f32 %v3125, %v3125
        %v4150 = vmul.f32 %v3126, %v3126
        %v4151 = vmul.f32 %v3127, %v3127
        %v4152 = vmul.f32 %v3128, %v3128
        %v4153 = vmul.f32 %v3129, %v3129
        %v4154 = vmul.f32 %v3130, %v3130
        %v4155 = vmul.f32 %v3131, %v3131
        %v4156 = vmul.f32 %v3132, %v3132
        %v4157 = vmul.f32 %v3133, %v3133
        %v4158 = vmul.f32 %v3134, %v3134
        %v4159 = vmul.f32 %v3135, %v3135
        %v4160 = vmul.f32 %v3136, %v3136
        %v4161 = vmul.f32 %v3137, %v3137
        %v4162 = vmul.f32 %v3138, %v3138
        %v4163 = vmul.f32 %v3139, %v3139
        %v4164 = vmul.f32 %v3140, %v3140
        %v4165 = vmul.f32 %v3141, %v3141
        %v4166 = vmul.f32 %v3142, %v3142
        %v4167 = vmul.f32 %v3143, %v3143
        %v4168 = vmul.f32 %v3144, %v3144
        %v4169 = vmul.f32 %v3145, %v3145
        %v4170 = vmul.f32 %v3146, %v3146
        %v4171 = vmul.f32 %v3147, %v3147
        %v4172 = vmul.f32 %v3148, %v3148
        %v4173 = vmul.f32 %v3149, %v3149
        %v4174 = vmul.f32 %v3150, %v3150
        %v4175 = vmul.f32 %v3151, %v3151
        %v4176 = vmul.f32 %v3152, %v3152
        %v4177 = vmul.f32 %v3153, %v3153
        %v4178 = vmul.f32 %v3154, %v3154
        %v4179 = vmul.f32 %v3155, %v3155
        %v4180 = vmul.f32 %v3156, %v3156
        %v4181 = vmul.f32 %v3157, %v3157
        %v4182 = vmul.f32 %v3158, %v3158
        %v4183 = vmul.f32 %v3159, %v3159
        %v4184 = vmul.f32 %v3160, %v3160
        %v4185 = vmul.f32 %v3161, %v3161
        %v4186 = vmul.f32 %v3162, %v3162
        %v4187 = vmul.f32 %v3163, %v3163
        %v4188 = vmul.f32 %v3164, %v3164
        %v4189 = vmul.f32 %v3165, %v3165
        %v4190 = vmul.f32 %v3166, %v3166
        %v4191 = vmul.f32 %v3167, %v3167
        %v4192 = vmul.f32 %v3168, %v3168
        %v4193 = vmul.f32 %v3169, %v3169
        %v4194 = vmul.f32 %v3170, %v3170
        %v4195 = vmul.f32 %v3171, %v3171
        %v4196 = vmul.f32 %v3172, %v3172
        %v4197 = vmul.f32 %v3173, %v3173
        %v4198 = vmul.f32 %v3174, %v3174
        %v4199 = vmul.f32 %v3175, %v3175
        %v4200 = vmul.f32 %v3176, %v3176
        %v4201 = vmul.f32 %v3177, %v3177
        %v4202 = vmul.f32 %v3178, %v3178
        %v4203 = vmul.f32 %v3179, %v3179
        %v4204 = vmul.f32 %v3180, %v3180
        %v4205 = vmul.f32 %v3181, %v3181
        %v4206 = vmul.f32 %v3182, %v3182
        %v4207 = vmul.f32 %v3183, %v3183
        %v4208 = vmul.f32 %v3184, %v3184
        %v4209 = vmul.f32 %v3185, %v3185
        %v4210 = vmul.f32 %v3186, %v3186
        %v4211 = vmul.f32 %v3187, %v3187
        %v4212 = vmul.f32 %v3188, %v3188
        %v4213 = vmul.f32 %v3189, %v3189
        %v4214 = vmul.f32 %v3190, %v3190
        %v4215 = vmul.f32 %v3191, %v3191
        %v4216 = vmul.f32 %v3192, %v3192
        %v4217 = vmul.f32 %v3193, %v3193
        %v4218 = vmul.f32 %v3194, %v3194
        %v4219 = vmul.f32 %v3195, %v3195
        %v4220 = vmul.f32 %v3196, %v3196
        %v4221 = vmul.f32 %v3197, %v3197
        %v4222 = vmul.f32 %v3198, %v3198
        %v4223 = vmul.f32 %v3199, %v3199
        %v4224 = vmul.f32 %v3200, %v3200
        %v4225 = vmul.f32 %v3201, %v3201
        %v4226 = vmul.f32 %v3202, %v3202
        %v4227 = vmul.f32 %v3203, %v3203
        %v4228 = vmul.f32 %v3204, %v3204
        %v4229 = vmul.f32 %v3205, %v3205
        %v4230 = vmul.f32 %v3206, %v3206
        %v4231 = vmul.f32 %v3207, %v3207
        %v4232 = vmul.f32 %v3208, %v3208
        %v4233 = vmul.f32 %v3209, %v3209
        %v4234 = vmul.f32 %v3210, %v3210
        %v4235 = vmul.f32 %v3211, %v3211
        %v4236 = vmul.f32 %v3212, %v3212
        %v4237 = vmul.f32 %v3213, %v3213
        %v4238 = vmul.f32 %v3214, %v3214
        %v4239 = vmul.f32 %v3215, %v3215
        %v4240 = vmul.f32 %v3216, %v3216
        %v4241 = vmul.f32 %v3217, %v3217
        %v4242 = vmul.f32 %v3218, %v3218
        %v4243 = vmul.f32 %v3219, %v3219
        %v4244 = vmul.f32 %v3220, %v3220
        %v4245 = vmul.f32 %v3221, %v3221
        %v4246 = vmul.f32 %v3222, %v3222
        %v4247 = vmul.f32 %v3223, %v3223
        %v4248 = vmul.f32 %v3224, %v3224
        %v4249 = vmul.f32 %v3225, %v3225
        %v4250 = vmul.f32 %v3226, %v3226
        %v4251 = vmul.f32 %v3227, %v3227
        %v4252 = vmul.f32 %v3228, %v3228
        %v4253 = vmul.f32 %v3229, %v3229
        %v4254 = vmul.f32 %v3230, %v3230
        %v4255 = vmul.f32 %v3231, %v3231
        %v4256 = vmul.f32 %v3232, %v3232
        %v4257 = vmul.f32 %v3233, %v3233
        %v4258 = vmul.f32 %v3234, %v3234
        %v4259 = vmul.f32 %v3235, %v3235
        %v4260 = vmul.f32 %v3236, %v3236
        %v4261 = vmul.f32 %v3237, %v3237
        %v4262 = vmul.f32 %v3238, %v3238
        %v4263 = vmul.f32 %v3239, %v3239
        %v4264 = vmul.f32 %v3240, %v3240
        %v4265 = vmul.f32 %v3241, %v3241
        %v4266 = vmul.f32 %v3242, %v3242
        %v4267 = vmul.f32 %v3243, %v3243
        %v4268 = vmul.f32 %v3244, %v3244
        %v4269 = vmul.f32 %v3245, %v3245
        %v4270 = vmul.f32 %v3246, %v3246
        %v4271 = vmul.f32 %v3247, %v3247
        %v4272 = vmul.f32 %v3248, %v3248
        %v4273 = vmul.f32 %v3249, %v3249
        %v4274 = vmul.f32 %v3250, %v3250
        %v4275 = vmul.f32 %v3251, %v3251
        %v4276 = vmul.f32 %v3252, %v3252
        %v4277 = vmul.f32 %v3253, %v3253
        %v4278 = vmul.f32 %v3254, %v3254
        %v4279 = vmul.f32 %v3255, %v3255
        %v4280 = vmul.f32 %v3256, %v3256
        %v4281 = vmul.f32 %v3257, %v3257
        %v4282 = vmul.f32 %v3258, %v3258
        %v4283 = vmul.f32 %v3259, %v3259
        %v4284 = vmul.f32 %v3260, %v3260
        %v4285 = vmul.f32 %v3261, %v3261
        %v4286 = vmul.f32 %v3262, %v3262
        %v4287 = vmul.f32 %v3263, %v3263
        %v4288 = vmul.f32 %v3264, %v3264
        %v4289 = vmul.f32 %v3265, %v3265
        %v4290 = vmul.f32 %v3266, %v3266
        %v4291 = vmul.f32 %v3267, %v3267
        %v4292 = vmul.f32 %v3268, %v3268
        %v4293 = vmul.f32 %v3269, %v3269
        %v4294 = vmul.f32 %v3270, %v3270
        %v4295 = vmul.f32 %v3271, %v3271
        %v4296 = vmul.f32 %v3272, %v3272
        %v4297 = vmul.f32 %v3273, %v3273
        %v4298 = vmul.f32 %v3274, %v3274
        %v4299 = vmul.f32 %v3275, %v3275
        %v4300 = vmul.f32 %v3276, %v3276
        %v4301 = vmul.f32 %v3277, %v3277
        %v4302 = vmul.f32 %v3278, %v3278
        %v4303 = vmul.f32 %v3279, %v3279
        %v4304 = vmul.f32 %v3280, %v3280
        %v4305 = vmul.f32 %v3281, %v3281
        %v4306 = vmul.f32 %v3282, %v3282
        %v4307 = vmul.f32 %v3283, %v3283
        %v4308 = vmul.f32 %v3284, %v3284
        %v4309 = vmul.f32 %v3285, %v3285
        %v4310 = vmul.f32 %v3286, %v3286
        %v4311 = vmul.f32 %v3287, %v3287
        %v4312 = vmul.f32 %v3288, %v3288
        %v4313 = vmul.f32 %v3289, %v3289
        %v4314 = vmul.f32 %v3290, %v3290
        %v4315 = vmul.f32 %v3291, %v3291
        %v4316 = vmul.f32 %v3292, %v3292
        %v4317 = vmul.f32 %v3293, %v3293
        %v4318 = vmul.f32 %v3294, %v3294
        %v4319 = vmul.f32 %v3295, %v3295
        %v4320 = vadd.f32 %v3296, %v3297
        %v4321 = vadd.f32 %v4320, %v3298
        %v4322 = vadd.f32 %v4321, %v3299
        %v4323 = vadd.f32 %v4322, %v3300
        %v4324 = vadd.f32 %v4323, %v3301
        %v4325 = vadd.f32 %v4324, %v3302
        %v4326 = vadd.f32 %v4325, %v3303
        %v4327 = vadd.f32 %v4326, %v3304
        %v4328 = vadd.f32 %v4327, %v3305
        %v4329 = vadd.f32 %v4328, %v3306
        %v4330 = vadd.f32 %v4329, %v3307
        %v4331 = vadd.f32 %v4330, %v3308
        %v4332 = vadd.f32 %v4331, %v3309
        %v4333 = vadd.f32 %v4332, %v3310
        %v4334 = vadd.f32 %v4333, %v3311
        %v4335 = vadd.f32 %v4334, %v3312
        %v4336 = vadd.f32 %v4335, %v3313
        %v4337 = vadd.f32 %v4336, %v3314
        %v4338 = vadd.f32 %v4337, %v3315
        %v4339 = vadd.f32 %v4338, %v3316
        %v4340 = vadd.f32 %v4339, %v3317
        %v4341 = vadd.f32 %v4340, %v3318
        %v4342 = vadd.f32 %v4341, %v3319
        %v4343 = vadd.f32 %v4342, %v3320
        %v4344 = vadd.f32 %v4343, %v3321
        %v4345 = vadd.f32 %v4344, %v3322
        %v4346 = vadd.f32 %v4345, %v3323
        %v4347 = vadd.f32 %v4346, %v3324
        %v4348 = vadd.f32 %v4347, %v3325
        %v4349 = vadd.f32 %v4348, %v3326
        %v4350 = vadd.f32 %v4349, %v3327
        %v4351 = vadd.f32 %v4350, %v3328
        %v4352 = vadd.f32 %v4351, %v3329
        %v4353 = vadd.f32 %v4352, %v3330
        %v4354 = vadd.f32 %v4353, %v3331
        %v4355 = vadd.f32 %v4354, %v3332
        %v4356 = vadd.f32 %v4355, %v3333
        %v4357 = vadd.f32 %v4356, %v3334
        %v4358 = vadd.f32 %v4357, %v3335
        %v4359 = vadd.f32 %v4358, %v3336
        %v4360 = vadd.f32 %v4359, %v3337
        %v4361 = vadd.f32 %v4360, %v3338
        %v4362 = vadd.f32 %v4361, %v3339
        %v4363 = vadd.f32 %v4362, %v3340
        %v4364 = vadd.f32 %v4363, %v3341
        %v4365 = vadd.f32 %v4364, %v3342
        %v4366 = vadd.f32 %v4365, %v3343
        %v4367 = vadd.f32 %v4366, %v3344
        %v4368 = vadd.f32 %v4367, %v3345
        %v4369 = vadd.f32 %v4368, %v3346
        %v4370 = vadd.f32 %v4369, %v3347
        %v4371 = vadd.f32 %v4370, %v3348
        %v4372 = vadd.f32 %v4371, %v3349
        %v4373 = vadd.f32 %v4372, %v3350
        %v4374 = vadd.f32 %v4373, %v3351
        %v4375 = vadd.f32 %v4374, %v3352
        %v4376 = vadd.f32 %v4375, %v3353
        %v4377 = vadd.f32 %v4376, %v3354
        %v4378 = vadd.f32 %v4377, %v3355
        %v4379 = vadd.f32 %v4378, %v3356
        %v4380 = vadd.f32 %v4379, %v3357
        %v4381 = vadd.f32 %v4380, %v3358
        %v4382 = vadd.f32 %v4381, %v3359
        %v4383 = vadd.f32 %v4382, %v3360
        %v4384 = vadd.f32 %v4383, %v3361
        %v4385 = vadd.f32 %v4384, %v3362
        %v4386 = vadd.f32 %v4385, %v3363
        %v4387 = vadd.f32 %v4386, %v3364
        %v4388 = vadd.f32 %v4387, %v3365
        %v4389 = vadd.f32 %v4388, %v3366
        %v4390 = vadd.f32 %v4389, %v3367
        %v4391 = vadd.f32 %v4390, %v3368
        %v4392 = vadd.f32 %v4391, %v3369
        %v4393 = vadd.f32 %v4392, %v3370
        %v4394 = vadd.f32 %v4393, %v3371
        %v4395 = vadd.f32 %v4394, %v3372
        %v4396 = vadd.f32 %v4395, %v3373
        %v4397 = vadd.f32 %v4396, %v3374
        %v4398 = vadd.f32 %v4397, %v3375
        %v4399 = vadd.f32 %v4398, %v3376
        %v4400 = vadd.f32 %v4399, %v3377
        %v4401 = vadd.f32 %v4400, %v3378
        %v4402 = vadd.f32 %v4401, %v3379
        %v4403 = vadd.f32 %v4402, %v3380
        %v4404 = vadd.f32 %v4403, %v3381
        %v4405 = vadd.f32 %v4404, %v3382
        %v4406 = vadd.f32 %v4405, %v3383
        %v4407 = vadd.f32 %v4406, %v3384
        %v4408 = vadd.f32 %v4407, %v3385
        %v4409 = vadd.f32 %v4408, %v3386
        %v4410 = vadd.f32 %v4409, %v3387
        %v4411 = vadd.f32 %v4410, %v3388
        %v4412 = vadd.f32 %v4411, %v3389
        %v4413 = vadd.f32 %v4412, %v3390
        %v4414 = vadd.f32 %v4413, %v3391
        %v4415 = vadd.f32 %v4414, %v3392
        %v4416 = vadd.f32 %v4415, %v3393
        %v4417 = vadd.f32 %v4416, %v3394
        %v4418 = vadd.f32 %v4417, %v3395
        %v4419 = vadd.f32 %v4418, %v3396
        %v4420 = vadd.f32 %v4419, %v3397
        %v4421 = vadd.f32 %v4420, %v3398
        %v4422 = vadd.f32 %v4421, %v3399
        %v4423 = vadd.f32 %v4422, %v3400
        %v4424 = vadd.f32 %v4423, %v3401
        %v4425 = vadd.f32 %v4424, %v3402
        %v4426 = vadd.f32 %v4425, %v3403
        %v4427 = vadd.f32 %v4426, %v3404
        %v4428 = vadd.f32 %v4427, %v3405
        %v4429 = vadd.f32 %v4428, %v3406
        %v4430 = vadd.f32 %v4429, %v3407
        %v4431 = vadd.f32 %v4430, %v3408
        %v4432 = vadd.f32 %v4431, %v3409
        %v4433 = vadd.f32 %v4432, %v3410
        %v4434 = vadd.f32 %v4433, %v3411
        %v4435 = vadd.f32 %v4434, %v3412
        %v4436 = vadd.f32 %v4435, %v3413
        %v4437 = vadd.f32 %v4436, %v3414
        %v4438 = vadd.f32 %v4437, %v3415
        %v4439 = vadd.f32 %v4438, %v3416
        %v4440 = vadd.f32 %v4439, %v3417
        %v4441 = vadd.f32 %v4440, %v3418
        %v4442 = vadd.f32 %v4441, %v3419
        %v4443 = vadd.f32 %v4442, %v3420
        %v4444 = vadd.f32 %v4443, %v3421
        %v4445 = vadd.f32 %v4444, %v3422
        %v4446 = vadd.f32 %v4445, %v3423
        %v4447 = vadd.f32 %v4446, %v3424
        %v4448 = vadd.f32 %v4447, %v3425
        %v4449 = vadd.f32 %v4448, %v3426
        %v4450 = vadd.f32 %v4449, %v3427
        %v4451 = vadd.f32 %v4450, %v3428
        %v4452 = vadd.f32 %v4451, %v3429
        %v4453 = vadd.f32 %v4452, %v3430
        %v4454 = vadd.f32 %v4453, %v3431
        %v4455 = vadd.f32 %v4454, %v3432
        %v4456 = vadd.f32 %v4455, %v3433
        %v4457 = vadd.f32 %v4456, %v3434
        %v4458 = vadd.f32 %v4457, %v3435
        %v4459 = vadd.f32 %v4458, %v3436
        %v4460 = vadd.f32 %v4459, %v3437
        %v4461 = vadd.f32 %v4460, %v3438
        %v4462 = vadd.f32 %v4461, %v3439
        %v4463 = vadd.f32 %v4462, %v3440
        %v4464 = vadd.f32 %v4463, %v3441
        %v4465 = vadd.f32 %v4464, %v3442
        %v4466 = vadd.f32 %v4465, %v3443
        %v4467 = vadd.f32 %v4466, %v3444
        %v4468 = vadd.f32 %v4467, %v3445
        %v4469 = vadd.f32 %v4468, %v3446
        %v4470 = vadd.f32 %v4469, %v3447
        %v4471 = vadd.f32 %v4470, %v3448
        %v4472 = vadd.f32 %v4471, %v3449
        %v4473 = vadd.f32 %v4472, %v3450
        %v4474 = vadd.f32 %v4473, %v3451
        %v4475 = vadd.f32 %v4474, %v3452
        %v4476 = vadd.f32 %v4475, %v3453
        %v4477 = vadd.f32 %v4476, %v3454
        %v4478 = vadd.f32 %v4477, %v3455
        %v4479 = vadd.f32 %v4478, %v3456
        %v4480 = vadd.f32 %v4479, %v3457
        %v4481 = vadd.f32 %v4480, %v3458
        %v4482 = vadd.f32 %v4481, %v3459
        %v4483 = vadd.f32 %v4482, %v3460
        %v4484 = vadd.f32 %v4483, %v3461
        %v4485 = vadd.f32 %v4484, %v3462
        %v4486 = vadd.f32 %v4485, %v3463
        %v4487 = vadd.f32 %v4486, %v3464
        %v4488 = vadd.f32 %v4487, %v3465
        %v4489 = vadd.f32 %v4488, %v3466
        %v4490 = vadd.f32 %v4489, %v3467
        %v4491 = vadd.f32 %v4490, %v3468
        %v4492 = vadd.f32 %v4491, %v3469
        %v4493 = vadd.f32 %v4492, %v3470
        %v4494 = vadd.f32 %v4493, %v3471
        %v4495 = vadd.f32 %v4494, %v3472
        %v4496 = vadd.f32 %v4495, %v3473
        %v4497 = vadd.f32 %v4496, %v3474
        %v4498 = vadd.f32 %v4497, %v3475
        %v4499 = vadd.f32 %v4498, %v3476
        %v4500 = vadd.f32 %v4499, %v3477
        %v4501 = vadd.f32 %v4500, %v3478
        %v4502 = vadd.f32 %v4501, %v3479
        %v4503 = vadd.f32 %v4502, %v3480
        %v4504 = vadd.f32 %v4503, %v3481
        %v4505 = vadd.f32 %v4504, %v3482
        %v4506 = vadd.f32 %v4505, %v3483
        %v4507 = vadd.f32 %v4506, %v3484
        %v4508 = vadd.f32 %v4507, %v3485
        %v4509 = vadd.f32 %v4508, %v3486
        %v4510 = vadd.f32 %v4509, %v3487
        %v4511 = vadd.f32 %v4510, %v3488
        %v4512 = vadd.f32 %v4511, %v3489
        %v4513 = vadd.f32 %v4512, %v3490
        %v4514 = vadd.f32 %v4513, %v3491
        %v4515 = vadd.f32 %v4514, %v3492
        %v4516 = vadd.f32 %v4515, %v3493
        %v4517 = vadd.f32 %v4516, %v3494
        %v4518 = vadd.f32 %v4517, %v3495
        %v4519 = vadd.f32 %v4518, %v3496
        %v4520 = vadd.f32 %v4519, %v3497
        %v4521 = vadd.f32 %v4520, %v3498
        %v4522 = vadd.f32 %v4521, %v3499
        %v4523 = vadd.f32 %v4522, %v3500
        %v4524 = vadd.f32 %v4523, %v3501
        %v4525 = vadd.f32 %v4524, %v3502
        %v4526 = vadd.f32 %v4525, %v3503
        %v4527 = vadd.f32 %v4526, %v3504
        %v4528 = vadd.f32 %v4527, %v3505
        %v4529 = vadd.f32 %v4528, %v3506
        %v4530 = vadd.f32 %v4529, %v3507
        %v4531 = vadd.f32 %v4530, %v3508
        %v4532 = vadd.f32 %v4531, %v3509
        %v4533 = vadd.f32 %v4532, %v3510
        %v4534 = vadd.f32 %v4533, %v3511
        %v4535 = vadd.f32 %v4534, %v3512
        %v4536 = vadd.f32 %v4535, %v3513
        %v4537 = vadd.f32 %v4536, %v3514
        %v4538 = vadd.f32 %v4537, %v3515
        %v4539 = vadd.f32 %v4538, %v3516
        %v4540 = vadd.f32 %v4539, %v3517
        %v4541 = vadd.f32 %v4540, %v3518
        %v4542 = vadd.f32 %v4541, %v3519
        %v4543 = vadd.f32 %v4542, %v3520
        %v4544 = vadd.f32 %v4543, %v3521
        %v4545 = vadd.f32 %v4544, %v3522
        %v4546 = vadd.f32 %v4545, %v3523
        %v4547 = vadd.f32 %v4546, %v3524
        %v4548 = vadd.f32 %v4547, %v3525
        %v4549 = vadd.f32 %v4548, %v3526
        %v4550 = vadd.f32 %v4549, %v3527
        %v4551 = vadd.f32 %v4550, %v3528
        %v4552 = vadd.f32 %v4551, %v3529
        %v4553 = vadd.f32 %v4552, %v3530
        %v4554 = vadd.f32 %v4553, %v3531
        %v4555 = vadd.f32 %v4554, %v3532
        %v4556 = vadd.f32 %v4555, %v3533
        %v4557 = vadd.f32 %v4556, %v3534
        %v4558 = vadd.f32 %v4557, %v3535
        %v4559 = vadd.f32 %v4558, %v3536
        %v4560 = vadd.f32 %v4559, %v3537
        %v4561 = vadd.f32 %v4560, %v3538
        %v4562 = vadd.f32 %v4561, %v3539
        %v4563 = vadd.f32 %v4562, %v3540
        %v4564 = vadd.f32 %v4563, %v3541
        %v4565 = vadd.f32 %v4564, %v3542
        %v4566 = vadd.f32 %v4565, %v3543
        %v4567 = vadd.f32 %v4566, %v3544
        %v4568 = vadd.f32 %v4567, %v3545
        %v4569 = vadd.f32 %v4568, %v3546
        %v4570 = vadd.f32 %v4569, %v3547
        %v4571 = vadd.f32 %v4570, %v3548
        %v4572 = vadd.f32 %v4571, %v3549
        %v4573 = vadd.f32 %v4572, %v3550
        %v4574 = vadd.f32 %v4573, %v3551
        %v4575 = vadd.f32 %v4574, %v3552
        %v4576 = vadd.f32 %v4575, %v3553
        %v4577 = vadd.f32 %v4576, %v3554
        %v4578 = vadd.f32 %v4577, %v3555
        %v4579 = vadd.f32 %v4578, %v3556
        %v4580 = vadd.f32 %v4579, %v3557
        %v4581 = vadd.f32 %v4580, %v3558
        %v4582 = vadd.f32 %v4581, %v3559
        %v4583 = vadd.f32 %v4582, %v3560
        %v4584 = vadd.f32 %v4583, %v3561
        %v4585 = vadd.f32 %v4584, %v3562
        %v4586 = vadd.f32 %v4585, %v3563
        %v4587 = vadd.f32 %v4586, %v3564
        %v4588 = vadd.f32 %v4587, %v3565
        %v4589 = vadd.f32 %v4588, %v3566
        %v4590 = vadd.f32 %v4589, %v3567
        %v4591 = vadd.f32 %v4590, %v3568
        %v4592 = vadd.f32 %v4591, %v3569
        %v4593 = vadd.f32 %v4592, %v3570
        %v4594 = vadd.f32 %v4593, %v3571
        %v4595 = vadd.f32 %v4594, %v3572
        %v4596 = vadd.f32 %v4595, %v3573
        %v4597 = vadd.f32 %v4596, %v3574
        %v4598 = vadd.f32 %v4597, %v3575
        %v4599 = vadd.f32 %v4598, %v3576
        %v4600 = vadd.f32 %v4599, %v3577
        %v4601 = vadd.f32 %v4600, %v3578
        %v4602 = vadd.f32 %v4601, %v3579
        %v4603 = vadd.f32 %v4602, %v3580
        %v4604 = vadd.f32 %v4603, %v3581
        %v4605 = vadd.f32 %v4604, %v3582
        %v4606 = vadd.f32 %v4605, %v3583
        %v4607 = vadd.f32 %v4606, %v3584
        %v4608 = vadd.f32 %v4607, %v3585
        %v4609 = vadd.f32 %v4608, %v3586
        %v4610 = vadd.f32 %v4609, %v3587
        %v4611 = vadd.f32 %v4610, %v3588
        %v4612 = vadd.f32 %v4611, %v3589
        %v4613 = vadd.f32 %v4612, %v3590
        %v4614 = vadd.f32 %v4613, %v3591
        %v4615 = vadd.f32 %v4614, %v3592
        %v4616 = vadd.f32 %v4615, %v3593
        %v4617 = vadd.f32 %v4616, %v3594
        %v4618 = vadd.f32 %v4617, %v3595
        %v4619 = vadd.f32 %v4618, %v3596
        %v4620 = vadd.f32 %v4619, %v3597
        %v4621 = vadd.f32 %v4620, %v3598
        %v4622 = vadd.f32 %v4621, %v3599
        %v4623 = vadd.f32 %v4622, %v3600
        %v4624 = vadd.f32 %v4623, %v3601
        %v4625 = vadd.f32 %v4624, %v3602
        %v4626 = vadd.f32 %v4625, %v3603
        %v4627 = vadd.f32 %v4626, %v3604
        %v4628 = vadd.f32 %v4627, %v3605
        %v4629 = vadd.f32 %v4628, %v3606
        %v4630 = vadd.f32 %v4629, %v3607
        %v4631 = vadd.f32 %v4630, %v3608
        %v4632 = vadd.f32 %v4631, %v3609
        %v4633 = vadd.f32 %v4632, %v3610
        %v4634 = vadd.f32 %v4633, %v3611
        %v4635 = vadd.f32 %v4634, %v3612
        %v4636 = vadd.f32 %v4635, %v3613
        %v4637 = vadd.f32 %v4636, %v3614
        %v4638 = vadd.f32 %v4637, %v3615
        %v4639 = vadd.f32 %v4638, %v3616
        %v4640 = vadd.f32 %v4639, %v3617
        %v4641 = vadd.f32 %v4640, %v3618
        %v4642 = vadd.f32 %v4641, %v3619
        %v4643 = vadd.f32 %v4642, %v3620
        %v4644 = vadd.f32 %v4643, %v3621
        %v4645 = vadd.f32 %v4644, %v3622
        %v4646 = vadd.f32 %v4645, %v3623
        %v4647 = vadd.f32 %v4646, %v3624
        %v4648 = vadd.f32 %v4647, %v3625
        %v4649 = vadd.f32 %v4648, %v3626
        %v4650 = vadd.f32 %v4649, %v3627
        %v4651 = vadd.f32 %v4650, %v3628
        %v4652 = vadd.f32 %v4651, %v3629
        %v4653 = vadd.f32 %v4652, %v3630
        %v4654 = vadd.f32 %v4653, %v3631
        %v4655 = vadd.f32 %v4654, %v3632
        %v4656 = vadd.f32 %v4655, %v3633
        %v4657 = vadd.f32 %v4656, %v3634
        %v4658 = vadd.f32 %v4657, %v3635
        %v4659 = vadd.f32 %v4658, %v3636
        %v4660 = vadd.f32 %v4659, %v3637
        %v4661 = vadd.f32 %v4660, %v3638
        %v4662 = vadd.f32 %v4661, %v3639
        %v4663 = vadd.f32 %v4662, %v3640
        %v4664 = vadd.f32 %v4663, %v3641
        %v4665 = vadd.f32 %v4664, %v3642
        %v4666 = vadd.f32 %v4665, %v3643
        %v4667 = vadd.f32 %v4666, %v3644
        %v4668 = vadd.f32 %v4667, %v3645
        %v4669 = vadd.f32 %v4668, %v3646
        %v4670 = vadd.f32 %v4669, %v3647
        %v4671 = vadd.f32 %v4670, %v3648
        %v4672 = vadd.f32 %v4671, %v3649
        %v4673 = vadd.f32 %v4672, %v3650
        %v4674 = vadd.f32 %v4673, %v3651
        %v4675 = vadd.f32 %v4674, %v3652
        %v4676 = vadd.f32 %v4675, %v3653
        %v4677 = vadd.f32 %v4676, %v3654
        %v4678 = vadd.f32 %v4677, %v3655
        %v4679 = vadd.f32 %v4678, %v3656
        %v4680 = vadd.f32 %v4679, %v3657
        %v4681 = vadd.f32 %v4680, %v3658
        %v4682 = vadd.f32 %v4681, %v3659
        %v4683 = vadd.f32 %v4682, %v3660
        %v4684 = vadd.f32 %v4683, %v3661
        %v4685 = vadd.f32 %v4684, %v3662
        %v4686 = vadd.f32 %v4685, %v3663
        %v4687 = vadd.f32 %v4686, %v3664
        %v4688 = vadd.f32 %v4687, %v3665
        %v4689 = vadd.f32 %v4688, %v3666
        %v4690 = vadd.f32 %v4689, %v3667
        %v4691 = vadd.f32 %v4690, %v3668
        %v4692 = vadd.f32 %v4691, %v3669
        %v4693 = vadd.f32 %v4692, %v3670
        %v4694 = vadd.f32 %v4693, %v3671
        %v4695 = vadd.f32 %v4694, %v3672
        %v4696 = vadd.f32 %v4695, %v3673
        %v4697 = vadd.f32 %v4696, %v3674
        %v4698 = vadd.f32 %v4697, %v3675
        %v4699 = vadd.f32 %v4698, %v3676
        %v4700 = vadd.f32 %v4699, %v3677
        %v4701 = vadd.f32 %v4700, %v3678
        %v4702 = vadd.f32 %v4701, %v3679
        %v4703 = vadd.f32 %v4702, %v3680
        %v4704 = vadd.f32 %v4703, %v3681
        %v4705 = vadd.f32 %v4704, %v3682
        %v4706 = vadd.f32 %v4705, %v3683
        %v4707 = vadd.f32 %v4706, %v3684
        %v4708 = vadd.f32 %v4707, %v3685
        %v4709 = vadd.f32 %v4708, %v3686
        %v4710 = vadd.f32 %v4709, %v3687
        %v4711 = vadd.f32 %v4710, %v3688
        %v4712 = vadd.f32 %v4711, %v3689
        %v4713 = vadd.f32 %v4712, %v3690
        %v4714 = vadd.f32 %v4713, %v3691
        %v4715 = vadd.f32 %v4714, %v3692
        %v4716 = vadd.f32 %v4715, %v3693
        %v4717 = vadd.f32 %v4716, %v3694
        %v4718 = vadd.f32 %v4717, %v3695
        %v4719 = vadd.f32 %v4718, %v3696
        %v4720 = vadd.f32 %v4719, %v3697
        %v4721 = vadd.f32 %v4720, %v3698
        %v4722 = vadd.f32 %v4721, %v3699
        %v4723 = vadd.f32 %v4722, %v3700
        %v4724 = vadd.f32 %v4723, %v3701
        %v4725 = vadd.f32 %v4724, %v3702
        %v4726 = vadd.f32 %v4725, %v3703
        %v4727 = vadd.f32 %v4726, %v3704
        %v4728 = vadd.f32 %v4727, %v3705
        %v4729 = vadd.f32 %v4728, %v3706
        %v4730 = vadd.f32 %v4729, %v3707
        %v4731 = vadd.f32 %v4730, %v3708
        %v4732 = vadd.f32 %v4731, %v3709
        %v4733 = vadd.f32 %v4732, %v3710
        %v4734 = vadd.f32 %v4733, %v3711
        %v4735 = vadd.f32 %v4734, %v3712
        %v4736 = vadd.f32 %v4735, %v3713
        %v4737 = vadd.f32 %v4736, %v3714
        %v4738 = vadd.f32 %v4737, %v3715
        %v4739 = vadd.f32 %v4738, %v3716
        %v4740 = vadd.f32 %v4739, %v3717
        %v4741 = vadd.f32 %v4740, %v3718
        %v4742 = vadd.f32 %v4741, %v3719
        %v4743 = vadd.f32 %v4742, %v3720
        %v4744 = vadd.f32 %v4743, %v3721
        %v4745 = vadd.f32 %v4744, %v3722
        %v4746 = vadd.f32 %v4745, %v3723
        %v4747 = vadd.f32 %v4746, %v3724
        %v4748 = vadd.f32 %v4747, %v3725
        %v4749 = vadd.f32 %v4748, %v3726
        %v4750 = vadd.f32 %v4749, %v3727
        %v4751 = vadd.f32 %v4750, %v3728
        %v4752 = vadd.f32 %v4751, %v3729
        %v4753 = vadd.f32 %v4752, %v3730
        %v4754 = vadd.f32 %v4753, %v3731
        %v4755 = vadd.f32 %v4754, %v3732
        %v4756 = vadd.f32 %v4755, %v3733
        %v4757 = vadd.f32 %v4756, %v3734
        %v4758 = vadd.f32 %v4757, %v3735
        %v4759 = vadd.f32 %v4758, %v3736
        %v4760 = vadd.f32 %v4759, %v3737
        %v4761 = vadd.f32 %v4760, %v3738
        %v4762 = vadd.f32 %v4761, %v3739
        %v4763 = vadd.f32 %v4762, %v3740
        %v4764 = vadd.f32 %v4763, %v3741
        %v4765 = vadd.f32 %v4764, %v3742
        %v4766 = vadd.f32 %v4765, %v3743
        %v4767 = vadd.f32 %v4766, %v3744
        %v4768 = vadd.f32 %v4767, %v3745
        %v4769 = vadd.f32 %v4768, %v3746
        %v4770 = vadd.f32 %v4769, %v3747
        %v4771 = vadd.f32 %v4770, %v3748
        %v4772 = vadd.f32 %v4771, %v3749
        %v4773 = vadd.f32 %v4772, %v3750
        %v4774 = vadd.f32 %v4773, %v3751
        %v4775 = vadd.f32 %v4774, %v3752
        %v4776 = vadd.f32 %v4775, %v3753
        %v4777 = vadd.f32 %v4776, %v3754
        %v4778 = vadd.f32 %v4777, %v3755
        %v4779 = vadd.f32 %v4778, %v3756
        %v4780 = vadd.f32 %v4779, %v3757
        %v4781 = vadd.f32 %v4780, %v3758
        %v4782 = vadd.f32 %v4781, %v3759
        %v4783 = vadd.f32 %v4782, %v3760
        %v4784 = vadd.f32 %v4783, %v3761
        %v4785 = vadd.f32 %v4784, %v3762
        %v4786 = vadd.f32 %v4785, %v3763
        %v4787 = vadd.f32 %v4786, %v3764
        %v4788 = vadd.f32 %v4787, %v3765
        %v4789 = vadd.f32 %v4788, %v3766
        %v4790 = vadd.f32 %v4789, %v3767
        %v4791 = vadd.f32 %v4790, %v3768
        %v4792 = vadd.f32 %v4791, %v3769
        %v4793 = vadd.f32 %v4792, %v3770
        %v4794 = vadd.f32 %v4793, %v3771
        %v4795 = vadd.f32 %v4794, %v3772
        %v4796 = vadd.f32 %v4795, %v3773
        %v4797 = vadd.f32 %v4796, %v3774
        %v4798 = vadd.f32 %v4797, %v3775
        %v4799 = vadd.f32 %v4798, %v3776
        %v4800 = vadd.f32 %v4799, %v3777
        %v4801 = vadd.f32 %v4800, %v3778
        %v4802 = vadd.f32 %v4801, %v3779
        %v4803 = vadd.f32 %v4802, %v3780
        %v4804 = vadd.f32 %v4803, %v3781
        %v4805 = vadd.f32 %v4804, %v3782
        %v4806 = vadd.f32 %v4805, %v3783
        %v4807 = vadd.f32 %v4806, %v3784
        %v4808 = vadd.f32 %v4807, %v3785
        %v4809 = vadd.f32 %v4808, %v3786
        %v4810 = vadd.f32 %v4809, %v3787
        %v4811 = vadd.f32 %v4810, %v3788
        %v4812 = vadd.f32 %v4811, %v3789
        %v4813 = vadd.f32 %v4812, %v3790
        %v4814 = vadd.f32 %v4813, %v3791
        %v4815 = vadd.f32 %v4814, %v3792
        %v4816 = vadd.f32 %v4815, %v3793
        %v4817 = vadd.f32 %v4816, %v3794
        %v4818 = vadd.f32 %v4817, %v3795
        %v4819 = vadd.f32 %v4818, %v3796
        %v4820 = vadd.f32 %v4819, %v3797
        %v4821 = vadd.f32 %v4820, %v3798
        %v4822 = vadd.f32 %v4821, %v3799
        %v4823 = vadd.f32 %v4822, %v3800
        %v4824 = vadd.f32 %v4823, %v3801
        %v4825 = vadd.f32 %v4824, %v3802
        %v4826 = vadd.f32 %v4825, %v3803
        %v4827 = vadd.f32 %v4826, %v3804
        %v4828 = vadd.f32 %v4827, %v3805
        %v4829 = vadd.f32 %v4828, %v3806
        %v4830 = vadd.f32 %v4829, %v3807
        %v4831 = vadd.f32 %v4830, %v3808
        %v4832 = vadd.f32 %v4831, %v3809
        %v4833 = vadd.f32 %v4832, %v3810
        %v4834 = vadd.f32 %v4833, %v3811
        %v4835 = vadd.f32 %v4834, %v3812
        %v4836 = vadd.f32 %v4835, %v3813
        %v4837 = vadd.f32 %v4836, %v3814
        %v4838 = vadd.f32 %v4837, %v3815
        %v4839 = vadd.f32 %v4838, %v3816
        %v4840 = vadd.f32 %v4839, %v3817
        %v4841 = vadd.f32 %v4840, %v3818
        %v4842 = vadd.f32 %v4841, %v3819
        %v4843 = vadd.f32 %v4842, %v3820
        %v4844 = vadd.f32 %v4843, %v3821
        %v4845 = vadd.f32 %v4844, %v3822
        %v4846 = vadd.f32 %v4845, %v3823
        %v4847 = vadd.f32 %v4846, %v3824
        %v4848 = vadd.f32 %v4847, %v3825
        %v4849 = vadd.f32 %v4848, %v3826
        %v4850 = vadd.f32 %v4849, %v3827
        %v4851 = vadd.f32 %v4850, %v3828
        %v4852 = vadd.f32 %v4851, %v3829
        %v4853 = vadd.f32 %v4852, %v3830
        %v4854 = vadd.f32 %v4853, %v3831
        %v4855 = vadd.f32 %v4854, %v3832
        %v4856 = vadd.f32 %v4855, %v3833
        %v4857 = vadd.f32 %v4856, %v3834
        %v4858 = vadd.f32 %v4857, %v3835
        %v4859 = vadd.f32 %v4858, %v3836
        %v4860 = vadd.f32 %v4859, %v3837
        %v4861 = vadd.f32 %v4860, %v3838
        %v4862 = vadd.f32 %v4861, %v3839
        %v4863 = vadd.f32 %v4862, %v3840
        %v4864 = vadd.f32 %v4863, %v3841
        %v4865 = vadd.f32 %v4864, %v3842
        %v4866 = vadd.f32 %v4865, %v3843
        %v4867 = vadd.f32 %v4866, %v3844
        %v4868 = vadd.f32 %v4867, %v3845
        %v4869 = vadd.f32 %v4868, %v3846
        %v4870 = vadd.f32 %v4869, %v3847
        %v4871 = vadd.f32 %v4870, %v3848
        %v4872 = vadd.f32 %v4871, %v3849
        %v4873 = vadd.f32 %v4872, %v3850
        %v4874 = vadd.f32 %v4873, %v3851
        %v4875 = vadd.f32 %v4874, %v3852
        %v4876 = vadd.f32 %v4875, %v3853
        %v4877 = vadd.f32 %v4876, %v3854
        %v4878 = vadd.f32 %v4877, %v3855
        %v4879 = vadd.f32 %v4878, %v3856
        %v4880 = vadd.f32 %v4879, %v3857
        %v4881 = vadd.f32 %v4880, %v3858
        %v4882 = vadd.f32 %v4881, %v3859
        %v4883 = vadd.f32 %v4882, %v3860
        %v4884 = vadd.f32 %v4883, %v3861
        %v4885 = vadd.f32 %v4884, %v3862
        %v4886 = vadd.f32 %v4885, %v3863
        %v4887 = vadd.f32 %v4886, %v3864
        %v4888 = vadd.f32 %v4887, %v3865
        %v4889 = vadd.f32 %v4888, %v3866
        %v4890 = vadd.f32 %v4889, %v3867
        %v4891 = vadd.f32 %v4890, %v3868
        %v4892 = vadd.f32 %v4891, %v3869
        %v4893 = vadd.f32 %v4892, %v3870
        %v4894 = vadd.f32 %v4893, %v3871
        %v4895 = vadd.f32 %v4894, %v3872
        %v4896 = vadd.f32 %v4895, %v3873
        %v4897 = vadd.f32 %v4896, %v3874
        %v4898 = vadd.f32 %v4897, %v3875
        %v4899 = vadd.f32 %v4898, %v3876
        %v4900 = vadd.f32 %v4899, %v3877
        %v4901 = vadd.f32 %v4900, %v3878
        %v4902 = vadd.f32 %v4901, %v3879
        %v4903 = vadd.f32 %v4902, %v3880
        %v4904 = vadd.f32 %v4903, %v3881
        %v4905 = vadd.f32 %v4904, %v3882
        %v4906 = vadd.f32 %v4905, %v3883
        %v4907 = vadd.f32 %v4906, %v3884
        %v4908 = vadd.f32 %v4907, %v3885
        %v4909 = vadd.f32 %v4908, %v3886
        %v4910 = vadd.f32 %v4909, %v3887
        %v4911 = vadd.f32 %v4910, %v3888
        %v4912 = vadd.f32 %v4911, %v3889
        %v4913 = vadd.f32 %v4912, %v3890
        %v4914 = vadd.f32 %v4913, %v3891
        %v4915 = vadd.f32 %v4914, %v3892
        %v4916 = vadd.f32 %v4915, %v3893
        %v4917 = vadd.f32 %v4916, %v3894
        %v4918 = vadd.f32 %v4917, %v3895
        %v4919 = vadd.f32 %v4918, %v3896
        %v4920 = vadd.f32 %v4919, %v3897
        %v4921 = vadd.f32 %v4920, %v3898
        %v4922 = vadd.f32 %v4921, %v3899
        %v4923 = vadd.f32 %v4922, %v3900
        %v4924 = vadd.f32 %v4923, %v3901
        %v4925 = vadd.f32 %v4924, %v3902
        %v4926 = vadd.f32 %v4925, %v3903
        %v4927 = vadd.f32 %v4926, %v3904
        %v4928 = vadd.f32 %v4927, %v3905
        %v4929 = vadd.f32 %v4928, %v3906
        %v4930 = vadd.f32 %v4929, %v3907
        %v4931 = vadd.f32 %v4930, %v3908
        %v4932 = vadd.f32 %v4931, %v3909
        %v4933 = vadd.f32 %v4932, %v3910
        %v4934 = vadd.f32 %v4933, %v3911
        %v4935 = vadd.f32 %v4934, %v3912
        %v4936 = vadd.f32 %v4935, %v3913
        %v4937 = vadd.f32 %v4936, %v3914
        %v4938 = vadd.f32 %v4937, %v3915
        %v4939 = vadd.f32 %v4938, %v3916
        %v4940 = vadd.f32 %v4939, %v3917
        %v4941 = vadd.f32 %v4940, %v3918
        %v4942 = vadd.f32 %v4941, %v3919
        %v4943 = vadd.f32 %v4942, %v3920
        %v4944 = vadd.f32 %v4943, %v3921
        %v4945 = vadd.f32 %v4944, %v3922
        %v4946 = vadd.f32 %v4945, %v3923
        %v4947 = vadd.f32 %v4946, %v3924
        %v4948 = vadd.f32 %v4947, %v3925
        %v4949 = vadd.f32 %v4948, %v3926
        %v4950 = vadd.f32 %v4949, %v3927
        %v4951 = vadd.f32 %v4950, %v3928
        %v4952 = vadd.f32 %v4951, %v3929
        %v4953 = vadd.f32 %v4952, %v3930
        %v4954 = vadd.f32 %v4953, %v3931
        %v4955 = vadd.f32 %v4954, %v3932
        %v4956 = vadd.f32 %v4955, %v3933
        %v4957 = vadd.f32 %v4956, %v3934
        %v4958 = vadd.f32 %v4957, %v3935
        %v4959 = vadd.f32 %v4958, %v3936
        %v4960 = vadd.f32 %v4959, %v3937
        %v4961 = vadd.f32 %v4960, %v3938
        %v4962 = vadd.f32 %v4961, %v3939
        %v4963 = vadd.f32 %v4962, %v3940
        %v4964 = vadd.f32 %v4963, %v3941
        %v4965 = vadd.f32 %v4964, %v3942
        %v4966 = vadd.f32 %v4965, %v3943
        %v4967 = vadd.f32 %v4966, %v3944
        %v4968 = vadd.f32 %v4967, %v3945
        %v4969 = vadd.f32 %v4968, %v3946
        %v4970 = vadd.f32 %v4969, %v3947
        %v4971 = vadd.f32 %v4970, %v3948
        %v4972 = vadd.f32 %v4971, %v3949
        %v4973 = vadd.f32 %v4972, %v3950
        %v4974 = vadd.f32 %v4973, %v3951
        %v4975 = vadd.f32 %v4974, %v3952
        %v4976 = vadd.f32 %v4975, %v3953
        %v4977 = vadd.f32 %v4976, %v3954
        %v4978 = vadd.f32 %v4977, %v3955
        %v4979 = vadd.f32 %v4978, %v3956
        %v4980 = vadd.f32 %v4979, %v3957
        %v4981 = vadd.f32 %v4980, %v3958
        %v4982 = vadd.f32 %v4981, %v3959
        %v4983 = vadd.f32 %v4982, %v3960
        %v4984 = vadd.f32 %v4983, %v3961
        %v4985 = vadd.f32 %v4984, %v3962
        %v4986 = vadd.f32 %v4985, %v3963
        %v4987 = vadd.f32 %v4986, %v3964
        %v4988 = vadd.f32 %v4987, %v3965
        %v4989 = vadd.f32 %v4988, %v3966
        %v4990 = vadd.f32 %v4989, %v3967
        %v4991 = vadd.f32 %v4990, %v3968
        %v4992 = vadd.f32 %v4991, %v3969
        %v4993 = vadd.f32 %v4992, %v3970
        %v4994 = vadd.f32 %v4993, %v3971
        %v4995 = vadd.f32 %v4994, %v3972
        %v4996 = vadd.f32 %v4995, %v3973
        %v4997 = vadd.f32 %v4996, %v3974
        %v4998 = vadd.f32 %v4997, %v3975
        %v4999 = vadd.f32 %v4998, %v3976
        %v5000 = vadd.f32 %v4999, %v3977
        %v5001 = vadd.f32 %v5000, %v3978
        %v5002 = vadd.f32 %v5001, %v3979
        %v5003 = vadd.f32 %v5002, %v3980
        %v5004 = vadd.f32 %v5003, %v3981
        %v5005 = vadd.f32 %v5004, %v3982
        %v5006 = vadd.f32 %v5005, %v3983
        %v5007 = vadd.f32 %v5006, %v3984
        %v5008 = vadd.f32 %v5007, %v3985
        %v5009 = vadd.f32 %v5008, %v3986
        %v5010 = vadd.f32 %v5009, %v3987
        %v5011 = vadd.f32 %v5010, %v3988
        %v5012 = vadd.f32 %v5011, %v3989
        %v5013 = vadd.f32 %v5012, %v3990
        %v5014 = vadd.f32 %v5013, %v3991
        %v5015 = vadd.f32 %v5014, %v3992
        %v5016 = vadd.f32 %v5015, %v3993
        %v5017 = vadd.f32 %v5016, %v3994
        %v5018 = vadd.f32 %v5017, %v3995
        %v5019 = vadd.f32 %v5018, %v3996
        %v5020 = vadd.f32 %v5019, %v3997
        %v5021 = vadd.f32 %v5020, %v3998
        %v5022 = vadd.f32 %v5021, %v3999
        %v5023 = vadd.f32 %v5022, %v4000
        %v5024 = vadd.f32 %v5023, %v4001
        %v5025 = vadd.f32 %v5024, %v4002
        %v5026 = vadd.f32 %v5025, %v4003
        %v5027 = vadd.f32 %v5026, %v4004
        %v5028 = vadd.f32 %v5027, %v4005
        %v5029 = vadd.f32 %v5028, %v4006
        %v5030 = vadd.f32 %v5029, %v4007
        %v5031 = vadd.f32 %v5030, %v4008
        %v5032 = vadd.f32 %v5031, %v4009
        %v5033 = vadd.f32 %v5032, %v4010
        %v5034 = vadd.f32 %v5033, %v4011
        %v5035 = vadd.f32 %v5034, %v4012
        %v5036 = vadd.f32 %v5035, %v4013
        %v5037 = vadd.f32 %v5036, %v4014
        %v5038 = vadd.f32 %v5037, %v4015
        %v5039 = vadd.f32 %v5038, %v4016
        %v5040 = vadd.f32 %v5039, %v4017
        %v5041 = vadd.f32 %v5040, %v4018
        %v5042 = vadd.f32 %v5041, %v4019
        %v5043 = vadd.f32 %v5042, %v4020
        %v5044 = vadd.f32 %v5043, %v4021
        %v5045 = vadd.f32 %v5044, %v4022
        %v5046 = vadd.f32 %v5045, %v4023
        %v5047 = vadd.f32 %v5046, %v4024
        %v5048 = vadd.f32 %v5047, %v4025
        %v5049 = vadd.f32 %v5048, %v4026
        %v5050 = vadd.f32 %v5049, %v4027
        %v5051 = vadd.f32 %v5050, %v4028
        %v5052 = vadd.f32 %v5051, %v4029
        %v5053 = vadd.f32 %v5052, %v4030
        %v5054 = vadd.f32 %v5053, %v4031
        %v5055 = vadd.f32 %v5054, %v4032
        %v5056 = vadd.f32 %v5055, %v4033
        %v5057 = vadd.f32 %v5056, %v4034
        %v5058 = vadd.f32 %v5057, %v4035
        %v5059 = vadd.f32 %v5058, %v4036
        %v5060 = vadd.f32 %v5059, %v4037
        %v5061 = vadd.f32 %v5060, %v4038
        %v5062 = vadd.f32 %v5061, %v4039
        %v5063 = vadd.f32 %v5062, %v4040
        %v5064 = vadd.f32 %v5063, %v4041
        %v5065 = vadd.f32 %v5064, %v4042
        %v5066 = vadd.f32 %v5065, %v4043
        %v5067 = vadd.f32 %v5066, %v4044
        %v5068 = vadd.f32 %v5067, %v4045
        %v5069 = vadd.f32 %v5068, %v4046
        %v5070 = vadd.f32 %v5069, %v4047
        %v5071 = vadd.f32 %v5070, %v4048
        %v5072 = vadd.f32 %v5071, %v4049
        %v5073 = vadd.f32 %v5072, %v4050
        %v5074 = vadd.f32 %v5073, %v4051
        %v5075 = vadd.f32 %v5074, %v4052
        %v5076 = vadd.f32 %v5075, %v4053
        %v5077 = vadd.f32 %v5076, %v4054
        %v5078 = vadd.f32 %v5077, %v4055
        %v5079 = vadd.f32 %v5078, %v4056
        %v5080 = vadd.f32 %v5079, %v4057
        %v5081 = vadd.f32 %v5080, %v4058
        %v5082 = vadd.f32 %v5081, %v4059
        %v5083 = vadd.f32 %v5082, %v4060
        %v5084 = vadd.f32 %v5083, %v4061
        %v5085 = vadd.f32 %v5084, %v4062
        %v5086 = vadd.f32 %v5085, %v4063
        %v5087 = vadd.f32 %v5086, %v4064
        %v5088 = vadd.f32 %v5087, %v4065
        %v5089 = vadd.f32 %v5088, %v4066
        %v5090 = vadd.f32 %v5089, %v4067
        %v5091 = vadd.f32 %v5090, %v4068
        %v5092 = vadd.f32 %v5091, %v4069
        %v5093 = vadd.f32 %v5092, %v4070
        %v5094 = vadd.f32 %v5093, %v4071
        %v5095 = vadd.f32 %v5094, %v4072
        %v5096 = vadd.f32 %v5095, %v4073
        %v5097 = vadd.f32 %v5096, %v4074
        %v5098 = vadd.f32 %v5097, %v4075
        %v5099 = vadd.f32 %v5098, %v4076
        %v5100 = vadd.f32 %v5099, %v4077
        %v5101 = vadd.f32 %v5100, %v4078
        %v5102 = vadd.f32 %v5101, %v4079
        %v5103 = vadd.f32 %v5102, %v4080
        %v5104 = vadd.f32 %v5103, %v4081
        %v5105 = vadd.f32 %v5104, %v4082
        %v5106 = vadd.f32 %v5105, %v4083
        %v5107 = vadd.f32 %v5106, %v4084
        %v5108 = vadd.f32 %v5107, %v4085
        %v5109 = vadd.f32 %v5108, %v4086
        %v5110 = vadd.f32 %v5109, %v4087
        %v5111 = vadd.f32 %v5110, %v4088
        %v5112 = vadd.f32 %v5111, %v4089
        %v5113 = vadd.f32 %v5112, %v4090
        %v5114 = vadd.f32 %v5113, %v4091
        %v5115 = vadd.f32 %v5114, %v4092
        %v5116 = vadd.f32 %v5115, %v4093
        %v5117 = vadd.f32 %v5116, %v4094
        %v5118 = vadd.f32 %v5117, %v4095
        %v5119 = vadd.f32 %v5118, %v4096
        %v5120 = vadd.f32 %v5119, %v4097
        %v5121 = vadd.f32 %v5120, %v4098
        %v5122 = vadd.f32 %v5121, %v4099
        %v5123 = vadd.f32 %v5122, %v4100
        %v5124 = vadd.f32 %v5123, %v4101
        %v5125 = vadd.f32 %v5124, %v4102
        %v5126 = vadd.f32 %v5125, %v4103
        %v5127 = vadd.f32 %v5126, %v4104
        %v5128 = vadd.f32 %v5127, %v4105
        %v5129 = vadd.f32 %v5128, %v4106
        %v5130 = vadd.f32 %v5129, %v4107
        %v5131 = vadd.f32 %v5130, %v4108
        %v5132 = vadd.f32 %v5131, %v4109
        %v5133 = vadd.f32 %v5132, %v4110
        %v5134 = vadd.f32 %v5133, %v4111
        %v5135 = vadd.f32 %v5134, %v4112
        %v5136 = vadd.f32 %v5135, %v4113
        %v5137 = vadd.f32 %v5136, %v4114
        %v5138 = vadd.f32 %v5137, %v4115
        %v5139 = vadd.f32 %v5138, %v4116
        %v5140 = vadd.f32 %v5139, %v4117
        %v5141 = vadd.f32 %v5140, %v4118
        %v5142 = vadd.f32 %v5141, %v4119
        %v5143 = vadd.f32 %v5142, %v4120
        %v5144 = vadd.f32 %v5143, %v4121
        %v5145 = vadd.f32 %v5144, %v4122
        %v5146 = vadd.f32 %v5145, %v4123
        %v5147 = vadd.f32 %v5146, %v4124
        %v5148 = vadd.f32 %v5147, %v4125
        %v5149 = vadd.f32 %v5148, %v4126
        %v5150 = vadd.f32 %v5149, %v4127
        %v5151 = vadd.f32 %v5150, %v4128
        %v5152 = vadd.f32 %v5151, %v4129
        %v5153 = vadd.f32 %v5152, %v4130
        %v5154 = vadd.f32 %v5153, %v4131
        %v5155 = vadd.f32 %v5154, %v4132
        %v5156 = vadd.f32 %v5155, %v4133
        %v5157 = vadd.f32 %v5156, %v4134
        %v5158 = vadd.f32 %v5157, %v4135
        %v5159 = vadd.f32 %v5158, %v4136
        %v5160 = vadd.f32 %v5159, %v4137
        %v5161 = vadd.f32 %v5160, %v4138
        %v5162 = vadd.f32 %v5161, %v4139
        %v5163 = vadd.f32 %v5162, %v4140
        %v5164 = vadd.f32 %v5163, %v4141
        %v5165 = vadd.f32 %v5164, %v4142
        %v5166 = vadd.f32 %v5165, %v4143
        %v5167 = vadd.f32 %v5166, %v4144
        %v5168 = vadd.f32 %v5167, %v4145
        %v5169 = vadd.f32 %v5168, %v4146
        %v5170 = vadd.f32 %v5169, %v4147
        %v5171 = vadd.f32 %v5170, %v4148
        %v5172 = vadd.f32 %v5171, %v4149
        %v5173 = vadd.f32 %v5172, %v4150
        %v5174 = vadd.f32 %v5173, %v4151
        %v5175 = vadd.f32 %v5174, %v4152
        %v5176 = vadd.f32 %v5175, %v4153
        %v5177 = vadd.f32 %v5176, %v4154
        %v5178 = vadd.f32 %v5177, %v4155
        %v5179 = vadd.f32 %v5178, %v4156
        %v5180 = vadd.f32 %v5179, %v4157
        %v5181 = vadd.f32 %v5180, %v4158
        %v5182 = vadd.f32 %v5181, %v4159
        %v5183 = vadd.f32 %v5182, %v4160
        %v5184 = vadd.f32 %v5183, %v4161
        %v5185 = vadd.f32 %v5184, %v4162
        %v5186 = vadd.f32 %v5185, %v4163
        %v5187 = vadd.f32 %v5186, %v4164
        %v5188 = vadd.f32 %v5187, %v4165
        %v5189 = vadd.f32 %v5188, %v4166
        %v5190 = vadd.f32 %v5189, %v4167
        %v5191 = vadd.f32 %v5190, %v4168
        %v5192 = vadd.f32 %v5191, %v4169
        %v5193 = vadd.f32 %v5192, %v4170
        %v5194 = vadd.f32 %v5193, %v4171
        %v5195 = vadd.f32 %v5194, %v4172
        %v5196 = vadd.f32 %v5195, %v4173
        %v5197 = vadd.f32 %v5196, %v4174
        %v5198 = vadd.f32 %v5197, %v4175
        %v5199 = vadd.f32 %v5198, %v4176
        %v5200 = vadd.f32 %v5199, %v4177
        %v5201 = vadd.f32 %v5200, %v4178
        %v5202 = vadd.f32 %v5201, %v4179
        %v5203 = vadd.f32 %v5202, %v4180
        %v5204 = vadd.f32 %v5203, %v4181
        %v5205 = vadd.f32 %v5204, %v4182
        %v5206 = vadd.f32 %v5205, %v4183
        %v5207 = vadd.f32 %v5206, %v4184
        %v5208 = vadd.f32 %v5207, %v4185
        %v5209 = vadd.f32 %v5208, %v4186
        %v5210 = vadd.f32 %v5209, %v4187
        %v5211 = vadd.f32 %v5210, %v4188
        %v5212 = vadd.f32 %v5211, %v4189
        %v5213 = vadd.f32 %v5212, %v4190
        %v5214 = vadd.f32 %v5213, %v4191
        %v5215 = vadd.f32 %v5214, %v4192
        %v5216 = vadd.f32 %v5215, %v4193
        %v5217 = vadd.f32 %v5216, %v4194
        %v5218 = vadd.f32 %v5217, %v4195
        %v5219 = vadd.f32 %v5218, %v4196
        %v5220 = vadd.f32 %v5219, %v4197
        %v5221 = vadd.f32 %v5220, %v4198
        %v5222 = vadd.f32 %v5221, %v4199
        %v5223 = vadd.f32 %v5222, %v4200
        %v5224 = vadd.f32 %v5223, %v4201
        %v5225 = vadd.f32 %v5224, %v4202
        %v5226 = vadd.f32 %v5225, %v4203
        %v5227 = vadd.f32 %v5226, %v4204
        %v5228 = vadd.f32 %v5227, %v4205
        %v5229 = vadd.f32 %v5228, %v4206
        %v5230 = vadd.f32 %v5229, %v4207
        %v5231 = vadd.f32 %v5230, %v4208
        %v5232 = vadd.f32 %v5231, %v4209
        %v5233 = vadd.f32 %v5232, %v4210
        %v5234 = vadd.f32 %v5233, %v4211
        %v5235 = vadd.f32 %v5234, %v4212
        %v5236 = vadd.f32 %v5235, %v4213
        %v5237 = vadd.f32 %v5236, %v4214
        %v5238 = vadd.f32 %v5237, %v4215
        %v5239 = vadd.f32 %v5238, %v4216
        %v5240 = vadd.f32 %v5239, %v4217
        %v5241 = vadd.f32 %v5240, %v4218
        %v5242 = vadd.f32 %v5241, %v4219
        %v5243 = vadd.f32 %v5242, %v4220
        %v5244 = vadd.f32 %v5243, %v4221
        %v5245 = vadd.f32 %v5244, %v4222
        %v5246 = vadd.f32 %v5245, %v4223
        %v5247 = vadd.f32 %v5246, %v4224
        %v5248 = vadd.f32 %v5247, %v4225
        %v5249 = vadd.f32 %v5248, %v4226
        %v5250 = vadd.f32 %v5249, %v4227
        %v5251 = vadd.f32 %v5250, %v4228
        %v5252 = vadd.f32 %v5251, %v4229
        %v5253 = vadd.f32 %v5252, %v4230
        %v5254 = vadd.f32 %v5253, %v4231
        %v5255 = vadd.f32 %v5254, %v4232
        %v5256 = vadd.f32 %v5255, %v4233
        %v5257 = vadd.f32 %v5256, %v4234
        %v5258 = vadd.f32 %v5257, %v4235
        %v5259 = vadd.f32 %v5258, %v4236
        %v5260 = vadd.f32 %v5259, %v4237
        %v5261 = vadd.f32 %v5260, %v4238
        %v5262 = vadd.f32 %v5261, %v4239
        %v5263 = vadd.f32 %v5262, %v4240
        %v5264 = vadd.f32 %v5263, %v4241
        %v5265 = vadd.f32 %v5264, %v4242
        %v5266 = vadd.f32 %v5265, %v4243
        %v5267 = vadd.f32 %v5266, %v4244
        %v5268 = vadd.f32 %v5267, %v4245
        %v5269 = vadd.f32 %v5268, %v4246
        %v5270 = vadd.f32 %v5269, %v4247
        %v5271 = vadd.f32 %v5270, %v4248
        %v5272 = vadd.f32 %v5271, %v4249
        %v5273 = vadd.f32 %v5272, %v4250
        %v5274 = vadd.f32 %v5273, %v4251
        %v5275 = vadd.f32 %v5274, %v4252
        %v5276 = vadd.f32 %v5275, %v4253
        %v5277 = vadd.f32 %v5276, %v4254
        %v5278 = vadd.f32 %v5277, %v4255
        %v5279 = vadd.f32 %v5278, %v4256
        %v5280 = vadd.f32 %v5279, %v4257
        %v5281 = vadd.f32 %v5280, %v4258
        %v5282 = vadd.f32 %v5281, %v4259
        %v5283 = vadd.f32 %v5282, %v4260
        %v5284 = vadd.f32 %v5283, %v4261
        %v5285 = vadd.f32 %v5284, %v4262
        %v5286 = vadd.f32 %v5285, %v4263
        %v5287 = vadd.f32 %v5286, %v4264
        %v5288 = vadd.f32 %v5287, %v4265
        %v5289 = vadd.f32 %v5288, %v4266
        %v5290 = vadd.f32 %v5289, %v4267
        %v5291 = vadd.f32 %v5290, %v4268
        %v5292 = vadd.f32 %v5291, %v4269
        %v5293 = vadd.f32 %v5292, %v4270
        %v5294 = vadd.f32 %v5293, %v4271
        %v5295 = vadd.f32 %v5294, %v4272
        %v5296 = vadd.f32 %v5295, %v4273
        %v5297 = vadd.f32 %v5296, %v4274
        %v5298 = vadd.f32 %v5297, %v4275
        %v5299 = vadd.f32 %v5298, %v4276
        %v5300 = vadd.f32 %v5299, %v4277
        %v5301 = vadd.f32 %v5300, %v4278
        %v5302 = vadd.f32 %v5301, %v4279
        %v5303 = vadd.f32 %v5302, %v4280
        %v5304 = vadd.f32 %v5303, %v4281
        %v5305 = vadd.f32 %v5304, %v4282
        %v5306 = vadd.f32 %v5305, %v4283
        %v5307 = vadd.f32 %v5306, %v4284
        %v5308 = vadd.f32 %v5307, %v4285
        %v5309 = vadd.f32 %v5308, %v4286
        %v5310 = vadd.f32 %v5309, %v4287
        %v5311 = vadd.f32 %v5310, %v4288
        %v5312 = vadd.f32 %v5311, %v4289
        %v5313 = vadd.f32 %v5312, %v4290
        %v5314 = vadd.f32 %v5313, %v4291
        %v5315 = vadd.f32 %v5314, %v4292
        %v5316 = vadd.f32 %v5315, %v4293
        %v5317 = vadd.f32 %v5316, %v4294
        %v5318 = vadd.f32 %v5317, %v4295
        %v5319 = vadd.f32 %v5318, %v4296
        %v5320 = vadd.f32 %v5319, %v4297
        %v5321 = vadd.f32 %v5320, %v4298
        %v5322 = vadd.f32 %v5321, %v4299
        %v5323 = vadd.f32 %v5322, %v4300
        %v5324 = vadd.f32 %v5323, %v4301
        %v5325 = vadd.f32 %v5324, %v4302
        %v5326 = vadd.f32 %v5325, %v4303
        %v5327 = vadd.f32 %v5326, %v4304
        %v5328 = vadd.f32 %v5327, %v4305
        %v5329 = vadd.f32 %v5328, %v4306
        %v5330 = vadd.f32 %v5329, %v4307
        %v5331 = vadd.f32 %v5330, %v4308
        %v5332 = vadd.f32 %v5331, %v4309
        %v5333 = vadd.f32 %v5332, %v4310
        %v5334 = vadd.f32 %v5333, %v4311
        %v5335 = vadd.f32 %v5334, %v4312
        %v5336 = vadd.f32 %v5335, %v4313
        %v5337 = vadd.f32 %v5336, %v4314
        %v5338 = vadd.f32 %v5337, %v4315
        %v5339 = vadd.f32 %v5338, %v4316
        %v5340 = vadd.f32 %v5339, %v4317
        %v5341 = vadd.f32 %v5340, %v4318
        %v5342 = vadd.f32 %v5341, %v4319
        %5343 = vst [vmem:[%s213] sm:$0xff] %v5342
        %s5344 = sand.u32 %s82, 1
        %s5345 = scalar_lea.sflag [#allocation4], %s5344
        %s5346 = sand.u32 %s82, 1
        %s5347 = smul.addr %s5346, 8
        %s5348 = scalar_lea.vmem [#allocation7], %s5347
        // Predicated region
        $region37: #{tpu_custom_call.1} parent=27 // pred_check
          %p5349 = pneg %p92
        $region38: #{tpu_custom_call.1} parent=27 // pred_check_branch
          %5351 = sbr.rel (%p5349) target = $region40
        $region39: #{tpu_custom_call.1} parent=27 // pred_region
          %s5353 = ssub.s32 128, 128
          %5354 = vsyncadd %s5345, %s5353
          %s5355 = smul.addr %s22, 128
          %s5356 = scalar_lea.hbm %s2, %s5355
          %s5358 = sshll.u32 %s5348, 4
          %s5359 = int_to_ptr.vmem [resolvable:$true] %s5358
          %5361 = dma.vmem_to_hbm [thread:$0]  %s5359, 128, %s5356, %s5345
        $region40: #{tpu_custom_call.1} parent=27 // pred_fallthru
          _
      $region28: #{tpu_custom_call.1} parent=5 // pred_fallthru
        _
      %p5362 = scmp.le.s32.totalorder 2, %s17
      // Predicated region
      $region41: #{tpu_custom_call.1} parent=5 // pred_check
        %p5363 = pneg %p5362
      $region42: #{tpu_custom_call.1} parent=5 // pred_check_branch
        %5365 = sbr.rel (%p5363) target = $region44
      $region43: #{tpu_custom_call.1} parent=5 // pred_region
        %s5366 = ssub.s32 %s17, 2
        // Predicated region
        $region45: #{tpu_custom_call.1} parent=43 // pred_check
          %p5367 = pneg %p98
        $region46: #{tpu_custom_call.1} parent=43 // pred_check_branch
          %5369 = sbr.rel (%p5367) target = $region48
        $region47: #{tpu_custom_call.1} parent=43 // pred_region
          %s5370 = sand.u32 %s83, 1
          %s5371 = scalar_lea.sflag [#allocation4], %s5370
          %s5372 = sand.u32 %s83, 1
          %s5373 = smul.addr %s5372, 8
          %s5374 = scalar_lea.vmem [#allocation7], %s5373
          %5375 = dma.done %s5371, 128
        $region48: #{tpu_custom_call.1} parent=43 // pred_fallthru
          _
      $region44: #{tpu_custom_call.1} parent=5 // pred_fallthru
        _
    $region6: #{tpu_custom_call.1} parent=1 // loop_footer
      %s21 = sadd.s32 1, %s17
    $region7: #{tpu_custom_call.1} parent=1 // loop_footer_branch
      %16 = sbr.rel target = $region3
    $region8: #{tpu_custom_call.1} parent=1 // loop_exit
      _
    %5376 = vsyncpa [#allocation3], 1
    %s5377 = scalar_lea.sflag [#allocation3], 1
    %5378 = vsyncpa %s5377, 1
    %5379 = vsyncpa [#allocation6], 1
    %s5380 = scalar_lea.sflag [#allocation6], 1
    %5381 = vsyncpa %s5380, 1
    %5382 = vsyncpa [#allocation4], 1
    %s5383 = scalar_lea.sflag [#allocation4], 1
    %5384 = vsyncpa %s5383, 1

</llo_original>
